<compile_context>
chip_gen: v6e
topology: v6e:2x2x1
jax: 0.10.0
libtpu: 0.0.40
codegen_flags: <defaults>
</compile_context>

<pallas_src>
import math
import functools

import jax
import jax.numpy as jnp
from jax import lax
from jax.experimental import pallas as pl
from jax.experimental.pallas import tpu as pltpu

# ---------------- model hyper-parameters (small, consistent with the module) ---
D_MODEL = 32
N_HEAD = 4
DIM_FF = 64
NUM_LAYERS = 2
SEQ = 8
BATCH = 2
LN_EPS = 1e-5
HEAD_DIM = D_MODEL // N_HEAD

# rows of the packed per-layer vector slab (each row lane-padded to 128)
_ROW_BQKV, _ROW_BO, _ROW_B1, _ROW_B2 = 0, 1, 2, 3
_ROW_G1, _ROW_BT1, _ROW_G2, _ROW_BT2 = 4, 5, 6, 7
_VEC_ROWS = 8
_VEC_LANES = 128


def _layer_norm(x, gamma, beta):
    mu = jnp.mean(x, axis=-1, keepdims=True)
    var = jnp.mean((x - mu) ** 2, axis=-1, keepdims=True)
    return (x - mu) * lax.rsqrt(var + LN_EPS) * gamma + beta


# ------------------------------ fused Pallas kernel -----------------------------
def fused_encoder_kernel(x_ref, wqkv_ref, wo_ref, w1_ref, w2_ref, vecs_ref,
                         o_ref, *, num_layers, batch, seq, nhead, dim_ff,
                         apply_final_norm):
    # x_ref: (B*S, D) activation slab, batch-major rows.
    d_model = x_ref.shape[-1]
    head_dim = d_model // nhead
    scale = 1.0 / math.sqrt(head_dim)

    x = x_ref[...].astype(jnp.float32)                        # (B*S, D)

    for l in range(num_layers):                               # static unroll
        # ---- hoist all per-layer small params once (no re-broadcast per use) --
        vec = vecs_ref[l].astype(jnp.float32)                 # (8, 128)
        bqkv = vec[_ROW_BQKV:_ROW_BQKV + 1, :3 * d_model]     # (1, 3D)
        bo = vec[_ROW_BO:_ROW_BO + 1, :d_model]
        b1 = vec[_ROW_B1:_ROW_B1 + 1, :dim_ff]
        b2 = vec[_ROW_B2:_ROW_B2 + 1, :d_model]
        g1 = vec[_ROW_G1:_ROW_G1 + 1, :d_model]
        bt1 = vec[_ROW_BT1:_ROW_BT1 + 1, :d_model]
        g2 = vec[_ROW_G2:_ROW_G2 + 1, :d_model]
        bt2 = vec[_ROW_BT2:_ROW_BT2 + 1, :d_model]

        # ---- fused QKV projection: single (B*S, D) @ (D, 3D) MXU pass ---------
        qkv = jnp.dot(x, wqkv_ref[l], preferred_element_type=jnp.float32) + bqkv
        q = qkv[:, 0 * d_model:1 * d_model].reshape(batch, seq, d_model)
        k = qkv[:, 1 * d_model:2 * d_model].reshape(batch, seq, d_model)
        v = qkv[:, 2 * d_model:3 * d_model].reshape(batch, seq, d_model)

        # ---- attention: static head loop, each dot batched over the batch dim -
        ctx_heads = []
        for h in range(nhead):                                # static unroll
            c0 = h * head_dim
            qh = q[:, :, c0:c0 + head_dim]                    # (B, S, Dh)
            kh = k[:, :, c0:c0 + head_dim]
            vh = v[:, :, c0:c0 + head_dim]
            sc = jnp.einsum("bqd,bkd->bqk", qh, kh,
                            preferred_element_type=jnp.float32) * scale
            # TODO(synk): additive src_mask / attn_bias / key-padding-mask here.
            sc = sc - jnp.max(sc, axis=-1, keepdims=True)
            p = jnp.exp(sc)
            p = p / jnp.sum(p, axis=-1, keepdims=True)        # exact reciprocal
            ctx_heads.append(jnp.einsum("bqk,bkd->bqd", p, vh,
                                        preferred_element_type=jnp.float32))
        # lane-concat heads (single vreg at D=32) and one full output projection
        ctx = jnp.concatenate(ctx_heads, axis=-1).reshape(batch * seq, d_model)
        attn = jnp.dot(ctx, wo_ref[l], preferred_element_type=jnp.float32) + bo

        # ---- residual + LayerNorm1 (post-norm) --------------------------------
        y = _layer_norm(x + attn, g1, bt1)

        # ---- feed-forward ------------------------------------------------------
        h1 = jnp.maximum(
            jnp.dot(y, w1_ref[l], preferred_element_type=jnp.float32) + b1, 0.0)
        ff = jnp.dot(h1, w2_ref[l], preferred_element_type=jnp.float32) + b2

        # ---- residual + LayerNorm2 --------------------------------------------
        x = _layer_norm(y + ff, g2, bt2)

    if apply_final_norm:
        vf = vecs_ref[num_layers].astype(jnp.float32)
        x = _layer_norm(x, vf[0:1, :d_model], vf[1:2, :d_model])

    o_ref[...] = x.astype(o_ref.dtype)


# ------------------------------ wrapper ------------------------------------------
def _full_spec(shape):
    return pl.BlockSpec(shape, lambda i: (0,) * len(shape))


def _pack_vectors(layer_params, final_norm, d_model, dim_ff):
    """All per-layer 1-D params into one lane-padded (L+1, 8, 128) slab."""
    L = len(layer_params)
    vecs = jnp.zeros((L + 1, _VEC_ROWS, _VEC_LANES), jnp.float32)
    for l, p in enumerate(layer_params):
        bqkv = jnp.concatenate([p["bq"], p["bk"], p["bv"]], axis=1)[0]
        vecs = vecs.at[l, _ROW_BQKV, :3 * d_model].set(bqkv)
        vecs = vecs.at[l, _ROW_BO, :d_model].set(p["bo"][0])
        vecs = vecs.at[l, _ROW_B1, :dim_ff].set(p["b1"][0])
        vecs = vecs.at[l, _ROW_B2, :d_model].set(p["b2"][0])
        vecs = vecs.at[l, _ROW_G1, :d_model].set(p["g1"][0])
        vecs = vecs.at[l, _ROW_BT1, :d_model].set(p["bt1"][0])
        vecs = vecs.at[l, _ROW_G2, :d_model].set(p["g2"][0])
        vecs = vecs.at[l, _ROW_BT2, :d_model].set(p["bt2"][0])
    if final_norm is not None:
        vecs = vecs.at[L, 0, :d_model].set(final_norm["g"][0])
        vecs = vecs.at[L, 1, :d_model].set(final_norm["b"][0])
    return vecs


def transformer_encoder(src_sbd, layer_params, final_norm=None):
    """src_sbd: (S, B, D) — PyTorch seq-first layout."""
    S, B, D = src_sbd.shape
    L = len(layer_params)
    F = layer_params[0]["w1"].shape[1]

    # Pack matrices once: leading layer axis; Q/K/V fused along output columns.
    wqkv = jnp.stack([jnp.concatenate([p["wq"], p["wk"], p["wv"]], axis=1)
                      for p in layer_params])                 # (L, D, 3D)
    wo = jnp.stack([p["wo"] for p in layer_params])           # (L, D, D)
    w1 = jnp.stack([p["w1"] for p in layer_params])           # (L, D, F)
    w2 = jnp.stack([p["w2"] for p in layer_params])           # (L, F, D)
    vecs = _pack_vectors(layer_params, final_norm, D, F)      # (L+1, 8, 128)

    # (S, B, D) -> batch-major (B*S, D) rows, once for the whole fused network.
    x2d = jnp.transpose(src_sbd, (1, 0, 2)).reshape(B * S, D)

    kernel = functools.partial(
        fused_encoder_kernel, num_layers=L, batch=B, seq=S, nhead=N_HEAD,
        dim_ff=F, apply_final_norm=final_norm is not None)

    in_specs = [
        _full_spec((B * S, D)),                               # activations
        _full_spec((L, D, 3 * D)),                            # Wqkv
        _full_spec((L, D, D)),                                # Wo
        _full_spec((L, D, F)),                                # W1
        _full_spec((L, F, D)),                                # W2
        _full_spec((L + 1, _VEC_ROWS, _VEC_LANES)),           # packed vectors
    ]

    out2d = pl.pallas_call(
        kernel,
        out_shape=jax.ShapeDtypeStruct((B * S, D), src_sbd.dtype),
        grid=(1,),
        in_specs=in_specs,
        out_specs=_full_spec((B * S, D)),
        compiler_params=pltpu.CompilerParams(dimension_semantics=("arbitrary",)),
    )(x2d, wqkv, wo, w1, w2, vecs)

    return out2d.reshape(B, S, D).transpose(1, 0, 2)          # back to (S, B, D)


# ------------------------------ pure-JAX reference ------------------------------
def reference_encoder(src_sbd, layer_params, final_norm=None):
    x = jnp.transpose(src_sbd, (1, 0, 2))
    for p in layer_params:
        q = x @ p["wq"] + p["bq"]
        k = x @ p["wk"] + p["bk"]
        v = x @ p["wv"] + p["bv"]
        B, S, D = x.shape
        qh = q.reshape(B, S, N_HEAD, HEAD_DIM).transpose(0, 2, 1, 3)
        kh = k.reshape(B, S, N_HEAD, HEAD_DIM).transpose(0, 2, 1, 3)
        vh = v.reshape(B, S, N_HEAD, HEAD_DIM).transpose(0, 2, 1, 3)
        sc = jnp.einsum("bhsd,bhtd->bhst", qh, kh) / math.sqrt(HEAD_DIM)
        pr = jax.nn.softmax(sc, axis=-1)
        ctx = jnp.einsum("bhst,bhtd->bhsd", pr, vh).transpose(0, 2, 1, 3).reshape(B, S, D)
        attn = ctx @ p["wo"] + p["bo"]
        y = _layer_norm(x + attn, p["g1"], p["bt1"])
        ff = jnp.maximum(y @ p["w1"] + p["b1"], 0.0) @ p["w2"] + p["b2"]
        x = _layer_norm(y + ff, p["g2"], p["bt2"])
    if final_norm is not None:
        x = _layer_norm(x, final_norm["g"], final_norm["b"])
    return x.transpose(1, 0, 2)


# ------------------------------ param init --------------------------------------
def init_layer_params(key):
    ks = jax.random.split(key, 8)

    def xav(k, shape):
        fan_in, fan_out = shape
        lim = math.sqrt(6.0 / (fan_in + fan_out))
        return jax.random.uniform(k, shape, jnp.float32, -lim, lim)

    D, F = D_MODEL, DIM_FF
    return dict(
        wq=xav(ks[0], (D, D)), bq=jnp.zeros((1, D), jnp.float32),
        wk=xav(ks[1], (D, D)), bk=jnp.zeros((1, D), jnp.float32),
        wv=xav(ks[2], (D, D)), bv=jnp.zeros((1, D), jnp.float32),
        wo=xav(ks[3], (D, D)), bo=jnp.zeros((1, D), jnp.float32),
        w1=xav(ks[4], (D, F)), b1=jnp.zeros((1, F), jnp.float32),
        w2=xav(ks[5], (F, D)), b2=jnp.zeros((1, D), jnp.float32),
        g1=jnp.ones((1, D), jnp.float32), bt1=jnp.zeros((1, D), jnp.float32),
        g2=jnp.ones((1, D), jnp.float32), bt2=jnp.zeros((1, D), jnp.float32),
    )


if __name__ == "__main__":
    root = jax.random.PRNGKey(0)
    k_in, *k_layers = jax.random.split(root, NUM_LAYERS + 1)

    layer_params = [init_layer_params(k) for k in k_layers]
    final_norm = dict(g=jnp.ones((1, D_MODEL), jnp.float32),
                      b=jnp.zeros((1, D_MODEL), jnp.float32))

    # src: (S, B, D) seq-first, like PyTorch's nn.TransformerEncoder default
    src = jax.random.normal(k_in, (SEQ, BATCH, D_MODEL), jnp.float32)

    out = transformer_encoder(src, layer_params, final_norm)
    out = jax.block_until_ready(out)

    ref = reference_encoder(src, layer_params, final_norm)
    assert out.shape == (SEQ, BATCH, D_MODEL)
    # f32 everywhere with exact softmax division; tolerance covers MXU f32
    # accumulation-order differences on hardware (interpret mode is ~1e-6).
    assert jnp.allclose(out, ref, atol=1e-3, rtol=1e-3), "mismatch vs reference"

    print("KERNEL_OK")
</pallas_src>

<mosaic_0001>
module attributes {stable_mosaic.version = 11 : i64} {
  func.func @fused_encoder_kernel(%arg0: i32, %arg1: memref<16x32xf32, #tpu.memory_space<vmem>>, %arg2: memref<2x32x96xf32, #tpu.memory_space<vmem>>, %arg3: memref<2x32x32xf32, #tpu.memory_space<vmem>>, %arg4: memref<2x32x64xf32, #tpu.memory_space<vmem>>, %arg5: memref<2x64x32xf32, #tpu.memory_space<vmem>>, %arg6: memref<3x8x128xf32, #tpu.memory_space<vmem>>, %arg7: memref<16x32xf32, #tpu.memory_space<vmem>>) attributes {dimension_semantics = [#tpu.dimension_semantics<arbitrary>], iteration_bounds = array<i64: 1>, scalar_prefetch = 0 : i64, scratch_operands = 0 : i64, tpu.core_type = #tpu.core_type<tc>, window_params = [{pipeline_mode = #tpu.pipeline_mode<synchronous>, transform_indices = @transform_0, window_bounds = array<i64: 16, 32>}, {pipeline_mode = #tpu.pipeline_mode<synchronous>, transform_indices = @transform_1, window_bounds = array<i64: 2, 32, 96>}, {pipeline_mode = #tpu.pipeline_mode<synchronous>, transform_indices = @transform_2, window_bounds = array<i64: 2, 32, 32>}, {pipeline_mode = #tpu.pipeline_mode<synchronous>, transform_indices = @transform_3, window_bounds = array<i64: 2, 32, 64>}, {pipeline_mode = #tpu.pipeline_mode<synchronous>, transform_indices = @transform_4, window_bounds = array<i64: 2, 64, 32>}, {pipeline_mode = #tpu.pipeline_mode<synchronous>, transform_indices = @transform_5, window_bounds = array<i64: 3, 8, 128>}, {pipeline_mode = #tpu.pipeline_mode<synchronous>, transform_indices = @transform_6, window_bounds = array<i64: 16, 32>}]} {
    %c0 = arith.constant 0 : index
    %c0_0 = arith.constant 0 : index
    %0 = vector.load %arg1[%c0, %c0_0] : memref<16x32xf32, #tpu.memory_space<vmem>>, vector<16x32xf32>
    %c0_1 = arith.constant 0 : index
    %c0_2 = arith.constant 0 : index
    %c0_3 = arith.constant 0 : index
    %1 = vector.load %arg6[%c0_1, %c0_2, %c0_3] : memref<3x8x128xf32, #tpu.memory_space<vmem>>, vector<1x8x128xf32>
    %2 = vector.shape_cast %1 : vector<1x8x128xf32> to vector<8x128xf32>
    %3 = vector.extract_strided_slice %2 {offsets = [0, 0], sizes = [1, 96], strides = [1, 1]} : vector<8x128xf32> to vector<1x96xf32>
    %4 = vector.extract_strided_slice %2 {offsets = [1, 0], sizes = [1, 32], strides = [1, 1]} : vector<8x128xf32> to vector<1x32xf32>
    %5 = vector.extract_strided_slice %2 {offsets = [2, 0], sizes = [1, 64], strides = [1, 1]} : vector<8x128xf32> to vector<1x64xf32>
    %6 = vector.extract_strided_slice %2 {offsets = [3, 0], sizes = [1, 32], strides = [1, 1]} : vector<8x128xf32> to vector<1x32xf32>
    %7 = vector.extract_strided_slice %2 {offsets = [4, 0], sizes = [1, 32], strides = [1, 1]} : vector<8x128xf32> to vector<1x32xf32>
    %8 = vector.extract_strided_slice %2 {offsets = [5, 0], sizes = [1, 32], strides = [1, 1]} : vector<8x128xf32> to vector<1x32xf32>
    %9 = vector.extract_strided_slice %2 {offsets = [6, 0], sizes = [1, 32], strides = [1, 1]} : vector<8x128xf32> to vector<1x32xf32>
    %10 = vector.extract_strided_slice %2 {offsets = [7, 0], sizes = [1, 32], strides = [1, 1]} : vector<8x128xf32> to vector<1x32xf32>
    %c0_4 = arith.constant 0 : index
    %c0_5 = arith.constant 0 : index
    %c0_6 = arith.constant 0 : index
    %11 = vector.load %arg2[%c0_4, %c0_5, %c0_6] : memref<2x32x96xf32, #tpu.memory_space<vmem>>, vector<1x32x96xf32>
    %12 = vector.shape_cast %11 : vector<1x32x96xf32> to vector<32x96xf32>
    %cst = arith.constant dense<0.000000e+00> : vector<16x96xf32>
    %13 = tpu.matmul %0, %12, %cst {dimension_numbers = #tpu.dot_dimension_numbers<[1], [0], [0], [1], [0, 0, 1, 1], [], []>} : vector<16x32xf32>, vector<32x96xf32>, vector<16x96xf32> -> vector<16x96xf32>
    %14 = vector.broadcast %3 : vector<1x96xf32> to vector<16x96xf32>
    %15 = arith.addf %13, %14 : vector<16x96xf32>
    %16 = vector.extract_strided_slice %15 {offsets = [0, 0], sizes = [16, 32], strides = [1, 1]} : vector<16x96xf32> to vector<16x32xf32>
    %17 = vector.shape_cast %16 : vector<16x32xf32> to vector<2x8x32xf32>
    %18 = vector.extract_strided_slice %15 {offsets = [0, 32], sizes = [16, 32], strides = [1, 1]} : vector<16x96xf32> to vector<16x32xf32>
    %19 = vector.shape_cast %18 : vector<16x32xf32> to vector<2x8x32xf32>
    %20 = vector.extract_strided_slice %15 {offsets = [0, 64], sizes = [16, 32], strides = [1, 1]} : vector<16x96xf32> to vector<16x32xf32>
    %21 = vector.shape_cast %20 : vector<16x32xf32> to vector<2x8x32xf32>
    %22 = vector.extract_strided_slice %17 {offsets = [0, 0, 0], sizes = [2, 8, 8], strides = [1, 1, 1]} : vector<2x8x32xf32> to vector<2x8x8xf32>
    %23 = vector.extract_strided_slice %19 {offsets = [0, 0, 0], sizes = [2, 8, 8], strides = [1, 1, 1]} : vector<2x8x32xf32> to vector<2x8x8xf32>
    %24 = vector.extract_strided_slice %21 {offsets = [0, 0, 0], sizes = [2, 8, 8], strides = [1, 1, 1]} : vector<2x8x32xf32> to vector<2x8x8xf32>
    "tpu.trace_start"() <{level = 10 : i32, message = "bqd,bkd->bqk"}> : () -> ()
    %cst_7 = arith.constant dense<0.000000e+00> : vector<2x8x8xf32>
    %25 = tpu.matmul %22, %23, %cst_7 {dimension_numbers = #tpu.dot_dimension_numbers<[2], [2], [1], [1], [0, 0, 0, 1, 1, 1], [0], [0]>} : vector<2x8x8xf32>, vector<2x8x8xf32>, vector<2x8x8xf32> -> vector<2x8x8xf32>
    "tpu.trace_stop"() : () -> ()
    %cst_8 = arith.constant 0.353553385 : f32
    %26 = vector.broadcast %cst_8 : f32 to vector<2x8x8xf32>
    %27 = arith.mulf %25, %26 : vector<2x8x8xf32>
    %cst_9 = arith.constant dense<0xFF800000> : vector<2x8xf32>
    %28 = vector.multi_reduction <maximumf>, %27, %cst_9 [2] : vector<2x8x8xf32> to vector<2x8xf32>
    %29 = vector.shape_cast %28 : vector<2x8xf32> to vector<2x8x1xf32>
    %30 = vector.broadcast %29 : vector<2x8x1xf32> to vector<2x8x8xf32>
    %31 = arith.subf %27, %30 : vector<2x8x8xf32>
    %32 = math.exp %31 : vector<2x8x8xf32>
    %cst_10 = arith.constant dense<0.000000e+00> : vector<2x8xf32>
    %33 = vector.multi_reduction <add>, %32, %cst_10 [2] : vector<2x8x8xf32> to vector<2x8xf32>
    %34 = vector.shape_cast %33 : vector<2x8xf32> to vector<2x8x1xf32>
    %35 = vector.broadcast %34 : vector<2x8x1xf32> to vector<2x8x8xf32>
    %36 = arith.divf %32, %35 : vector<2x8x8xf32>
    "tpu.trace_start"() <{level = 10 : i32, message = "bqk,bkd->bqd"}> : () -> ()
    %cst_11 = arith.constant dense<0.000000e+00> : vector<2x8x8xf32>
    %37 = tpu.matmul %36, %24, %cst_11 {dimension_numbers = #tpu.dot_dimension_numbers<[2], [1], [1], [2], [0, 0, 0, 1, 1, 2], [0], [0]>} : vector<2x8x8xf32>, vector<2x8x8xf32>, vector<2x8x8xf32> -> vector<2x8x8xf32>
    "tpu.trace_stop"() : () -> ()
    %38 = vector.extract_strided_slice %17 {offsets = [0, 0, 8], sizes = [2, 8, 8], strides = [1, 1, 1]} : vector<2x8x32xf32> to vector<2x8x8xf32>
    %39 = vector.extract_strided_slice %19 {offsets = [0, 0, 8], sizes = [2, 8, 8], strides = [1, 1, 1]} : vector<2x8x32xf32> to vector<2x8x8xf32>
    %40 = vector.extract_strided_slice %21 {offsets = [0, 0, 8], sizes = [2, 8, 8], strides = [1, 1, 1]} : vector<2x8x32xf32> to vector<2x8x8xf32>
    "tpu.trace_start"() <{level = 10 : i32, message = "bqd,bkd->bqk"}> : () -> ()
    %cst_12 = arith.constant dense<0.000000e+00> : vector<2x8x8xf32>
    %41 = tpu.matmul %38, %39, %cst_12 {dimension_numbers = #tpu.dot_dimension_numbers<[2], [2], [1], [1], [0, 0, 0, 1, 1, 1], [0], [0]>} : vector<2x8x8xf32>, vector<2x8x8xf32>, vector<2x8x8xf32> -> vector<2x8x8xf32>
    "tpu.trace_stop"() : () -> ()
    %cst_13 = arith.constant 0.353553385 : f32
    %42 = vector.broadcast %cst_13 : f32 to vector<2x8x8xf32>
    %43 = arith.mulf %41, %42 : vector<2x8x8xf32>
    %cst_14 = arith.constant dense<0xFF800000> : vector<2x8xf32>
    %44 = vector.multi_reduction <maximumf>, %43, %cst_14 [2] : vector<2x8x8xf32> to vector<2x8xf32>
    %45 = vector.shape_cast %44 : vector<2x8xf32> to vector<2x8x1xf32>
    %46 = vector.broadcast %45 : vector<2x8x1xf32> to vector<2x8x8xf32>
    %47 = arith.subf %43, %46 : vector<2x8x8xf32>
    %48 = math.exp %47 : vector<2x8x8xf32>
    %cst_15 = arith.constant dense<0.000000e+00> : vector<2x8xf32>
    %49 = vector.multi_reduction <add>, %48, %cst_15 [2] : vector<2x8x8xf32> to vector<2x8xf32>
    %50 = vector.shape_cast %49 : vector<2x8xf32> to vector<2x8x1xf32>
    %51 = vector.broadcast %50 : vector<2x8x1xf32> to vector<2x8x8xf32>
    %52 = arith.divf %48, %51 : vector<2x8x8xf32>
    "tpu.trace_start"() <{level = 10 : i32, message = "bqk,bkd->bqd"}> : () -> ()
    %cst_16 = arith.constant dense<0.000000e+00> : vector<2x8x8xf32>
    %53 = tpu.matmul %52, %40, %cst_16 {dimension_numbers = #tpu.dot_dimension_numbers<[2], [1], [1], [2], [0, 0, 0, 1, 1, 2], [0], [0]>} : vector<2x8x8xf32>, vector<2x8x8xf32>, vector<2x8x8xf32> -> vector<2x8x8xf32>
    "tpu.trace_stop"() : () -> ()
    %54 = vector.extract_strided_slice %17 {offsets = [0, 0, 16], sizes = [2, 8, 8], strides = [1, 1, 1]} : vector<2x8x32xf32> to vector<2x8x8xf32>
    %55 = vector.extract_strided_slice %19 {offsets = [0, 0, 16], sizes = [2, 8, 8], strides = [1, 1, 1]} : vector<2x8x32xf32> to vector<2x8x8xf32>
    %56 = vector.extract_strided_slice %21 {offsets = [0, 0, 16], sizes = [2, 8, 8], strides = [1, 1, 1]} : vector<2x8x32xf32> to vector<2x8x8xf32>
    "tpu.trace_start"() <{level = 10 : i32, message = "bqd,bkd->bqk"}> : () -> ()
    %cst_17 = arith.constant dense<0.000000e+00> : vector<2x8x8xf32>
    %57 = tpu.matmul %54, %55, %cst_17 {dimension_numbers = #tpu.dot_dimension_numbers<[2], [2], [1], [1], [0, 0, 0, 1, 1, 1], [0], [0]>} : vector<2x8x8xf32>, vector<2x8x8xf32>, vector<2x8x8xf32> -> vector<2x8x8xf32>
    "tpu.trace_stop"() : () -> ()
    %cst_18 = arith.constant 0.353553385 : f32
    %58 = vector.broadcast %cst_18 : f32 to vector<2x8x8xf32>
    %59 = arith.mulf %57, %58 : vector<2x8x8xf32>
    %cst_19 = arith.constant dense<0xFF800000> : vector<2x8xf32>
    %60 = vector.multi_reduction <maximumf>, %59, %cst_19 [2] : vector<2x8x8xf32> to vector<2x8xf32>
    %61 = vector.shape_cast %60 : vector<2x8xf32> to vector<2x8x1xf32>
    %62 = vector.broadcast %61 : vector<2x8x1xf32> to vector<2x8x8xf32>
    %63 = arith.subf %59, %62 : vector<2x8x8xf32>
    %64 = math.exp %63 : vector<2x8x8xf32>
    %cst_20 = arith.constant dense<0.000000e+00> : vector<2x8xf32>
    %65 = vector.multi_reduction <add>, %64, %cst_20 [2] : vector<2x8x8xf32> to vector<2x8xf32>
    %66 = vector.shape_cast %65 : vector<2x8xf32> to vector<2x8x1xf32>
    %67 = vector.broadcast %66 : vector<2x8x1xf32> to vector<2x8x8xf32>
    %68 = arith.divf %64, %67 : vector<2x8x8xf32>
    "tpu.trace_start"() <{level = 10 : i32, message = "bqk,bkd->bqd"}> : () -> ()
    %cst_21 = arith.constant dense<0.000000e+00> : vector<2x8x8xf32>
    %69 = tpu.matmul %68, %56, %cst_21 {dimension_numbers = #tpu.dot_dimension_numbers<[2], [1], [1], [2], [0, 0, 0, 1, 1, 2], [0], [0]>} : vector<2x8x8xf32>, vector<2x8x8xf32>, vector<2x8x8xf32> -> vector<2x8x8xf32>
    "tpu.trace_stop"() : () -> ()
    %70 = vector.extract_strided_slice %17 {offsets = [0, 0, 24], sizes = [2, 8, 8], strides = [1, 1, 1]} : vector<2x8x32xf32> to vector<2x8x8xf32>
    %71 = vector.extract_strided_slice %19 {offsets = [0, 0, 24], sizes = [2, 8, 8], strides = [1, 1, 1]} : vector<2x8x32xf32> to vector<2x8x8xf32>
    %72 = vector.extract_strided_slice %21 {offsets = [0, 0, 24], sizes = [2, 8, 8], strides = [1, 1, 1]} : vector<2x8x32xf32> to vector<2x8x8xf32>
    "tpu.trace_start"() <{level = 10 : i32, message = "bqd,bkd->bqk"}> : () -> ()
    %cst_22 = arith.constant dense<0.000000e+00> : vector<2x8x8xf32>
    %73 = tpu.matmul %70, %71, %cst_22 {dimension_numbers = #tpu.dot_dimension_numbers<[2], [2], [1], [1], [0, 0, 0, 1, 1, 1], [0], [0]>} : vector<2x8x8xf32>, vector<2x8x8xf32>, vector<2x8x8xf32> -> vector<2x8x8xf32>
    "tpu.trace_stop"() : () -> ()
    %cst_23 = arith.constant 0.353553385 : f32
    %74 = vector.broadcast %cst_23 : f32 to vector<2x8x8xf32>
    %75 = arith.mulf %73, %74 : vector<2x8x8xf32>
    %cst_24 = arith.constant dense<0xFF800000> : vector<2x8xf32>
    %76 = vector.multi_reduction <maximumf>, %75, %cst_24 [2] : vector<2x8x8xf32> to vector<2x8xf32>
    %77 = vector.shape_cast %76 : vector<2x8xf32> to vector<2x8x1xf32>
    %78 = vector.broadcast %77 : vector<2x8x1xf32> to vector<2x8x8xf32>
    %79 = arith.subf %75, %78 : vector<2x8x8xf32>
    %80 = math.exp %79 : vector<2x8x8xf32>
    %cst_25 = arith.constant dense<0.000000e+00> : vector<2x8xf32>
    %81 = vector.multi_reduction <add>, %80, %cst_25 [2] : vector<2x8x8xf32> to vector<2x8xf32>
    %82 = vector.shape_cast %81 : vector<2x8xf32> to vector<2x8x1xf32>
    %83 = vector.broadcast %82 : vector<2x8x1xf32> to vector<2x8x8xf32>
    %84 = arith.divf %80, %83 : vector<2x8x8xf32>
    "tpu.trace_start"() <{level = 10 : i32, message = "bqk,bkd->bqd"}> : () -> ()
    %cst_26 = arith.constant dense<0.000000e+00> : vector<2x8x8xf32>
    %85 = tpu.matmul %84, %72, %cst_26 {dimension_numbers = #tpu.dot_dimension_numbers<[2], [1], [1], [2], [0, 0, 0, 1, 1, 2], [0], [0]>} : vector<2x8x8xf32>, vector<2x8x8xf32>, vector<2x8x8xf32> -> vector<2x8x8xf32>
    "tpu.trace_stop"() : () -> ()
    %86 = tpu.concatenate %37, %53, %69, %85 in 2 : vector<2x8x8xf32>, vector<2x8x8xf32>, vector<2x8x8xf32>, vector<2x8x8xf32> -> vector<2x8x32xf32>
    %87 = vector.shape_cast %86 : vector<2x8x32xf32> to vector<16x32xf32>
    %c0_27 = arith.constant 0 : index
    %c0_28 = arith.constant 0 : index
    %c0_29 = arith.constant 0 : index
    %88 = vector.load %arg3[%c0_27, %c0_28, %c0_29] : memref<2x32x32xf32, #tpu.memory_space<vmem>>, vector<1x32x32xf32>
    %89 = vector.shape_cast %88 : vector<1x32x32xf32> to vector<32x32xf32>
    %cst_30 = arith.constant dense<0.000000e+00> : vector<16x32xf32>
    %90 = tpu.matmul %87, %89, %cst_30 {dimension_numbers = #tpu.dot_dimension_numbers<[1], [0], [0], [1], [0, 0, 1, 1], [], []>} : vector<16x32xf32>, vector<32x32xf32>, vector<16x32xf32> -> vector<16x32xf32>
    %91 = vector.broadcast %4 : vector<1x32xf32> to vector<16x32xf32>
    %92 = arith.addf %90, %91 : vector<16x32xf32>
    %93 = arith.addf %0, %92 : vector<16x32xf32>
    %cst_31 = arith.constant dense<0.000000e+00> : vector<16xf32>
    %94 = vector.multi_reduction <add>, %93, %cst_31 [1] : vector<16x32xf32> to vector<16xf32>
    %95 = vector.shape_cast %94 : vector<16xf32> to vector<16x1xf32>
    %cst_32 = arith.constant 3.200000e+01 : f32
    %96 = vector.broadcast %cst_32 : f32 to vector<16x1xf32>
    %97 = arith.divf %95, %96 : vector<16x1xf32>
    %98 = vector.broadcast %97 : vector<16x1xf32> to vector<16x32xf32>
    %99 = arith.subf %93, %98 : vector<16x32xf32>
    %100 = arith.mulf %99, %99 : vector<16x32xf32>
    %cst_33 = arith.constant dense<0.000000e+00> : vector<16xf32>
    %101 = vector.multi_reduction <add>, %100, %cst_33 [1] : vector<16x32xf32> to vector<16xf32>
    %102 = vector.shape_cast %101 : vector<16xf32> to vector<16x1xf32>
    %cst_34 = arith.constant 3.200000e+01 : f32
    %103 = vector.broadcast %cst_34 : f32 to vector<16x1xf32>
    %104 = arith.divf %102, %103 : vector<16x1xf32>
    %105 = vector.broadcast %97 : vector<16x1xf32> to vector<16x32xf32>
    %106 = arith.subf %93, %105 : vector<16x32xf32>
    %cst_35 = arith.constant 9.99999974E-6 : f32
    %107 = vector.broadcast %cst_35 : f32 to vector<16x1xf32>
    %108 = arith.addf %104, %107 : vector<16x1xf32>
    %109 = math.rsqrt %108 : vector<16x1xf32>
    %110 = vector.broadcast %109 : vector<16x1xf32> to vector<16x32xf32>
    %111 = arith.mulf %106, %110 : vector<16x32xf32>
    %112 = vector.broadcast %7 : vector<1x32xf32> to vector<16x32xf32>
    %113 = arith.mulf %111, %112 : vector<16x32xf32>
    %114 = vector.broadcast %8 : vector<1x32xf32> to vector<16x32xf32>
    %115 = arith.addf %113, %114 : vector<16x32xf32>
    %c0_36 = arith.constant 0 : index
    %c0_37 = arith.constant 0 : index
    %c0_38 = arith.constant 0 : index
    %116 = vector.load %arg4[%c0_36, %c0_37, %c0_38] : memref<2x32x64xf32, #tpu.memory_space<vmem>>, vector<1x32x64xf32>
    %117 = vector.shape_cast %116 : vector<1x32x64xf32> to vector<32x64xf32>
    %cst_39 = arith.constant dense<0.000000e+00> : vector<16x64xf32>
    %118 = tpu.matmul %115, %117, %cst_39 {dimension_numbers = #tpu.dot_dimension_numbers<[1], [0], [0], [1], [0, 0, 1, 1], [], []>} : vector<16x32xf32>, vector<32x64xf32>, vector<16x64xf32> -> vector<16x64xf32>
    %119 = vector.broadcast %5 : vector<1x64xf32> to vector<16x64xf32>
    %120 = arith.addf %118, %119 : vector<16x64xf32>
    %cst_40 = arith.constant 0.000000e+00 : f32
    %121 = vector.broadcast %cst_40 : f32 to vector<16x64xf32>
    %122 = arith.maximumf %120, %121 : vector<16x64xf32>
    %c0_41 = arith.constant 0 : index
    %c0_42 = arith.constant 0 : index
    %c0_43 = arith.constant 0 : index
    %123 = vector.load %arg5[%c0_41, %c0_42, %c0_43] : memref<2x64x32xf32, #tpu.memory_space<vmem>>, vector<1x64x32xf32>
    %124 = vector.shape_cast %123 : vector<1x64x32xf32> to vector<64x32xf32>
    %cst_44 = arith.constant dense<0.000000e+00> : vector<16x32xf32>
    %125 = tpu.matmul %122, %124, %cst_44 {dimension_numbers = #tpu.dot_dimension_numbers<[1], [0], [0], [1], [0, 0, 1, 1], [], []>} : vector<16x64xf32>, vector<64x32xf32>, vector<16x32xf32> -> vector<16x32xf32>
    %126 = vector.broadcast %6 : vector<1x32xf32> to vector<16x32xf32>
    %127 = arith.addf %125, %126 : vector<16x32xf32>
    %128 = arith.addf %115, %127 : vector<16x32xf32>
    %cst_45 = arith.constant dense<0.000000e+00> : vector<16xf32>
    %129 = vector.multi_reduction <add>, %128, %cst_45 [1] : vector<16x32xf32> to vector<16xf32>
    %130 = vector.shape_cast %129 : vector<16xf32> to vector<16x1xf32>
    %cst_46 = arith.constant 3.200000e+01 : f32
    %131 = vector.broadcast %cst_46 : f32 to vector<16x1xf32>
    %132 = arith.divf %130, %131 : vector<16x1xf32>
    %133 = vector.broadcast %132 : vector<16x1xf32> to vector<16x32xf32>
    %134 = arith.subf %128, %133 : vector<16x32xf32>
    %135 = arith.mulf %134, %134 : vector<16x32xf32>
    %cst_47 = arith.constant dense<0.000000e+00> : vector<16xf32>
    %136 = vector.multi_reduction <add>, %135, %cst_47 [1] : vector<16x32xf32> to vector<16xf32>
    %137 = vector.shape_cast %136 : vector<16xf32> to vector<16x1xf32>
    %cst_48 = arith.constant 3.200000e+01 : f32
    %138 = vector.broadcast %cst_48 : f32 to vector<16x1xf32>
    %139 = arith.divf %137, %138 : vector<16x1xf32>
    %140 = vector.broadcast %132 : vector<16x1xf32> to vector<16x32xf32>
    %141 = arith.subf %128, %140 : vector<16x32xf32>
    %cst_49 = arith.constant 9.99999974E-6 : f32
    %142 = vector.broadcast %cst_49 : f32 to vector<16x1xf32>
    %143 = arith.addf %139, %142 : vector<16x1xf32>
    %144 = math.rsqrt %143 : vector<16x1xf32>
    %145 = vector.broadcast %144 : vector<16x1xf32> to vector<16x32xf32>
    %146 = arith.mulf %141, %145 : vector<16x32xf32>
    %147 = vector.broadcast %9 : vector<1x32xf32> to vector<16x32xf32>
    %148 = arith.mulf %146, %147 : vector<16x32xf32>
    %149 = vector.broadcast %10 : vector<1x32xf32> to vector<16x32xf32>
    %150 = arith.addf %148, %149 : vector<16x32xf32>
    %c1 = arith.constant 1 : index
    %c0_50 = arith.constant 0 : index
    %c0_51 = arith.constant 0 : index
    %151 = vector.load %arg6[%c1, %c0_50, %c0_51] : memref<3x8x128xf32, #tpu.memory_space<vmem>>, vector<1x8x128xf32>
    %152 = vector.shape_cast %151 : vector<1x8x128xf32> to vector<8x128xf32>
    %153 = vector.extract_strided_slice %152 {offsets = [0, 0], sizes = [1, 96], strides = [1, 1]} : vector<8x128xf32> to vector<1x96xf32>
    %154 = vector.extract_strided_slice %152 {offsets = [1, 0], sizes = [1, 32], strides = [1, 1]} : vector<8x128xf32> to vector<1x32xf32>
    %155 = vector.extract_strided_slice %152 {offsets = [2, 0], sizes = [1, 64], strides = [1, 1]} : vector<8x128xf32> to vector<1x64xf32>
    %156 = vector.extract_strided_slice %152 {offsets = [3, 0], sizes = [1, 32], strides = [1, 1]} : vector<8x128xf32> to vector<1x32xf32>
    %157 = vector.extract_strided_slice %152 {offsets = [4, 0], sizes = [1, 32], strides = [1, 1]} : vector<8x128xf32> to vector<1x32xf32>
    %158 = vector.extract_strided_slice %152 {offsets = [5, 0], sizes = [1, 32], strides = [1, 1]} : vector<8x128xf32> to vector<1x32xf32>
    %159 = vector.extract_strided_slice %152 {offsets = [6, 0], sizes = [1, 32], strides = [1, 1]} : vector<8x128xf32> to vector<1x32xf32>
    %160 = vector.extract_strided_slice %152 {offsets = [7, 0], sizes = [1, 32], strides = [1, 1]} : vector<8x128xf32> to vector<1x32xf32>
    %c1_52 = arith.constant 1 : index
    %c0_53 = arith.constant 0 : index
    %c0_54 = arith.constant 0 : index
    %161 = vector.load %arg2[%c1_52, %c0_53, %c0_54] : memref<2x32x96xf32, #tpu.memory_space<vmem>>, vector<1x32x96xf32>
    %162 = vector.shape_cast %161 : vector<1x32x96xf32> to vector<32x96xf32>
    %cst_55 = arith.constant dense<0.000000e+00> : vector<16x96xf32>
    %163 = tpu.matmul %150, %162, %cst_55 {dimension_numbers = #tpu.dot_dimension_numbers<[1], [0], [0], [1], [0, 0, 1, 1], [], []>} : vector<16x32xf32>, vector<32x96xf32>, vector<16x96xf32> -> vector<16x96xf32>
    %164 = vector.broadcast %153 : vector<1x96xf32> to vector<16x96xf32>
    %165 = arith.addf %163, %164 : vector<16x96xf32>
    %166 = vector.extract_strided_slice %165 {offsets = [0, 0], sizes = [16, 32], strides = [1, 1]} : vector<16x96xf32> to vector<16x32xf32>
    %167 = vector.shape_cast %166 : vector<16x32xf32> to vector<2x8x32xf32>
    %168 = vector.extract_strided_slice %165 {offsets = [0, 32], sizes = [16, 32], strides = [1, 1]} : vector<16x96xf32> to vector<16x32xf32>
    %169 = vector.shape_cast %168 : vector<16x32xf32> to vector<2x8x32xf32>
    %170 = vector.extract_strided_slice %165 {offsets = [0, 64], sizes = [16, 32], strides = [1, 1]} : vector<16x96xf32> to vector<16x32xf32>
    %171 = vector.shape_cast %170 : vector<16x32xf32> to vector<2x8x32xf32>
    %172 = vector.extract_strided_slice %167 {offsets = [0, 0, 0], sizes = [2, 8, 8], strides = [1, 1, 1]} : vector<2x8x32xf32> to vector<2x8x8xf32>
    %173 = vector.extract_strided_slice %169 {offsets = [0, 0, 0], sizes = [2, 8, 8], strides = [1, 1, 1]} : vector<2x8x32xf32> to vector<2x8x8xf32>
    %174 = vector.extract_strided_slice %171 {offsets = [0, 0, 0], sizes = [2, 8, 8], strides = [1, 1, 1]} : vector<2x8x32xf32> to vector<2x8x8xf32>
    "tpu.trace_start"() <{level = 10 : i32, message = "bqd,bkd->bqk"}> : () -> ()
    %cst_56 = arith.constant dense<0.000000e+00> : vector<2x8x8xf32>
    %175 = tpu.matmul %172, %173, %cst_56 {dimension_numbers = #tpu.dot_dimension_numbers<[2], [2], [1], [1], [0, 0, 0, 1, 1, 1], [0], [0]>} : vector<2x8x8xf32>, vector<2x8x8xf32>, vector<2x8x8xf32> -> vector<2x8x8xf32>
    "tpu.trace_stop"() : () -> ()
    %cst_57 = arith.constant 0.353553385 : f32
    %176 = vector.broadcast %cst_57 : f32 to vector<2x8x8xf32>
    %177 = arith.mulf %175, %176 : vector<2x8x8xf32>
    %cst_58 = arith.constant dense<0xFF800000> : vector<2x8xf32>
    %178 = vector.multi_reduction <maximumf>, %177, %cst_58 [2] : vector<2x8x8xf32> to vector<2x8xf32>
    %179 = vector.shape_cast %178 : vector<2x8xf32> to vector<2x8x1xf32>
    %180 = vector.broadcast %179 : vector<2x8x1xf32> to vector<2x8x8xf32>
    %181 = arith.subf %177, %180 : vector<2x8x8xf32>
    %182 = math.exp %181 : vector<2x8x8xf32>
    %cst_59 = arith.constant dense<0.000000e+00> : vector<2x8xf32>
    %183 = vector.multi_reduction <add>, %182, %cst_59 [2] : vector<2x8x8xf32> to vector<2x8xf32>
    %184 = vector.shape_cast %183 : vector<2x8xf32> to vector<2x8x1xf32>
    %185 = vector.broadcast %184 : vector<2x8x1xf32> to vector<2x8x8xf32>
    %186 = arith.divf %182, %185 : vector<2x8x8xf32>
    "tpu.trace_start"() <{level = 10 : i32, message = "bqk,bkd->bqd"}> : () -> ()
    %cst_60 = arith.constant dense<0.000000e+00> : vector<2x8x8xf32>
    %187 = tpu.matmul %186, %174, %cst_60 {dimension_numbers = #tpu.dot_dimension_numbers<[2], [1], [1], [2], [0, 0, 0, 1, 1, 2], [0], [0]>} : vector<2x8x8xf32>, vector<2x8x8xf32>, vector<2x8x8xf32> -> vector<2x8x8xf32>
    "tpu.trace_stop"() : () -> ()
    %188 = vector.extract_strided_slice %167 {offsets = [0, 0, 8], sizes = [2, 8, 8], strides = [1, 1, 1]} : vector<2x8x32xf32> to vector<2x8x8xf32>
    %189 = vector.extract_strided_slice %169 {offsets = [0, 0, 8], sizes = [2, 8, 8], strides = [1, 1, 1]} : vector<2x8x32xf32> to vector<2x8x8xf32>
    %190 = vector.extract_strided_slice %171 {offsets = [0, 0, 8], sizes = [2, 8, 8], strides = [1, 1, 1]} : vector<2x8x32xf32> to vector<2x8x8xf32>
    "tpu.trace_start"() <{level = 10 : i32, message = "bqd,bkd->bqk"}> : () -> ()
    %cst_61 = arith.constant dense<0.000000e+00> : vector<2x8x8xf32>
    %191 = tpu.matmul %188, %189, %cst_61 {dimension_numbers = #tpu.dot_dimension_numbers<[2], [2], [1], [1], [0, 0, 0, 1, 1, 1], [0], [0]>} : vector<2x8x8xf32>, vector<2x8x8xf32>, vector<2x8x8xf32> -> vector<2x8x8xf32>
    "tpu.trace_stop"() : () -> ()
    %cst_62 = arith.constant 0.353553385 : f32
    %192 = vector.broadcast %cst_62 : f32 to vector<2x8x8xf32>
    %193 = arith.mulf %191, %192 : vector<2x8x8xf32>
    %cst_63 = arith.constant dense<0xFF800000> : vector<2x8xf32>
    %194 = vector.multi_reduction <maximumf>, %193, %cst_63 [2] : vector<2x8x8xf32> to vector<2x8xf32>
    %195 = vector.shape_cast %194 : vector<2x8xf32> to vector<2x8x1xf32>
    %196 = vector.broadcast %195 : vector<2x8x1xf32> to vector<2x8x8xf32>
    %197 = arith.subf %193, %196 : vector<2x8x8xf32>
    %198 = math.exp %197 : vector<2x8x8xf32>
    %cst_64 = arith.constant dense<0.000000e+00> : vector<2x8xf32>
    %199 = vector.multi_reduction <add>, %198, %cst_64 [2] : vector<2x8x8xf32> to vector<2x8xf32>
    %200 = vector.shape_cast %199 : vector<2x8xf32> to vector<2x8x1xf32>
    %201 = vector.broadcast %200 : vector<2x8x1xf32> to vector<2x8x8xf32>
    %202 = arith.divf %198, %201 : vector<2x8x8xf32>
    "tpu.trace_start"() <{level = 10 : i32, message = "bqk,bkd->bqd"}> : () -> ()
    %cst_65 = arith.constant dense<0.000000e+00> : vector<2x8x8xf32>
    %203 = tpu.matmul %202, %190, %cst_65 {dimension_numbers = #tpu.dot_dimension_numbers<[2], [1], [1], [2], [0, 0, 0, 1, 1, 2], [0], [0]>} : vector<2x8x8xf32>, vector<2x8x8xf32>, vector<2x8x8xf32> -> vector<2x8x8xf32>
    "tpu.trace_stop"() : () -> ()
    %204 = vector.extract_strided_slice %167 {offsets = [0, 0, 16], sizes = [2, 8, 8], strides = [1, 1, 1]} : vector<2x8x32xf32> to vector<2x8x8xf32>
    %205 = vector.extract_strided_slice %169 {offsets = [0, 0, 16], sizes = [2, 8, 8], strides = [1, 1, 1]} : vector<2x8x32xf32> to vector<2x8x8xf32>
    %206 = vector.extract_strided_slice %171 {offsets = [0, 0, 16], sizes = [2, 8, 8], strides = [1, 1, 1]} : vector<2x8x32xf32> to vector<2x8x8xf32>
    "tpu.trace_start"() <{level = 10 : i32, message = "bqd,bkd->bqk"}> : () -> ()
    %cst_66 = arith.constant dense<0.000000e+00> : vector<2x8x8xf32>
    %207 = tpu.matmul %204, %205, %cst_66 {dimension_numbers = #tpu.dot_dimension_numbers<[2], [2], [1], [1], [0, 0, 0, 1, 1, 1], [0], [0]>} : vector<2x8x8xf32>, vector<2x8x8xf32>, vector<2x8x8xf32> -> vector<2x8x8xf32>
    "tpu.trace_stop"() : () -> ()
    %cst_67 = arith.constant 0.353553385 : f32
    %208 = vector.broadcast %cst_67 : f32 to vector<2x8x8xf32>
    %209 = arith.mulf %207, %208 : vector<2x8x8xf32>
    %cst_68 = arith.constant dense<0xFF800000> : vector<2x8xf32>
    %210 = vector.multi_reduction <maximumf>, %209, %cst_68 [2] : vector<2x8x8xf32> to vector<2x8xf32>
    %211 = vector.shape_cast %210 : vector<2x8xf32> to vector<2x8x1xf32>
    %212 = vector.broadcast %211 : vector<2x8x1xf32> to vector<2x8x8xf32>
    %213 = arith.subf %209, %212 : vector<2x8x8xf32>
    %214 = math.exp %213 : vector<2x8x8xf32>
    %cst_69 = arith.constant dense<0.000000e+00> : vector<2x8xf32>
    %215 = vector.multi_reduction <add>, %214, %cst_69 [2] : vector<2x8x8xf32> to vector<2x8xf32>
    %216 = vector.shape_cast %215 : vector<2x8xf32> to vector<2x8x1xf32>
    %217 = vector.broadcast %216 : vector<2x8x1xf32> to vector<2x8x8xf32>
    %218 = arith.divf %214, %217 : vector<2x8x8xf32>
    "tpu.trace_start"() <{level = 10 : i32, message = "bqk,bkd->bqd"}> : () -> ()
    %cst_70 = arith.constant dense<0.000000e+00> : vector<2x8x8xf32>
    %219 = tpu.matmul %218, %206, %cst_70 {dimension_numbers = #tpu.dot_dimension_numbers<[2], [1], [1], [2], [0, 0, 0, 1, 1, 2], [0], [0]>} : vector<2x8x8xf32>, vector<2x8x8xf32>, vector<2x8x8xf32> -> vector<2x8x8xf32>
    "tpu.trace_stop"() : () -> ()
    %220 = vector.extract_strided_slice %167 {offsets = [0, 0, 24], sizes = [2, 8, 8], strides = [1, 1, 1]} : vector<2x8x32xf32> to vector<2x8x8xf32>
    %221 = vector.extract_strided_slice %169 {offsets = [0, 0, 24], sizes = [2, 8, 8], strides = [1, 1, 1]} : vector<2x8x32xf32> to vector<2x8x8xf32>
    %222 = vector.extract_strided_slice %171 {offsets = [0, 0, 24], sizes = [2, 8, 8], strides = [1, 1, 1]} : vector<2x8x32xf32> to vector<2x8x8xf32>
    "tpu.trace_start"() <{level = 10 : i32, message = "bqd,bkd->bqk"}> : () -> ()
    %cst_71 = arith.constant dense<0.000000e+00> : vector<2x8x8xf32>
    %223 = tpu.matmul %220, %221, %cst_71 {dimension_numbers = #tpu.dot_dimension_numbers<[2], [2], [1], [1], [0, 0, 0, 1, 1, 1], [0], [0]>} : vector<2x8x8xf32>, vector<2x8x8xf32>, vector<2x8x8xf32> -> vector<2x8x8xf32>
    "tpu.trace_stop"() : () -> ()
    %cst_72 = arith.constant 0.353553385 : f32
    %224 = vector.broadcast %cst_72 : f32 to vector<2x8x8xf32>
    %225 = arith.mulf %223, %224 : vector<2x8x8xf32>
    %cst_73 = arith.constant dense<0xFF800000> : vector<2x8xf32>
    %226 = vector.multi_reduction <maximumf>, %225, %cst_73 [2] : vector<2x8x8xf32> to vector<2x8xf32>
    %227 = vector.shape_cast %226 : vector<2x8xf32> to vector<2x8x1xf32>
    %228 = vector.broadcast %227 : vector<2x8x1xf32> to vector<2x8x8xf32>
    %229 = arith.subf %225, %228 : vector<2x8x8xf32>
    %230 = math.exp %229 : vector<2x8x8xf32>
    %cst_74 = arith.constant dense<0.000000e+00> : vector<2x8xf32>
    %231 = vector.multi_reduction <add>, %230, %cst_74 [2] : vector<2x8x8xf32> to vector<2x8xf32>
    %232 = vector.shape_cast %231 : vector<2x8xf32> to vector<2x8x1xf32>
    %233 = vector.broadcast %232 : vector<2x8x1xf32> to vector<2x8x8xf32>
    %234 = arith.divf %230, %233 : vector<2x8x8xf32>
    "tpu.trace_start"() <{level = 10 : i32, message = "bqk,bkd->bqd"}> : () -> ()
    %cst_75 = arith.constant dense<0.000000e+00> : vector<2x8x8xf32>
    %235 = tpu.matmul %234, %222, %cst_75 {dimension_numbers = #tpu.dot_dimension_numbers<[2], [1], [1], [2], [0, 0, 0, 1, 1, 2], [0], [0]>} : vector<2x8x8xf32>, vector<2x8x8xf32>, vector<2x8x8xf32> -> vector<2x8x8xf32>
    "tpu.trace_stop"() : () -> ()
    %236 = tpu.concatenate %187, %203, %219, %235 in 2 : vector<2x8x8xf32>, vector<2x8x8xf32>, vector<2x8x8xf32>, vector<2x8x8xf32> -> vector<2x8x32xf32>
    %237 = vector.shape_cast %236 : vector<2x8x32xf32> to vector<16x32xf32>
    %c1_76 = arith.constant 1 : index
    %c0_77 = arith.constant 0 : index
    %c0_78 = arith.constant 0 : index
    %238 = vector.load %arg3[%c1_76, %c0_77, %c0_78] : memref<2x32x32xf32, #tpu.memory_space<vmem>>, vector<1x32x32xf32>
    %239 = vector.shape_cast %238 : vector<1x32x32xf32> to vector<32x32xf32>
    %cst_79 = arith.constant dense<0.000000e+00> : vector<16x32xf32>
    %240 = tpu.matmul %237, %239, %cst_79 {dimension_numbers = #tpu.dot_dimension_numbers<[1], [0], [0], [1], [0, 0, 1, 1], [], []>} : vector<16x32xf32>, vector<32x32xf32>, vector<16x32xf32> -> vector<16x32xf32>
    %241 = vector.broadcast %154 : vector<1x32xf32> to vector<16x32xf32>
    %242 = arith.addf %240, %241 : vector<16x32xf32>
    %243 = arith.addf %150, %242 : vector<16x32xf32>
    %cst_80 = arith.constant dense<0.000000e+00> : vector<16xf32>
    %244 = vector.multi_reduction <add>, %243, %cst_80 [1] : vector<16x32xf32> to vector<16xf32>
    %245 = vector.shape_cast %244 : vector<16xf32> to vector<16x1xf32>
    %cst_81 = arith.constant 3.200000e+01 : f32
    %246 = vector.broadcast %cst_81 : f32 to vector<16x1xf32>
    %247 = arith.divf %245, %246 : vector<16x1xf32>
    %248 = vector.broadcast %247 : vector<16x1xf32> to vector<16x32xf32>
    %249 = arith.subf %243, %248 : vector<16x32xf32>
    %250 = arith.mulf %249, %249 : vector<16x32xf32>
    %cst_82 = arith.constant dense<0.000000e+00> : vector<16xf32>
    %251 = vector.multi_reduction <add>, %250, %cst_82 [1] : vector<16x32xf32> to vector<16xf32>
    %252 = vector.shape_cast %251 : vector<16xf32> to vector<16x1xf32>
    %cst_83 = arith.constant 3.200000e+01 : f32
    %253 = vector.broadcast %cst_83 : f32 to vector<16x1xf32>
    %254 = arith.divf %252, %253 : vector<16x1xf32>
    %255 = vector.broadcast %247 : vector<16x1xf32> to vector<16x32xf32>
    %256 = arith.subf %243, %255 : vector<16x32xf32>
    %cst_84 = arith.constant 9.99999974E-6 : f32
    %257 = vector.broadcast %cst_84 : f32 to vector<16x1xf32>
    %258 = arith.addf %254, %257 : vector<16x1xf32>
    %259 = math.rsqrt %258 : vector<16x1xf32>
    %260 = vector.broadcast %259 : vector<16x1xf32> to vector<16x32xf32>
    %261 = arith.mulf %256, %260 : vector<16x32xf32>
    %262 = vector.broadcast %157 : vector<1x32xf32> to vector<16x32xf32>
    %263 = arith.mulf %261, %262 : vector<16x32xf32>
    %264 = vector.broadcast %158 : vector<1x32xf32> to vector<16x32xf32>
    %265 = arith.addf %263, %264 : vector<16x32xf32>
    %c1_85 = arith.constant 1 : index
    %c0_86 = arith.constant 0 : index
    %c0_87 = arith.constant 0 : index
    %266 = vector.load %arg4[%c1_85, %c0_86, %c0_87] : memref<2x32x64xf32, #tpu.memory_space<vmem>>, vector<1x32x64xf32>
    %267 = vector.shape_cast %266 : vector<1x32x64xf32> to vector<32x64xf32>
    %cst_88 = arith.constant dense<0.000000e+00> : vector<16x64xf32>
    %268 = tpu.matmul %265, %267, %cst_88 {dimension_numbers = #tpu.dot_dimension_numbers<[1], [0], [0], [1], [0, 0, 1, 1], [], []>} : vector<16x32xf32>, vector<32x64xf32>, vector<16x64xf32> -> vector<16x64xf32>
    %269 = vector.broadcast %155 : vector<1x64xf32> to vector<16x64xf32>
    %270 = arith.addf %268, %269 : vector<16x64xf32>
    %cst_89 = arith.constant 0.000000e+00 : f32
    %271 = vector.broadcast %cst_89 : f32 to vector<16x64xf32>
    %272 = arith.maximumf %270, %271 : vector<16x64xf32>
    %c1_90 = arith.constant 1 : index
    %c0_91 = arith.constant 0 : index
    %c0_92 = arith.constant 0 : index
    %273 = vector.load %arg5[%c1_90, %c0_91, %c0_92] : memref<2x64x32xf32, #tpu.memory_space<vmem>>, vector<1x64x32xf32>
    %274 = vector.shape_cast %273 : vector<1x64x32xf32> to vector<64x32xf32>
    %cst_93 = arith.constant dense<0.000000e+00> : vector<16x32xf32>
    %275 = tpu.matmul %272, %274, %cst_93 {dimension_numbers = #tpu.dot_dimension_numbers<[1], [0], [0], [1], [0, 0, 1, 1], [], []>} : vector<16x64xf32>, vector<64x32xf32>, vector<16x32xf32> -> vector<16x32xf32>
    %276 = vector.broadcast %156 : vector<1x32xf32> to vector<16x32xf32>
    %277 = arith.addf %275, %276 : vector<16x32xf32>
    %278 = arith.addf %265, %277 : vector<16x32xf32>
    %cst_94 = arith.constant dense<0.000000e+00> : vector<16xf32>
    %279 = vector.multi_reduction <add>, %278, %cst_94 [1] : vector<16x32xf32> to vector<16xf32>
    %280 = vector.shape_cast %279 : vector<16xf32> to vector<16x1xf32>
    %cst_95 = arith.constant 3.200000e+01 : f32
    %281 = vector.broadcast %cst_95 : f32 to vector<16x1xf32>
    %282 = arith.divf %280, %281 : vector<16x1xf32>
    %283 = vector.broadcast %282 : vector<16x1xf32> to vector<16x32xf32>
    %284 = arith.subf %278, %283 : vector<16x32xf32>
    %285 = arith.mulf %284, %284 : vector<16x32xf32>
    %cst_96 = arith.constant dense<0.000000e+00> : vector<16xf32>
    %286 = vector.multi_reduction <add>, %285, %cst_96 [1] : vector<16x32xf32> to vector<16xf32>
    %287 = vector.shape_cast %286 : vector<16xf32> to vector<16x1xf32>
    %cst_97 = arith.constant 3.200000e+01 : f32
    %288 = vector.broadcast %cst_97 : f32 to vector<16x1xf32>
    %289 = arith.divf %287, %288 : vector<16x1xf32>
    %290 = vector.broadcast %282 : vector<16x1xf32> to vector<16x32xf32>
    %291 = arith.subf %278, %290 : vector<16x32xf32>
    %cst_98 = arith.constant 9.99999974E-6 : f32
    %292 = vector.broadcast %cst_98 : f32 to vector<16x1xf32>
    %293 = arith.addf %289, %292 : vector<16x1xf32>
    %294 = math.rsqrt %293 : vector<16x1xf32>
    %295 = vector.broadcast %294 : vector<16x1xf32> to vector<16x32xf32>
    %296 = arith.mulf %291, %295 : vector<16x32xf32>
    %297 = vector.broadcast %159 : vector<1x32xf32> to vector<16x32xf32>
    %298 = arith.mulf %296, %297 : vector<16x32xf32>
    %299 = vector.broadcast %160 : vector<1x32xf32> to vector<16x32xf32>
    %300 = arith.addf %298, %299 : vector<16x32xf32>
    %c2 = arith.constant 2 : index
    %c0_99 = arith.constant 0 : index
    %c0_100 = arith.constant 0 : index
    %301 = vector.load %arg6[%c2, %c0_99, %c0_100] : memref<3x8x128xf32, #tpu.memory_space<vmem>>, vector<1x8x128xf32>
    %302 = vector.shape_cast %301 : vector<1x8x128xf32> to vector<8x128xf32>
    %303 = vector.extract_strided_slice %302 {offsets = [0, 0], sizes = [1, 32], strides = [1, 1]} : vector<8x128xf32> to vector<1x32xf32>
    %304 = vector.extract_strided_slice %302 {offsets = [1, 0], sizes = [1, 32], strides = [1, 1]} : vector<8x128xf32> to vector<1x32xf32>
    %cst_101 = arith.constant dense<0.000000e+00> : vector<16xf32>
    %305 = vector.multi_reduction <add>, %300, %cst_101 [1] : vector<16x32xf32> to vector<16xf32>
    %306 = vector.shape_cast %305 : vector<16xf32> to vector<16x1xf32>
    %cst_102 = arith.constant 3.200000e+01 : f32
    %307 = vector.broadcast %cst_102 : f32 to vector<16x1xf32>
    %308 = arith.divf %306, %307 : vector<16x1xf32>
    %309 = vector.broadcast %308 : vector<16x1xf32> to vector<16x32xf32>
    %310 = arith.subf %300, %309 : vector<16x32xf32>
    %311 = arith.mulf %310, %310 : vector<16x32xf32>
    %cst_103 = arith.constant dense<0.000000e+00> : vector<16xf32>
    %312 = vector.multi_reduction <add>, %311, %cst_103 [1] : vector<16x32xf32> to vector<16xf32>
    %313 = vector.shape_cast %312 : vector<16xf32> to vector<16x1xf32>
    %cst_104 = arith.constant 3.200000e+01 : f32
    %314 = vector.broadcast %cst_104 : f32 to vector<16x1xf32>
    %315 = arith.divf %313, %314 : vector<16x1xf32>
    %316 = vector.broadcast %308 : vector<16x1xf32> to vector<16x32xf32>
    %317 = arith.subf %300, %316 : vector<16x32xf32>
    %cst_105 = arith.constant 9.99999974E-6 : f32
    %318 = vector.broadcast %cst_105 : f32 to vector<16x1xf32>
    %319 = arith.addf %315, %318 : vector<16x1xf32>
    %320 = math.rsqrt %319 : vector<16x1xf32>
    %321 = vector.broadcast %320 : vector<16x1xf32> to vector<16x32xf32>
    %322 = arith.mulf %317, %321 : vector<16x32xf32>
    %323 = vector.broadcast %303 : vector<1x32xf32> to vector<16x32xf32>
    %324 = arith.mulf %322, %323 : vector<16x32xf32>
    %325 = vector.broadcast %304 : vector<1x32xf32> to vector<16x32xf32>
    %326 = arith.addf %324, %325 : vector<16x32xf32>
    %c0_106 = arith.constant 0 : index
    %c0_107 = arith.constant 0 : index
    %327 = vector.load %arg7[%c0_106, %c0_107] : memref<16x32xf32, #tpu.memory_space<vmem>>, vector<16x32xf32>
    tpu.vector_store %arg7[%c0_106, %c0_107], %326 {strides = array<i32>} : memref<16x32xf32, #tpu.memory_space<vmem>>, vector<16x32xf32>,
    return
  }
  func.func @transform_0(%arg0: i32) -> (i32, i32) {
    %c0_i32 = arith.constant 0 : i32
    %c0_i32_0 = arith.constant 0 : i32
    %c0_i32_1 = arith.constant 0 : i32
    return %c0_i32, %c0_i32_0 : i32, i32
  }
  func.func @transform_1(%arg0: i32) -> (i32, i32, i32) {
    %c0_i32 = arith.constant 0 : i32
    %c0_i32_0 = arith.constant 0 : i32
    %c0_i32_1 = arith.constant 0 : i32
    %c0_i32_2 = arith.constant 0 : i32
    return %c0_i32, %c0_i32_0, %c0_i32_1 : i32, i32, i32
  }
  func.func @transform_2(%arg0: i32) -> (i32, i32, i32) {
    %c0_i32 = arith.constant 0 : i32
    %c0_i32_0 = arith.constant 0 : i32
    %c0_i32_1 = arith.constant 0 : i32
    %c0_i32_2 = arith.constant 0 : i32
    return %c0_i32, %c0_i32_0, %c0_i32_1 : i32, i32, i32
  }
  func.func @transform_3(%arg0: i32) -> (i32, i32, i32) {
    %c0_i32 = arith.constant 0 : i32
    %c0_i32_0 = arith.constant 0 : i32
    %c0_i32_1 = arith.constant 0 : i32
    %c0_i32_2 = arith.constant 0 : i32
    return %c0_i32, %c0_i32_0, %c0_i32_1 : i32, i32, i32
  }
  func.func @transform_4(%arg0: i32) -> (i32, i32, i32) {
    %c0_i32 = arith.constant 0 : i32
    %c0_i32_0 = arith.constant 0 : i32
    %c0_i32_1 = arith.constant 0 : i32
    %c0_i32_2 = arith.constant 0 : i32
    return %c0_i32, %c0_i32_0, %c0_i32_1 : i32, i32, i32
  }
  func.func @transform_5(%arg0: i32) -> (i32, i32, i32) {
    %c0_i32 = arith.constant 0 : i32
    %c0_i32_0 = arith.constant 0 : i32
    %c0_i32_1 = arith.constant 0 : i32
    %c0_i32_2 = arith.constant 0 : i32
    return %c0_i32, %c0_i32_0, %c0_i32_1 : i32, i32, i32
  }
  func.func @transform_6(%arg0: i32) -> (i32, i32) {
    %c0_i32 = arith.constant 0 : i32
    %c0_i32_0 = arith.constant 0 : i32
    %c0_i32_1 = arith.constant 0 : i32
    return %c0_i32, %c0_i32_0 : i32, i32
  }
}

</mosaic_0001>

<llo_original>
// kernel: tpu_custom_call.1
$region0: #{tpu_custom_call.1}
  #allocation0 [shape = 'u32[]', space=smem, size = 0x4, offset = 0x4, fixed_abs, tag = 'smem constant byte address 0x4 - core index']
  #allocation1 [shape = 'u32[144,128]{1,0:T(1,128)}', space=vmem, size = 0x12000, scoped, tag = 'internal scratch']
  %s0 = inlined_call_operand.hbm [shape: f32[16,32], index: 0, kind: input, shape index: {}]
  %s1 = inlined_call_operand.vmem [shape: f32[2,32,96], index: 1, kind: input, shape index: {}]
  %s2 = inlined_call_operand.vmem [shape: f32[2,32,32], index: 2, kind: input, shape index: {}]
  %s3 = inlined_call_operand.vmem [shape: f32[2,32,64], index: 3, kind: input, shape index: {}]
  %s4 = inlined_call_operand.vmem [shape: f32[2,64,32], index: 4, kind: input, shape index: {}]
  %s5 = inlined_call_operand.hbm [shape: f32[3,8,128], index: 5, kind: input, shape index: {}]
  %s6 = inlined_call_operand.hbm [shape: f32[16,32], index: 6, kind: output, shape index: {}]
  %s7 = sld [smem:[#allocation0]]
  $region42: #{tpu_custom_call.1} parent=0
    _
  %s9 = ssub.s32 1, %s7
  %s10 = scalar_select 0, %s9, %s7
  $region1: #{tpu_custom_call.1} parent=0
    #allocation2 [shape = 'u8[8192]{0}', space=vmem, size = 0x2000, scoped, tag = 'input window, operand 0, single buffered']
    #allocation3 [shape = 's32[1]{0}', space=sflag, size = 0x4, scoped, tag = 'scoped memory for tpu_custom_call.1']
    #allocation4 [shape = 's32[1]{0}', space=sflag, size = 0x4, scoped, tag = 'scoped memory for tpu_custom_call.1']
    #allocation5 [shape = 'u8[12288]{0}', space=vmem, size = 0x3000, scoped, tag = 'input window, operand 5, single buffered']
    #allocation6 [shape = 's32[1]{0}', space=sflag, size = 0x4, scoped, tag = 'scoped memory for tpu_custom_call.1']
    #allocation7 [shape = 'u8[8192]{0}', space=vmem, size = 0x2000, scoped, tag = 'output window, operand 0, single buffered']
    %11 = vsyncpa [#allocation3], 0
    %12 = vsyncpa [#allocation6], 0
    %13 = vsyncpa [#allocation4], 0
    // Predicated region
    $region2: #{tpu_custom_call.1} parent=1 // pred_check
      _
    $region3: #{tpu_custom_call.1} parent=1 // pred_check_branch
      %15 = sbr.rel (0) target = $region5
    $region4: #{tpu_custom_call.1} parent=1 // pred_region
      %s17 = ssub.s32 256, 256
      %18 = vsyncadd [#allocation3], %s17
      %s19 = sshll.u32 [#allocation2], 4
      %s20 = int_to_ptr.vmem [resolvable:$true] %s19
      %25 = dma.hbm_to_vmem [thread:$0]  %s0, 256, %s20, [#allocation3], 128, 128, 8
    $region5: #{tpu_custom_call.1} parent=1 // pred_fallthru
      _
    // Predicated region
    $region6: #{tpu_custom_call.1} parent=1 // pred_check
      _
    $region7: #{tpu_custom_call.1} parent=1 // pred_check_branch
      %27 = sbr.rel (0) target = $region9
    $region8: #{tpu_custom_call.1} parent=1 // pred_region
      _
    $region9: #{tpu_custom_call.1} parent=1 // pred_fallthru
      _
    // Predicated region
    $region10: #{tpu_custom_call.1} parent=1 // pred_check
      _
    $region11: #{tpu_custom_call.1} parent=1 // pred_check_branch
      %29 = sbr.rel (0) target = $region13
    $region12: #{tpu_custom_call.1} parent=1 // pred_region
      _
    $region13: #{tpu_custom_call.1} parent=1 // pred_fallthru
      _
    // Predicated region
    $region14: #{tpu_custom_call.1} parent=1 // pred_check
      _
    $region15: #{tpu_custom_call.1} parent=1 // pred_check_branch
      %31 = sbr.rel (0) target = $region17
    $region16: #{tpu_custom_call.1} parent=1 // pred_region
      _
    $region17: #{tpu_custom_call.1} parent=1 // pred_fallthru
      _
    // Predicated region
    $region18: #{tpu_custom_call.1} parent=1 // pred_check
      _
    $region19: #{tpu_custom_call.1} parent=1 // pred_check_branch
      %33 = sbr.rel (0) target = $region21
    $region20: #{tpu_custom_call.1} parent=1 // pred_region
      _
    $region21: #{tpu_custom_call.1} parent=1 // pred_fallthru
      _
    // Predicated region
    $region22: #{tpu_custom_call.1} parent=1 // pred_check
      _
    $region23: #{tpu_custom_call.1} parent=1 // pred_check_branch
      %35 = sbr.rel (0) target = $region25
    $region24: #{tpu_custom_call.1} parent=1 // pred_region
      %s37 = ssub.s32 384, 384
      %38 = vsyncadd [#allocation6], %s37
      %s39 = sshll.u32 [#allocation5], 4
      %s40 = int_to_ptr.vmem [resolvable:$true] %s39
      %45 = dma.hbm_to_vmem [thread:$0]  %s5, 384, %s40, [#allocation6], 128, 128, 8
    $region25: #{tpu_custom_call.1} parent=1 // pred_fallthru
      _
    // Predicated region
    $region26: #{tpu_custom_call.1} parent=1 // pred_check
      _
    $region27: #{tpu_custom_call.1} parent=1 // pred_check_branch
      %47 = sbr.rel (0) target = $region29
    $region28: #{tpu_custom_call.1} parent=1 // pred_region
      %48 = dma.done [#allocation3], 256
    $region29: #{tpu_custom_call.1} parent=1 // pred_fallthru
      _
    // Predicated region
    $region30: #{tpu_custom_call.1} parent=1 // pred_check
      _
    $region31: #{tpu_custom_call.1} parent=1 // pred_check_branch
      %50 = sbr.rel (0) target = $region33
    $region32: #{tpu_custom_call.1} parent=1 // pred_region
      %51 = dma.done [#allocation6], 384
    $region33: #{tpu_custom_call.1} parent=1 // pred_fallthru
      _
    %v52 = vld [vmem:[#allocation2] sm:$0xff]
    %v53 = vld [vmem:[#allocation2 + $0x8] sm:$0xff]
    %v54 = vld [vmem:[#allocation5] sm:$0xff]
    %v55 = vld [vmem:[%s1] sm:$0xff]
    %v56 = vld [vmem:[%s1 + $0x8] sm:$0xff]
    %v57 = vld [vmem:[%s1 + $0x10] sm:$0xff]
    %v58 = vld [vmem:[%s1 + $0x18] sm:$0xff]
    %v59 = vlaneseq
    %v60 = vshrl.u32 %v59, 7
    %v61 = vsub.s32 0, %v60
    %v62 = vrot.slane %v54, %v61
    %vm63 = vcmask 261120
    %v65 = vsel %vm63, %v52, 0
    %v68 = vsel %vm63, %v53, 0
    %70 = vmatprep.subr.mxu0 0.0
    %71 = vmatpush1.msra.mxu0 0.0
    %72 = vmatprep.subr.mxu0 0.0
    %73 = vmatpush1.msra.mxu0 0.0
    %74 = vmatprep.subr.mxu0 0.0
    %75 = vmatpush1.msra.mxu0 0.0
    %76 = vmatprep.subr.mxu0 0.0
    %77 = vmatpush1.msra.mxu0 0.0
    %78 = vmatprep.subr.mxu0 0.0
    %79 = vmatpush1.msra.mxu0 0.0
    %80 = vmatprep.subr.mxu0 0.0
    %81 = vmatpush1.msra.mxu0 0.0
    %82 = vmatprep.subr.mxu0 0.0
    %83 = vmatpush1.msra.mxu0 0.0
    %84 = vmatprep.subr.mxu0 0.0
    %85 = vmatpush1.msra.mxu0 0.0
    %86 = vmatprep.subr.mxu0 0.0
    %87 = vmatpush1.msra.mxu0 0.0
    %88 = vmatprep.subr.mxu0 0.0
    %89 = vmatpush1.msra.mxu0 0.0
    %90 = vmatprep.subr.mxu0 0.0
    %91 = vmatpush1.msra.mxu0 0.0
    %92 = vmatprep.subr.mxu0 0.0
    %93 = vmatpush1.msra.mxu0 0.0
    %94 = vmatprep.subr.mxu0 0.0
    %95 = vmatpush1.msra.mxu0 %v58
    %96 = vmatprep.subr.mxu0 0.0
    %97 = vmatpush1.msra.mxu0 %v57
    %98 = vmatprep.subr.mxu0 0.0
    %99 = vmatpush1.msra.mxu0 %v56
    %100 = vmatprep.subr.mxu0 0.0
    %101 = vmatpush1.msra.mxu0 %v55
    %102 = vmatprep.subr.mxu0 0.0
    %103 = vmatpush2.msra.mxu0 0.0
    %104 = vmatprep.subr.mxu0 0.0
    %105 = vmatpush2.msra.mxu0 0.0
    %106 = vmatprep.subr.mxu0 0.0
    %107 = vmatpush2.msra.mxu0 0.0
    %108 = vmatprep.subr.mxu0 0.0
    %109 = vmatpush2.msra.mxu0 0.0
    %110 = vmatprep.subr.mxu0 0.0
    %111 = vmatpush2.msra.mxu0 0.0
    %112 = vmatprep.subr.mxu0 0.0
    %113 = vmatpush2.msra.mxu0 0.0
    %114 = vmatprep.subr.mxu0 0.0
    %115 = vmatpush2.msra.mxu0 0.0
    %116 = vmatprep.subr.mxu0 0.0
    %117 = vmatpush2.msra.mxu0 0.0
    %118 = vmatprep.subr.mxu0 0.0
    %119 = vmatpush2.msra.mxu0 0.0
    %120 = vmatprep.subr.mxu0 0.0
    %121 = vmatpush2.msra.mxu0 0.0
    %122 = vmatprep.subr.mxu0 0.0
    %123 = vmatpush2.msra.mxu0 0.0
    %124 = vmatprep.subr.mxu0 0.0
    %125 = vmatpush2.msra.mxu0 0.0
    %126 = vmatprep.subr.mxu0 0.0
    %127 = vmatpush2.msra.mxu0 0.0
    %128 = vmatprep.subr.mxu0 0.0
    %129 = vmatpush2.msra.mxu0 0.0
    %130 = vmatprep.subr.mxu0 0.0
    %131 = vmatpush2.msra.mxu0 0.0
    %132 = vmatprep.subr.mxu0 0.0
    %133 = vmatpush2.msra.mxu0 0.0
    %134 = vmatprep.mubr.f32.mxu0 0.0
    %135 = vmatmul.mubr.f32.gmra.mxu0 %v65
    %v136 = vpop.f32.mrf.mxu0
    %v137 = vadd.f32 %v62, %v136
    %v138 = vpop.f32.mrf.mxu0
    %139 = vmatprep.mubr.f32.mxu0 0.0
    %140 = vmatmul.mubr.f32.gmra.mxu0 %v68
    %v141 = vpop.f32.mrf.mxu0
    %v142 = vadd.f32 %v62, %v141
    %v143 = vpop.f32.mrf.mxu0
    %144 = vdwg.mxu0
    %146 = vrot.lane.b32.xlu0 %v137, 96
    %v147 = vpop.permute.xlu0 %146
    %vm148 = vcmask 64512
    %v149 = vsel %vm148, %v137, 0
    %v151 = vsel %vm148, %v147, 0
    %153 = vmatprep.subr.mxu0 0.0
    %154 = vmatpush1.xpose.msra.mxu0 0.0
    %155 = vmatprep.subr.mxu0 0.0
    %156 = vmatpush1.xpose.msra.mxu0 0.0
    %157 = vmatprep.subr.mxu0 0.0
    %158 = vmatpush1.xpose.msra.mxu0 0.0
    %159 = vmatprep.subr.mxu0 0.0
    %160 = vmatpush1.xpose.msra.mxu0 0.0
    %161 = vmatprep.subr.mxu0 0.0
    %162 = vmatpush1.xpose.msra.mxu0 0.0
    %163 = vmatprep.subr.mxu0 0.0
    %164 = vmatpush1.xpose.msra.mxu0 0.0
    %165 = vmatprep.subr.mxu0 0.0
    %166 = vmatpush1.xpose.msra.mxu0 0.0
    %167 = vmatprep.subr.mxu0 0.0
    %168 = vmatpush1.xpose.msra.mxu0 0.0
    %169 = vmatprep.subr.mxu0 0.0
    %170 = vmatpush1.xpose.msra.mxu0 0.0
    %171 = vmatprep.subr.mxu0 0.0
    %172 = vmatpush1.xpose.msra.mxu0 0.0
    %173 = vmatprep.subr.mxu0 0.0
    %174 = vmatpush1.xpose.msra.mxu0 0.0
    %175 = vmatprep.subr.mxu0 0.0
    %176 = vmatpush1.xpose.msra.mxu0 0.0
    %177 = vmatprep.subr.mxu0 0.0
    %178 = vmatpush1.xpose.msra.mxu0 0.0
    %179 = vmatprep.subr.mxu0 0.0
    %180 = vmatpush1.xpose.msra.mxu0 0.0
    %181 = vmatprep.subr.mxu0 0.0
    %182 = vmatpush1.xpose.msra.mxu0 0.0
    %183 = vmatprep.subr.mxu0 0.0
    %184 = vmatpush1.xpose.msra.mxu0 %v151
    %185 = vmatprep.subr.mxu0 0.0
    %186 = vmatpush2.xpose.msra.mxu0 0.0
    %187 = vmatprep.subr.mxu0 0.0
    %188 = vmatpush2.xpose.msra.mxu0 0.0
    %189 = vmatprep.subr.mxu0 0.0
    %190 = vmatpush2.xpose.msra.mxu0 0.0
    %191 = vmatprep.subr.mxu0 0.0
    %192 = vmatpush2.xpose.msra.mxu0 0.0
    %193 = vmatprep.subr.mxu0 0.0
    %194 = vmatpush2.xpose.msra.mxu0 0.0
    %195 = vmatprep.subr.mxu0 0.0
    %196 = vmatpush2.xpose.msra.mxu0 0.0
    %197 = vmatprep.subr.mxu0 0.0
    %198 = vmatpush2.xpose.msra.mxu0 0.0
    %199 = vmatprep.subr.mxu0 0.0
    %200 = vmatpush2.xpose.msra.mxu0 0.0
    %201 = vmatprep.subr.mxu0 0.0
    %202 = vmatpush2.xpose.msra.mxu0 0.0
    %203 = vmatprep.subr.mxu0 0.0
    %204 = vmatpush2.xpose.msra.mxu0 0.0
    %205 = vmatprep.subr.mxu0 0.0
    %206 = vmatpush2.xpose.msra.mxu0 0.0
    %207 = vmatprep.subr.mxu0 0.0
    %208 = vmatpush2.xpose.msra.mxu0 0.0
    %209 = vmatprep.subr.mxu0 0.0
    %210 = vmatpush2.xpose.msra.mxu0 0.0
    %211 = vmatprep.subr.mxu0 0.0
    %212 = vmatpush2.xpose.msra.mxu0 0.0
    %213 = vmatprep.subr.mxu0 0.0
    %214 = vmatpush2.xpose.msra.mxu0 0.0
    %215 = vmatprep.subr.mxu0 0.0
    %216 = vmatpush2.xpose.msra.mxu0 0.0
    %217 = vmatprep.mubr.f32.mxu0 0.0
    %218 = vmatmul.mubr.f32.gmra.mxu0 %v149
    %v219 = vpop.f32.mrf.mxu0
    %v220 = vadd.f32 0.0, %v219
    %v221 = vpop.f32.mrf.mxu0
    %222 = vdwg.mxu0
    %224 = vrot.lane.b32.xlu0 %v142, 96
    %v225 = vpop.permute.xlu0 %224
    %v226 = vsel %vm148, %v142, 0
    %v228 = vsel %vm148, %v225, 0
    %230 = vmatprep.subr.mxu0 0.0
    %231 = vmatpush1.xpose.msra.mxu0 0.0
    %232 = vmatprep.subr.mxu0 0.0
    %233 = vmatpush1.xpose.msra.mxu0 0.0
    %234 = vmatprep.subr.mxu0 0.0
    %235 = vmatpush1.xpose.msra.mxu0 0.0
    %236 = vmatprep.subr.mxu0 0.0
    %237 = vmatpush1.xpose.msra.mxu0 0.0
    %238 = vmatprep.subr.mxu0 0.0
    %239 = vmatpush1.xpose.msra.mxu0 0.0
    %240 = vmatprep.subr.mxu0 0.0
    %241 = vmatpush1.xpose.msra.mxu0 0.0
    %242 = vmatprep.subr.mxu0 0.0
    %243 = vmatpush1.xpose.msra.mxu0 0.0
    %244 = vmatprep.subr.mxu0 0.0
    %245 = vmatpush1.xpose.msra.mxu0 0.0
    %246 = vmatprep.subr.mxu0 0.0
    %247 = vmatpush1.xpose.msra.mxu0 0.0
    %248 = vmatprep.subr.mxu0 0.0
    %249 = vmatpush1.xpose.msra.mxu0 0.0
    %250 = vmatprep.subr.mxu0 0.0
    %251 = vmatpush1.xpose.msra.mxu0 0.0
    %252 = vmatprep.subr.mxu0 0.0
    %253 = vmatpush1.xpose.msra.mxu0 0.0
    %254 = vmatprep.subr.mxu0 0.0
    %255 = vmatpush1.xpose.msra.mxu0 0.0
    %256 = vmatprep.subr.mxu0 0.0
    %257 = vmatpush1.xpose.msra.mxu0 0.0
    %258 = vmatprep.subr.mxu0 0.0
    %259 = vmatpush1.xpose.msra.mxu0 0.0
    %260 = vmatprep.subr.mxu0 0.0
    %261 = vmatpush1.xpose.msra.mxu0 %v228
    %262 = vmatprep.subr.mxu0 0.0
    %263 = vmatpush2.xpose.msra.mxu0 0.0
    %264 = vmatprep.subr.mxu0 0.0
    %265 = vmatpush2.xpose.msra.mxu0 0.0
    %266 = vmatprep.subr.mxu0 0.0
    %267 = vmatpush2.xpose.msra.mxu0 0.0
    %268 = vmatprep.subr.mxu0 0.0
    %269 = vmatpush2.xpose.msra.mxu0 0.0
    %270 = vmatprep.subr.mxu0 0.0
    %271 = vmatpush2.xpose.msra.mxu0 0.0
    %272 = vmatprep.subr.mxu0 0.0
    %273 = vmatpush2.xpose.msra.mxu0 0.0
    %274 = vmatprep.subr.mxu0 0.0
    %275 = vmatpush2.xpose.msra.mxu0 0.0
    %276 = vmatprep.subr.mxu0 0.0
    %277 = vmatpush2.xpose.msra.mxu0 0.0
    %278 = vmatprep.subr.mxu0 0.0
    %279 = vmatpush2.xpose.msra.mxu0 0.0
    %280 = vmatprep.subr.mxu0 0.0
    %281 = vmatpush2.xpose.msra.mxu0 0.0
    %282 = vmatprep.subr.mxu0 0.0
    %283 = vmatpush2.xpose.msra.mxu0 0.0
    %284 = vmatprep.subr.mxu0 0.0
    %285 = vmatpush2.xpose.msra.mxu0 0.0
    %286 = vmatprep.subr.mxu0 0.0
    %287 = vmatpush2.xpose.msra.mxu0 0.0
    %288 = vmatprep.subr.mxu0 0.0
    %289 = vmatpush2.xpose.msra.mxu0 0.0
    %290 = vmatprep.subr.mxu0 0.0
    %291 = vmatpush2.xpose.msra.mxu0 0.0
    %292 = vmatprep.subr.mxu0 0.0
    %293 = vmatpush2.xpose.msra.mxu0 0.0
    %294 = vmatprep.mubr.f32.mxu0 0.0
    %295 = vmatmul.mubr.f32.gmra.mxu0 %v226
    %v296 = vpop.f32.mrf.mxu0
    %v297 = vadd.f32 0.0, %v296
    %v298 = vpop.f32.mrf.mxu0
    %299 = vdwg.mxu0
    %v300 = vmul.f32 %v220, 0.35355338
    %v301 = vmul.f32 %v297, 0.35355338
    %v302 = vsel %vm148, %v300, -inf
    %303 = vmax.xlane.f32.xlu0 %v302
    %v304 = vpop.xlane.xlu0 %303
    %v305 = vsel %vm148, %v301, -inf
    %306 = vmax.xlane.f32.xlu0 %v305
    %v307 = vpop.xlane.xlu0 %306
    %v308 = vsub.f32 %v300, %v304
    %v309 = vsub.f32 %v301, %v307
    %v310 = vmul.f32 %v308, 1.442695
    %v311 = vpow.pop %v310
    %v312 = vmul.f32 %v309, 1.442695
    %v313 = vpow.pop %v312
    %v314 = vsel %vm148, %v311, 0.0
    %315 = vadd.xlane.f32.xlu0 %v314
    %v316 = vpop.xlane.xlu0 %315
    %v317 = vsel %vm148, %v313, 0.0
    %318 = vadd.xlane.f32.xlu0 %v317
    %v319 = vpop.xlane.xlu0 %318
    %v320 = vrcp.pop %v316
    %v321 = vmul.f32 %v311, %v320
    %v322 = vrcp.pop %v319
    %v323 = vmul.f32 %v313, %v322
    %324 = vrot.lane.b32.xlu0 %v137, 64
    %v325 = vpop.permute.xlu0 %324
    %v328 = vsel %vm148, %v321, 0
    %330 = vmatprep.subr.mxu0 0.0
    %331 = vmatpush1.msra.mxu0 0.0
    %332 = vmatprep.subr.mxu0 0.0
    %333 = vmatpush1.msra.mxu0 0.0
    %334 = vmatprep.subr.mxu0 0.0
    %335 = vmatpush1.msra.mxu0 0.0
    %336 = vmatprep.subr.mxu0 0.0
    %337 = vmatpush1.msra.mxu0 0.0
    %338 = vmatprep.subr.mxu0 0.0
    %339 = vmatpush1.msra.mxu0 0.0
    %340 = vmatprep.subr.mxu0 0.0
    %341 = vmatpush1.msra.mxu0 0.0
    %342 = vmatprep.subr.mxu0 0.0
    %343 = vmatpush1.msra.mxu0 0.0
    %344 = vmatprep.subr.mxu0 0.0
    %345 = vmatpush1.msra.mxu0 0.0
    %346 = vmatprep.subr.mxu0 0.0
    %347 = vmatpush1.msra.mxu0 0.0
    %348 = vmatprep.subr.mxu0 0.0
    %349 = vmatpush1.msra.mxu0 0.0
    %350 = vmatprep.subr.mxu0 0.0
    %351 = vmatpush1.msra.mxu0 0.0
    %352 = vmatprep.subr.mxu0 0.0
    %353 = vmatpush1.msra.mxu0 0.0
    %354 = vmatprep.subr.mxu0 0.0
    %355 = vmatpush1.msra.mxu0 0.0
    %356 = vmatprep.subr.mxu0 0.0
    %357 = vmatpush1.msra.mxu0 0.0
    %358 = vmatprep.subr.mxu0 0.0
    %359 = vmatpush1.msra.mxu0 0.0
    %360 = vmatprep.subr.mxu0 0.0
    %361 = vmatpush1.msra.mxu0 %v325
    %362 = vmatprep.subr.mxu0 0.0
    %363 = vmatpush2.msra.mxu0 0.0
    %364 = vmatprep.subr.mxu0 0.0
    %365 = vmatpush2.msra.mxu0 0.0
    %366 = vmatprep.subr.mxu0 0.0
    %367 = vmatpush2.msra.mxu0 0.0
    %368 = vmatprep.subr.mxu0 0.0
    %369 = vmatpush2.msra.mxu0 0.0
    %370 = vmatprep.subr.mxu0 0.0
    %371 = vmatpush2.msra.mxu0 0.0
    %372 = vmatprep.subr.mxu0 0.0
    %373 = vmatpush2.msra.mxu0 0.0
    %374 = vmatprep.subr.mxu0 0.0
    %375 = vmatpush2.msra.mxu0 0.0
    %376 = vmatprep.subr.mxu0 0.0
    %377 = vmatpush2.msra.mxu0 0.0
    %378 = vmatprep.subr.mxu0 0.0
    %379 = vmatpush2.msra.mxu0 0.0
    %380 = vmatprep.subr.mxu0 0.0
    %381 = vmatpush2.msra.mxu0 0.0
    %382 = vmatprep.subr.mxu0 0.0
    %383 = vmatpush2.msra.mxu0 0.0
    %384 = vmatprep.subr.mxu0 0.0
    %385 = vmatpush2.msra.mxu0 0.0
    %386 = vmatprep.subr.mxu0 0.0
    %387 = vmatpush2.msra.mxu0 0.0
    %388 = vmatprep.subr.mxu0 0.0
    %389 = vmatpush2.msra.mxu0 0.0
    %390 = vmatprep.subr.mxu0 0.0
    %391 = vmatpush2.msra.mxu0 0.0
    %392 = vmatprep.subr.mxu0 0.0
    %393 = vmatpush2.msra.mxu0 0.0
    %394 = vmatprep.mubr.f32.mxu0 0.0
    %395 = vmatmul.mubr.f32.gmra.mxu0 %v328
    %v396 = vpop.f32.mrf.mxu0
    %v397 = vadd.f32 0.0, %v396
    %v398 = vpop.f32.mrf.mxu0
    %399 = vdwg.mxu0
    %400 = vrot.lane.b32.xlu0 %v142, 64
    %v401 = vpop.permute.xlu0 %400
    %v404 = vsel %vm148, %v323, 0
    %406 = vmatprep.subr.mxu0 0.0
    %407 = vmatpush1.msra.mxu0 0.0
    %408 = vmatprep.subr.mxu0 0.0
    %409 = vmatpush1.msra.mxu0 0.0
    %410 = vmatprep.subr.mxu0 0.0
    %411 = vmatpush1.msra.mxu0 0.0
    %412 = vmatprep.subr.mxu0 0.0
    %413 = vmatpush1.msra.mxu0 0.0
    %414 = vmatprep.subr.mxu0 0.0
    %415 = vmatpush1.msra.mxu0 0.0
    %416 = vmatprep.subr.mxu0 0.0
    %417 = vmatpush1.msra.mxu0 0.0
    %418 = vmatprep.subr.mxu0 0.0
    %419 = vmatpush1.msra.mxu0 0.0
    %420 = vmatprep.subr.mxu0 0.0
    %421 = vmatpush1.msra.mxu0 0.0
    %422 = vmatprep.subr.mxu0 0.0
    %423 = vmatpush1.msra.mxu0 0.0
    %424 = vmatprep.subr.mxu0 0.0
    %425 = vmatpush1.msra.mxu0 0.0
    %426 = vmatprep.subr.mxu0 0.0
    %427 = vmatpush1.msra.mxu0 0.0
    %428 = vmatprep.subr.mxu0 0.0
    %429 = vmatpush1.msra.mxu0 0.0
    %430 = vmatprep.subr.mxu0 0.0
    %431 = vmatpush1.msra.mxu0 0.0
    %432 = vmatprep.subr.mxu0 0.0
    %433 = vmatpush1.msra.mxu0 0.0
    %434 = vmatprep.subr.mxu0 0.0
    %435 = vmatpush1.msra.mxu0 0.0
    %436 = vmatprep.subr.mxu0 0.0
    %437 = vmatpush1.msra.mxu0 %v401
    %438 = vmatprep.subr.mxu0 0.0
    %439 = vmatpush2.msra.mxu0 0.0
    %440 = vmatprep.subr.mxu0 0.0
    %441 = vmatpush2.msra.mxu0 0.0
    %442 = vmatprep.subr.mxu0 0.0
    %443 = vmatpush2.msra.mxu0 0.0
    %444 = vmatprep.subr.mxu0 0.0
    %445 = vmatpush2.msra.mxu0 0.0
    %446 = vmatprep.subr.mxu0 0.0
    %447 = vmatpush2.msra.mxu0 0.0
    %448 = vmatprep.subr.mxu0 0.0
    %449 = vmatpush2.msra.mxu0 0.0
    %450 = vmatprep.subr.mxu0 0.0
    %451 = vmatpush2.msra.mxu0 0.0
    %452 = vmatprep.subr.mxu0 0.0
    %453 = vmatpush2.msra.mxu0 0.0
    %454 = vmatprep.subr.mxu0 0.0
    %455 = vmatpush2.msra.mxu0 0.0
    %456 = vmatprep.subr.mxu0 0.0
    %457 = vmatpush2.msra.mxu0 0.0
    %458 = vmatprep.subr.mxu0 0.0
    %459 = vmatpush2.msra.mxu0 0.0
    %460 = vmatprep.subr.mxu0 0.0
    %461 = vmatpush2.msra.mxu0 0.0
    %462 = vmatprep.subr.mxu0 0.0
    %463 = vmatpush2.msra.mxu0 0.0
    %464 = vmatprep.subr.mxu0 0.0
    %465 = vmatpush2.msra.mxu0 0.0
    %466 = vmatprep.subr.mxu0 0.0
    %467 = vmatpush2.msra.mxu0 0.0
    %468 = vmatprep.subr.mxu0 0.0
    %469 = vmatpush2.msra.mxu0 0.0
    %470 = vmatprep.mubr.f32.mxu0 0.0
    %471 = vmatmul.mubr.f32.gmra.mxu0 %v404
    %v472 = vpop.f32.mrf.mxu0
    %v473 = vadd.f32 0.0, %v472
    %v474 = vpop.f32.mrf.mxu0
    %475 = vdwg.mxu0
    %476 = vrot.lane.b32.xlu0 %v137, 120
    %v477 = vpop.permute.xlu0 %476
    %478 = vrot.lane.b32.xlu0 %v137, 88
    %v479 = vpop.permute.xlu0 %478
    %v480 = vsel %vm148, %v477, 0
    %v482 = vsel %vm148, %v479, 0
    %484 = vmatprep.subr.mxu0 0.0
    %485 = vmatpush1.xpose.msra.mxu0 0.0
    %486 = vmatprep.subr.mxu0 0.0
    %487 = vmatpush1.xpose.msra.mxu0 0.0
    %488 = vmatprep.subr.mxu0 0.0
    %489 = vmatpush1.xpose.msra.mxu0 0.0
    %490 = vmatprep.subr.mxu0 0.0
    %491 = vmatpush1.xpose.msra.mxu0 0.0
    %492 = vmatprep.subr.mxu0 0.0
    %493 = vmatpush1.xpose.msra.mxu0 0.0
    %494 = vmatprep.subr.mxu0 0.0
    %495 = vmatpush1.xpose.msra.mxu0 0.0
    %496 = vmatprep.subr.mxu0 0.0
    %497 = vmatpush1.xpose.msra.mxu0 0.0
    %498 = vmatprep.subr.mxu0 0.0
    %499 = vmatpush1.xpose.msra.mxu0 0.0
    %500 = vmatprep.subr.mxu0 0.0
    %501 = vmatpush1.xpose.msra.mxu0 0.0
    %502 = vmatprep.subr.mxu0 0.0
    %503 = vmatpush1.xpose.msra.mxu0 0.0
    %504 = vmatprep.subr.mxu0 0.0
    %505 = vmatpush1.xpose.msra.mxu0 0.0
    %506 = vmatprep.subr.mxu0 0.0
    %507 = vmatpush1.xpose.msra.mxu0 0.0
    %508 = vmatprep.subr.mxu0 0.0
    %509 = vmatpush1.xpose.msra.mxu0 0.0
    %510 = vmatprep.subr.mxu0 0.0
    %511 = vmatpush1.xpose.msra.mxu0 0.0
    %512 = vmatprep.subr.mxu0 0.0
    %513 = vmatpush1.xpose.msra.mxu0 0.0
    %514 = vmatprep.subr.mxu0 0.0
    %515 = vmatpush1.xpose.msra.mxu0 %v482
    %516 = vmatprep.subr.mxu0 0.0
    %517 = vmatpush2.xpose.msra.mxu0 0.0
    %518 = vmatprep.subr.mxu0 0.0
    %519 = vmatpush2.xpose.msra.mxu0 0.0
    %520 = vmatprep.subr.mxu0 0.0
    %521 = vmatpush2.xpose.msra.mxu0 0.0
    %522 = vmatprep.subr.mxu0 0.0
    %523 = vmatpush2.xpose.msra.mxu0 0.0
    %524 = vmatprep.subr.mxu0 0.0
    %525 = vmatpush2.xpose.msra.mxu0 0.0
    %526 = vmatprep.subr.mxu0 0.0
    %527 = vmatpush2.xpose.msra.mxu0 0.0
    %528 = vmatprep.subr.mxu0 0.0
    %529 = vmatpush2.xpose.msra.mxu0 0.0
    %530 = vmatprep.subr.mxu0 0.0
    %531 = vmatpush2.xpose.msra.mxu0 0.0
    %532 = vmatprep.subr.mxu0 0.0
    %533 = vmatpush2.xpose.msra.mxu0 0.0
    %534 = vmatprep.subr.mxu0 0.0
    %535 = vmatpush2.xpose.msra.mxu0 0.0
    %536 = vmatprep.subr.mxu0 0.0
    %537 = vmatpush2.xpose.msra.mxu0 0.0
    %538 = vmatprep.subr.mxu0 0.0
    %539 = vmatpush2.xpose.msra.mxu0 0.0
    %540 = vmatprep.subr.mxu0 0.0
    %541 = vmatpush2.xpose.msra.mxu0 0.0
    %542 = vmatprep.subr.mxu0 0.0
    %543 = vmatpush2.xpose.msra.mxu0 0.0
    %544 = vmatprep.subr.mxu0 0.0
    %545 = vmatpush2.xpose.msra.mxu0 0.0
    %546 = vmatprep.subr.mxu0 0.0
    %547 = vmatpush2.xpose.msra.mxu0 0.0
    %548 = vmatprep.mubr.f32.mxu0 0.0
    %549 = vmatmul.mubr.f32.gmra.mxu0 %v480
    %v550 = vpop.f32.mrf.mxu0
    %v551 = vadd.f32 0.0, %v550
    %v552 = vpop.f32.mrf.mxu0
    %553 = vdwg.mxu0
    %554 = vrot.lane.b32.xlu0 %v142, 120
    %v555 = vpop.permute.xlu0 %554
    %556 = vrot.lane.b32.xlu0 %v142, 88
    %v557 = vpop.permute.xlu0 %556
    %v558 = vsel %vm148, %v555, 0
    %v560 = vsel %vm148, %v557, 0
    %562 = vmatprep.subr.mxu0 0.0
    %563 = vmatpush1.xpose.msra.mxu0 0.0
    %564 = vmatprep.subr.mxu0 0.0
    %565 = vmatpush1.xpose.msra.mxu0 0.0
    %566 = vmatprep.subr.mxu0 0.0
    %567 = vmatpush1.xpose.msra.mxu0 0.0
    %568 = vmatprep.subr.mxu0 0.0
    %569 = vmatpush1.xpose.msra.mxu0 0.0
    %570 = vmatprep.subr.mxu0 0.0
    %571 = vmatpush1.xpose.msra.mxu0 0.0
    %572 = vmatprep.subr.mxu0 0.0
    %573 = vmatpush1.xpose.msra.mxu0 0.0
    %574 = vmatprep.subr.mxu0 0.0
    %575 = vmatpush1.xpose.msra.mxu0 0.0
    %576 = vmatprep.subr.mxu0 0.0
    %577 = vmatpush1.xpose.msra.mxu0 0.0
    %578 = vmatprep.subr.mxu0 0.0
    %579 = vmatpush1.xpose.msra.mxu0 0.0
    %580 = vmatprep.subr.mxu0 0.0
    %581 = vmatpush1.xpose.msra.mxu0 0.0
    %582 = vmatprep.subr.mxu0 0.0
    %583 = vmatpush1.xpose.msra.mxu0 0.0
    %584 = vmatprep.subr.mxu0 0.0
    %585 = vmatpush1.xpose.msra.mxu0 0.0
    %586 = vmatprep.subr.mxu0 0.0
    %587 = vmatpush1.xpose.msra.mxu0 0.0
    %588 = vmatprep.subr.mxu0 0.0
    %589 = vmatpush1.xpose.msra.mxu0 0.0
    %590 = vmatprep.subr.mxu0 0.0
    %591 = vmatpush1.xpose.msra.mxu0 0.0
    %592 = vmatprep.subr.mxu0 0.0
    %593 = vmatpush1.xpose.msra.mxu0 %v560
    %594 = vmatprep.subr.mxu0 0.0
    %595 = vmatpush2.xpose.msra.mxu0 0.0
    %596 = vmatprep.subr.mxu0 0.0
    %597 = vmatpush2.xpose.msra.mxu0 0.0
    %598 = vmatprep.subr.mxu0 0.0
    %599 = vmatpush2.xpose.msra.mxu0 0.0
    %600 = vmatprep.subr.mxu0 0.0
    %601 = vmatpush2.xpose.msra.mxu0 0.0
    %602 = vmatprep.subr.mxu0 0.0
    %603 = vmatpush2.xpose.msra.mxu0 0.0
    %604 = vmatprep.subr.mxu0 0.0
    %605 = vmatpush2.xpose.msra.mxu0 0.0
    %606 = vmatprep.subr.mxu0 0.0
    %607 = vmatpush2.xpose.msra.mxu0 0.0
    %608 = vmatprep.subr.mxu0 0.0
    %609 = vmatpush2.xpose.msra.mxu0 0.0
    %610 = vmatprep.subr.mxu0 0.0
    %611 = vmatpush2.xpose.msra.mxu0 0.0
    %612 = vmatprep.subr.mxu0 0.0
    %613 = vmatpush2.xpose.msra.mxu0 0.0
    %614 = vmatprep.subr.mxu0 0.0
    %615 = vmatpush2.xpose.msra.mxu0 0.0
    %616 = vmatprep.subr.mxu0 0.0
    %617 = vmatpush2.xpose.msra.mxu0 0.0
    %618 = vmatprep.subr.mxu0 0.0
    %619 = vmatpush2.xpose.msra.mxu0 0.0
    %620 = vmatprep.subr.mxu0 0.0
    %621 = vmatpush2.xpose.msra.mxu0 0.0
    %622 = vmatprep.subr.mxu0 0.0
    %623 = vmatpush2.xpose.msra.mxu0 0.0
    %624 = vmatprep.subr.mxu0 0.0
    %625 = vmatpush2.xpose.msra.mxu0 0.0
    %626 = vmatprep.mubr.f32.mxu0 0.0
    %627 = vmatmul.mubr.f32.gmra.mxu0 %v558
    %v628 = vpop.f32.mrf.mxu0
    %v629 = vadd.f32 0.0, %v628
    %v630 = vpop.f32.mrf.mxu0
    %631 = vdwg.mxu0
    %v632 = vmul.f32 %v551, 0.35355338
    %v633 = vmul.f32 %v629, 0.35355338
    %v634 = vsel %vm148, %v632, -inf
    %635 = vmax.xlane.f32.xlu0 %v634
    %v636 = vpop.xlane.xlu0 %635
    %v637 = vsel %vm148, %v633, -inf
    %638 = vmax.xlane.f32.xlu0 %v637
    %v639 = vpop.xlane.xlu0 %638
    %v640 = vsub.f32 %v632, %v636
    %v641 = vsub.f32 %v633, %v639
    %v642 = vmul.f32 %v640, 1.442695
    %v643 = vpow.pop %v642
    %v644 = vmul.f32 %v641, 1.442695
    %v645 = vpow.pop %v644
    %v646 = vsel %vm148, %v643, 0.0
    %647 = vadd.xlane.f32.xlu0 %v646
    %v648 = vpop.xlane.xlu0 %647
    %v649 = vsel %vm148, %v645, 0.0
    %650 = vadd.xlane.f32.xlu0 %v649
    %v651 = vpop.xlane.xlu0 %650
    %v652 = vrcp.pop %v648
    %v653 = vmul.f32 %v643, %v652
    %v654 = vrcp.pop %v651
    %v655 = vmul.f32 %v645, %v654
    %656 = vrot.lane.b32.xlu0 %v137, 56
    %v657 = vpop.permute.xlu0 %656
    %v660 = vsel %vm148, %v653, 0
    %662 = vmatprep.subr.mxu0 0.0
    %663 = vmatpush1.msra.mxu0 0.0
    %664 = vmatprep.subr.mxu0 0.0
    %665 = vmatpush1.msra.mxu0 0.0
    %666 = vmatprep.subr.mxu0 0.0
    %667 = vmatpush1.msra.mxu0 0.0
    %668 = vmatprep.subr.mxu0 0.0
    %669 = vmatpush1.msra.mxu0 0.0
    %670 = vmatprep.subr.mxu0 0.0
    %671 = vmatpush1.msra.mxu0 0.0
    %672 = vmatprep.subr.mxu0 0.0
    %673 = vmatpush1.msra.mxu0 0.0
    %674 = vmatprep.subr.mxu0 0.0
    %675 = vmatpush1.msra.mxu0 0.0
    %676 = vmatprep.subr.mxu0 0.0
    %677 = vmatpush1.msra.mxu0 0.0
    %678 = vmatprep.subr.mxu0 0.0
    %679 = vmatpush1.msra.mxu0 0.0
    %680 = vmatprep.subr.mxu0 0.0
    %681 = vmatpush1.msra.mxu0 0.0
    %682 = vmatprep.subr.mxu0 0.0
    %683 = vmatpush1.msra.mxu0 0.0
    %684 = vmatprep.subr.mxu0 0.0
    %685 = vmatpush1.msra.mxu0 0.0
    %686 = vmatprep.subr.mxu0 0.0
    %687 = vmatpush1.msra.mxu0 0.0
    %688 = vmatprep.subr.mxu0 0.0
    %689 = vmatpush1.msra.mxu0 0.0
    %690 = vmatprep.subr.mxu0 0.0
    %691 = vmatpush1.msra.mxu0 0.0
    %692 = vmatprep.subr.mxu0 0.0
    %693 = vmatpush1.msra.mxu0 %v657
    %694 = vmatprep.subr.mxu0 0.0
    %695 = vmatpush2.msra.mxu0 0.0
    %696 = vmatprep.subr.mxu0 0.0
    %697 = vmatpush2.msra.mxu0 0.0
    %698 = vmatprep.subr.mxu0 0.0
    %699 = vmatpush2.msra.mxu0 0.0
    %700 = vmatprep.subr.mxu0 0.0
    %701 = vmatpush2.msra.mxu0 0.0
    %702 = vmatprep.subr.mxu0 0.0
    %703 = vmatpush2.msra.mxu0 0.0
    %704 = vmatprep.subr.mxu0 0.0
    %705 = vmatpush2.msra.mxu0 0.0
    %706 = vmatprep.subr.mxu0 0.0
    %707 = vmatpush2.msra.mxu0 0.0
    %708 = vmatprep.subr.mxu0 0.0
    %709 = vmatpush2.msra.mxu0 0.0
    %710 = vmatprep.subr.mxu0 0.0
    %711 = vmatpush2.msra.mxu0 0.0
    %712 = vmatprep.subr.mxu0 0.0
    %713 = vmatpush2.msra.mxu0 0.0
    %714 = vmatprep.subr.mxu0 0.0
    %715 = vmatpush2.msra.mxu0 0.0
    %716 = vmatprep.subr.mxu0 0.0
    %717 = vmatpush2.msra.mxu0 0.0
    %718 = vmatprep.subr.mxu0 0.0
    %719 = vmatpush2.msra.mxu0 0.0
    %720 = vmatprep.subr.mxu0 0.0
    %721 = vmatpush2.msra.mxu0 0.0
    %722 = vmatprep.subr.mxu0 0.0
    %723 = vmatpush2.msra.mxu0 0.0
    %724 = vmatprep.subr.mxu0 0.0
    %725 = vmatpush2.msra.mxu0 0.0
    %726 = vmatprep.mubr.f32.mxu0 0.0
    %727 = vmatmul.mubr.f32.gmra.mxu0 %v660
    %v728 = vpop.f32.mrf.mxu0
    %v729 = vadd.f32 0.0, %v728
    %v730 = vpop.f32.mrf.mxu0
    %731 = vdwg.mxu0
    %732 = vrot.lane.b32.xlu0 %v142, 56
    %v733 = vpop.permute.xlu0 %732
    %v736 = vsel %vm148, %v655, 0
    %738 = vmatprep.subr.mxu0 0.0
    %739 = vmatpush1.msra.mxu0 0.0
    %740 = vmatprep.subr.mxu0 0.0
    %741 = vmatpush1.msra.mxu0 0.0
    %742 = vmatprep.subr.mxu0 0.0
    %743 = vmatpush1.msra.mxu0 0.0
    %744 = vmatprep.subr.mxu0 0.0
    %745 = vmatpush1.msra.mxu0 0.0
    %746 = vmatprep.subr.mxu0 0.0
    %747 = vmatpush1.msra.mxu0 0.0
    %748 = vmatprep.subr.mxu0 0.0
    %749 = vmatpush1.msra.mxu0 0.0
    %750 = vmatprep.subr.mxu0 0.0
    %751 = vmatpush1.msra.mxu0 0.0
    %752 = vmatprep.subr.mxu0 0.0
    %753 = vmatpush1.msra.mxu0 0.0
    %754 = vmatprep.subr.mxu0 0.0
    %755 = vmatpush1.msra.mxu0 0.0
    %756 = vmatprep.subr.mxu0 0.0
    %757 = vmatpush1.msra.mxu0 0.0
    %758 = vmatprep.subr.mxu0 0.0
    %759 = vmatpush1.msra.mxu0 0.0
    %760 = vmatprep.subr.mxu0 0.0
    %761 = vmatpush1.msra.mxu0 0.0
    %762 = vmatprep.subr.mxu0 0.0
    %763 = vmatpush1.msra.mxu0 0.0
    %764 = vmatprep.subr.mxu0 0.0
    %765 = vmatpush1.msra.mxu0 0.0
    %766 = vmatprep.subr.mxu0 0.0
    %767 = vmatpush1.msra.mxu0 0.0
    %768 = vmatprep.subr.mxu0 0.0
    %769 = vmatpush1.msra.mxu0 %v733
    %770 = vmatprep.subr.mxu0 0.0
    %771 = vmatpush2.msra.mxu0 0.0
    %772 = vmatprep.subr.mxu0 0.0
    %773 = vmatpush2.msra.mxu0 0.0
    %774 = vmatprep.subr.mxu0 0.0
    %775 = vmatpush2.msra.mxu0 0.0
    %776 = vmatprep.subr.mxu0 0.0
    %777 = vmatpush2.msra.mxu0 0.0
    %778 = vmatprep.subr.mxu0 0.0
    %779 = vmatpush2.msra.mxu0 0.0
    %780 = vmatprep.subr.mxu0 0.0
    %781 = vmatpush2.msra.mxu0 0.0
    %782 = vmatprep.subr.mxu0 0.0
    %783 = vmatpush2.msra.mxu0 0.0
    %784 = vmatprep.subr.mxu0 0.0
    %785 = vmatpush2.msra.mxu0 0.0
    %786 = vmatprep.subr.mxu0 0.0
    %787 = vmatpush2.msra.mxu0 0.0
    %788 = vmatprep.subr.mxu0 0.0
    %789 = vmatpush2.msra.mxu0 0.0
    %790 = vmatprep.subr.mxu0 0.0
    %791 = vmatpush2.msra.mxu0 0.0
    %792 = vmatprep.subr.mxu0 0.0
    %793 = vmatpush2.msra.mxu0 0.0
    %794 = vmatprep.subr.mxu0 0.0
    %795 = vmatpush2.msra.mxu0 0.0
    %796 = vmatprep.subr.mxu0 0.0
    %797 = vmatpush2.msra.mxu0 0.0
    %798 = vmatprep.subr.mxu0 0.0
    %799 = vmatpush2.msra.mxu0 0.0
    %800 = vmatprep.subr.mxu0 0.0
    %801 = vmatpush2.msra.mxu0 0.0
    %802 = vmatprep.mubr.f32.mxu0 0.0
    %803 = vmatmul.mubr.f32.gmra.mxu0 %v736
    %v804 = vpop.f32.mrf.mxu0
    %v805 = vadd.f32 0.0, %v804
    %v806 = vpop.f32.mrf.mxu0
    %807 = vdwg.mxu0
    %808 = vrot.lane.b32.xlu0 %v137, 112
    %v809 = vpop.permute.xlu0 %808
    %810 = vrot.lane.b32.xlu0 %v137, 80
    %v811 = vpop.permute.xlu0 %810
    %v812 = vsel %vm148, %v809, 0
    %v814 = vsel %vm148, %v811, 0
    %816 = vmatprep.subr.mxu0 0.0
    %817 = vmatpush1.xpose.msra.mxu0 0.0
    %818 = vmatprep.subr.mxu0 0.0
    %819 = vmatpush1.xpose.msra.mxu0 0.0
    %820 = vmatprep.subr.mxu0 0.0
    %821 = vmatpush1.xpose.msra.mxu0 0.0
    %822 = vmatprep.subr.mxu0 0.0
    %823 = vmatpush1.xpose.msra.mxu0 0.0
    %824 = vmatprep.subr.mxu0 0.0
    %825 = vmatpush1.xpose.msra.mxu0 0.0
    %826 = vmatprep.subr.mxu0 0.0
    %827 = vmatpush1.xpose.msra.mxu0 0.0
    %828 = vmatprep.subr.mxu0 0.0
    %829 = vmatpush1.xpose.msra.mxu0 0.0
    %830 = vmatprep.subr.mxu0 0.0
    %831 = vmatpush1.xpose.msra.mxu0 0.0
    %832 = vmatprep.subr.mxu0 0.0
    %833 = vmatpush1.xpose.msra.mxu0 0.0
    %834 = vmatprep.subr.mxu0 0.0
    %835 = vmatpush1.xpose.msra.mxu0 0.0
    %836 = vmatprep.subr.mxu0 0.0
    %837 = vmatpush1.xpose.msra.mxu0 0.0
    %838 = vmatprep.subr.mxu0 0.0
    %839 = vmatpush1.xpose.msra.mxu0 0.0
    %840 = vmatprep.subr.mxu0 0.0
    %841 = vmatpush1.xpose.msra.mxu0 0.0
    %842 = vmatprep.subr.mxu0 0.0
    %843 = vmatpush1.xpose.msra.mxu0 0.0
    %844 = vmatprep.subr.mxu0 0.0
    %845 = vmatpush1.xpose.msra.mxu0 0.0
    %846 = vmatprep.subr.mxu0 0.0
    %847 = vmatpush1.xpose.msra.mxu0 %v814
    %848 = vmatprep.subr.mxu0 0.0
    %849 = vmatpush2.xpose.msra.mxu0 0.0
    %850 = vmatprep.subr.mxu0 0.0
    %851 = vmatpush2.xpose.msra.mxu0 0.0
    %852 = vmatprep.subr.mxu0 0.0
    %853 = vmatpush2.xpose.msra.mxu0 0.0
    %854 = vmatprep.subr.mxu0 0.0
    %855 = vmatpush2.xpose.msra.mxu0 0.0
    %856 = vmatprep.subr.mxu0 0.0
    %857 = vmatpush2.xpose.msra.mxu0 0.0
    %858 = vmatprep.subr.mxu0 0.0
    %859 = vmatpush2.xpose.msra.mxu0 0.0
    %860 = vmatprep.subr.mxu0 0.0
    %861 = vmatpush2.xpose.msra.mxu0 0.0
    %862 = vmatprep.subr.mxu0 0.0
    %863 = vmatpush2.xpose.msra.mxu0 0.0
    %864 = vmatprep.subr.mxu0 0.0
    %865 = vmatpush2.xpose.msra.mxu0 0.0
    %866 = vmatprep.subr.mxu0 0.0
    %867 = vmatpush2.xpose.msra.mxu0 0.0
    %868 = vmatprep.subr.mxu0 0.0
    %869 = vmatpush2.xpose.msra.mxu0 0.0
    %870 = vmatprep.subr.mxu0 0.0
    %871 = vmatpush2.xpose.msra.mxu0 0.0
    %872 = vmatprep.subr.mxu0 0.0
    %873 = vmatpush2.xpose.msra.mxu0 0.0
    %874 = vmatprep.subr.mxu0 0.0
    %875 = vmatpush2.xpose.msra.mxu0 0.0
    %876 = vmatprep.subr.mxu0 0.0
    %877 = vmatpush2.xpose.msra.mxu0 0.0
    %878 = vmatprep.subr.mxu0 0.0
    %879 = vmatpush2.xpose.msra.mxu0 0.0
    %880 = vmatprep.mubr.f32.mxu0 0.0
    %881 = vmatmul.mubr.f32.gmra.mxu0 %v812
    %v882 = vpop.f32.mrf.mxu0
    %v883 = vadd.f32 0.0, %v882
    %v884 = vpop.f32.mrf.mxu0
    %885 = vdwg.mxu0
    %886 = vrot.lane.b32.xlu0 %v142, 112
    %v887 = vpop.permute.xlu0 %886
    %888 = vrot.lane.b32.xlu0 %v142, 80
    %v889 = vpop.permute.xlu0 %888
    %v890 = vsel %vm148, %v887, 0
    %v892 = vsel %vm148, %v889, 0
    %894 = vmatprep.subr.mxu0 0.0
    %895 = vmatpush1.xpose.msra.mxu0 0.0
    %896 = vmatprep.subr.mxu0 0.0
    %897 = vmatpush1.xpose.msra.mxu0 0.0
    %898 = vmatprep.subr.mxu0 0.0
    %899 = vmatpush1.xpose.msra.mxu0 0.0
    %900 = vmatprep.subr.mxu0 0.0
    %901 = vmatpush1.xpose.msra.mxu0 0.0
    %902 = vmatprep.subr.mxu0 0.0
    %903 = vmatpush1.xpose.msra.mxu0 0.0
    %904 = vmatprep.subr.mxu0 0.0
    %905 = vmatpush1.xpose.msra.mxu0 0.0
    %906 = vmatprep.subr.mxu0 0.0
    %907 = vmatpush1.xpose.msra.mxu0 0.0
    %908 = vmatprep.subr.mxu0 0.0
    %909 = vmatpush1.xpose.msra.mxu0 0.0
    %910 = vmatprep.subr.mxu0 0.0
    %911 = vmatpush1.xpose.msra.mxu0 0.0
    %912 = vmatprep.subr.mxu0 0.0
    %913 = vmatpush1.xpose.msra.mxu0 0.0
    %914 = vmatprep.subr.mxu0 0.0
    %915 = vmatpush1.xpose.msra.mxu0 0.0
    %916 = vmatprep.subr.mxu0 0.0
    %917 = vmatpush1.xpose.msra.mxu0 0.0
    %918 = vmatprep.subr.mxu0 0.0
    %919 = vmatpush1.xpose.msra.mxu0 0.0
    %920 = vmatprep.subr.mxu0 0.0
    %921 = vmatpush1.xpose.msra.mxu0 0.0
    %922 = vmatprep.subr.mxu0 0.0
    %923 = vmatpush1.xpose.msra.mxu0 0.0
    %924 = vmatprep.subr.mxu0 0.0
    %925 = vmatpush1.xpose.msra.mxu0 %v892
    %926 = vmatprep.subr.mxu0 0.0
    %927 = vmatpush2.xpose.msra.mxu0 0.0
    %928 = vmatprep.subr.mxu0 0.0
    %929 = vmatpush2.xpose.msra.mxu0 0.0
    %930 = vmatprep.subr.mxu0 0.0
    %931 = vmatpush2.xpose.msra.mxu0 0.0
    %932 = vmatprep.subr.mxu0 0.0
    %933 = vmatpush2.xpose.msra.mxu0 0.0
    %934 = vmatprep.subr.mxu0 0.0
    %935 = vmatpush2.xpose.msra.mxu0 0.0
    %936 = vmatprep.subr.mxu0 0.0
    %937 = vmatpush2.xpose.msra.mxu0 0.0
    %938 = vmatprep.subr.mxu0 0.0
    %939 = vmatpush2.xpose.msra.mxu0 0.0
    %940 = vmatprep.subr.mxu0 0.0
    %941 = vmatpush2.xpose.msra.mxu0 0.0
    %942 = vmatprep.subr.mxu0 0.0
    %943 = vmatpush2.xpose.msra.mxu0 0.0
    %944 = vmatprep.subr.mxu0 0.0
    %945 = vmatpush2.xpose.msra.mxu0 0.0
    %946 = vmatprep.subr.mxu0 0.0
    %947 = vmatpush2.xpose.msra.mxu0 0.0
    %948 = vmatprep.subr.mxu0 0.0
    %949 = vmatpush2.xpose.msra.mxu0 0.0
    %950 = vmatprep.subr.mxu0 0.0
    %951 = vmatpush2.xpose.msra.mxu0 0.0
    %952 = vmatprep.subr.mxu0 0.0
    %953 = vmatpush2.xpose.msra.mxu0 0.0
    %954 = vmatprep.subr.mxu0 0.0
    %955 = vmatpush2.xpose.msra.mxu0 0.0
    %956 = vmatprep.subr.mxu0 0.0
    %957 = vmatpush2.xpose.msra.mxu0 0.0
    %958 = vmatprep.mubr.f32.mxu0 0.0
    %959 = vmatmul.mubr.f32.gmra.mxu0 %v890
    %v960 = vpop.f32.mrf.mxu0
    %v961 = vadd.f32 0.0, %v960
    %v962 = vpop.f32.mrf.mxu0
    %963 = vdwg.mxu0
    %v964 = vmul.f32 %v883, 0.35355338
    %v965 = vmul.f32 %v961, 0.35355338
    %v966 = vsel %vm148, %v964, -inf
    %967 = vmax.xlane.f32.xlu0 %v966
    %v968 = vpop.xlane.xlu0 %967
    %v969 = vsel %vm148, %v965, -inf
    %970 = vmax.xlane.f32.xlu0 %v969
    %v971 = vpop.xlane.xlu0 %970
    %v972 = vsub.f32 %v964, %v968
    %v973 = vsub.f32 %v965, %v971
    %v974 = vmul.f32 %v972, 1.442695
    %v975 = vpow.pop %v974
    %v976 = vmul.f32 %v973, 1.442695
    %v977 = vpow.pop %v976
    %v978 = vsel %vm148, %v975, 0.0
    %979 = vadd.xlane.f32.xlu0 %v978
    %v980 = vpop.xlane.xlu0 %979
    %v981 = vsel %vm148, %v977, 0.0
    %982 = vadd.xlane.f32.xlu0 %v981
    %v983 = vpop.xlane.xlu0 %982
    %v984 = vrcp.pop %v980
    %v985 = vmul.f32 %v975, %v984
    %v986 = vrcp.pop %v983
    %v987 = vmul.f32 %v977, %v986
    %988 = vrot.lane.b32.xlu0 %v137, 48
    %v989 = vpop.permute.xlu0 %988
    %v992 = vsel %vm148, %v985, 0
    %994 = vmatprep.subr.mxu0 0.0
    %995 = vmatpush1.msra.mxu0 0.0
    %996 = vmatprep.subr.mxu0 0.0
    %997 = vmatpush1.msra.mxu0 0.0
    %998 = vmatprep.subr.mxu0 0.0
    %999 = vmatpush1.msra.mxu0 0.0
    %1000 = vmatprep.subr.mxu0 0.0
    %1001 = vmatpush1.msra.mxu0 0.0
    %1002 = vmatprep.subr.mxu0 0.0
    %1003 = vmatpush1.msra.mxu0 0.0
    %1004 = vmatprep.subr.mxu0 0.0
    %1005 = vmatpush1.msra.mxu0 0.0
    %1006 = vmatprep.subr.mxu0 0.0
    %1007 = vmatpush1.msra.mxu0 0.0
    %1008 = vmatprep.subr.mxu0 0.0
    %1009 = vmatpush1.msra.mxu0 0.0
    %1010 = vmatprep.subr.mxu0 0.0
    %1011 = vmatpush1.msra.mxu0 0.0
    %1012 = vmatprep.subr.mxu0 0.0
    %1013 = vmatpush1.msra.mxu0 0.0
    %1014 = vmatprep.subr.mxu0 0.0
    %1015 = vmatpush1.msra.mxu0 0.0
    %1016 = vmatprep.subr.mxu0 0.0
    %1017 = vmatpush1.msra.mxu0 0.0
    %1018 = vmatprep.subr.mxu0 0.0
    %1019 = vmatpush1.msra.mxu0 0.0
    %1020 = vmatprep.subr.mxu0 0.0
    %1021 = vmatpush1.msra.mxu0 0.0
    %1022 = vmatprep.subr.mxu0 0.0
    %1023 = vmatpush1.msra.mxu0 0.0
    %1024 = vmatprep.subr.mxu0 0.0
    %1025 = vmatpush1.msra.mxu0 %v989
    %1026 = vmatprep.subr.mxu0 0.0
    %1027 = vmatpush2.msra.mxu0 0.0
    %1028 = vmatprep.subr.mxu0 0.0
    %1029 = vmatpush2.msra.mxu0 0.0
    %1030 = vmatprep.subr.mxu0 0.0
    %1031 = vmatpush2.msra.mxu0 0.0
    %1032 = vmatprep.subr.mxu0 0.0
    %1033 = vmatpush2.msra.mxu0 0.0
    %1034 = vmatprep.subr.mxu0 0.0
    %1035 = vmatpush2.msra.mxu0 0.0
    %1036 = vmatprep.subr.mxu0 0.0
    %1037 = vmatpush2.msra.mxu0 0.0
    %1038 = vmatprep.subr.mxu0 0.0
    %1039 = vmatpush2.msra.mxu0 0.0
    %1040 = vmatprep.subr.mxu0 0.0
    %1041 = vmatpush2.msra.mxu0 0.0
    %1042 = vmatprep.subr.mxu0 0.0
    %1043 = vmatpush2.msra.mxu0 0.0
    %1044 = vmatprep.subr.mxu0 0.0
    %1045 = vmatpush2.msra.mxu0 0.0
    %1046 = vmatprep.subr.mxu0 0.0
    %1047 = vmatpush2.msra.mxu0 0.0
    %1048 = vmatprep.subr.mxu0 0.0
    %1049 = vmatpush2.msra.mxu0 0.0
    %1050 = vmatprep.subr.mxu0 0.0
    %1051 = vmatpush2.msra.mxu0 0.0
    %1052 = vmatprep.subr.mxu0 0.0
    %1053 = vmatpush2.msra.mxu0 0.0
    %1054 = vmatprep.subr.mxu0 0.0
    %1055 = vmatpush2.msra.mxu0 0.0
    %1056 = vmatprep.subr.mxu0 0.0
    %1057 = vmatpush2.msra.mxu0 0.0
    %1058 = vmatprep.mubr.f32.mxu0 0.0
    %1059 = vmatmul.mubr.f32.gmra.mxu0 %v992
    %v1060 = vpop.f32.mrf.mxu0
    %v1061 = vadd.f32 0.0, %v1060
    %v1062 = vpop.f32.mrf.mxu0
    %1063 = vdwg.mxu0
    %1064 = vrot.lane.b32.xlu0 %v142, 48
    %v1065 = vpop.permute.xlu0 %1064
    %v1068 = vsel %vm148, %v987, 0
    %1070 = vmatprep.subr.mxu0 0.0
    %1071 = vmatpush1.msra.mxu0 0.0
    %1072 = vmatprep.subr.mxu0 0.0
    %1073 = vmatpush1.msra.mxu0 0.0
    %1074 = vmatprep.subr.mxu0 0.0
    %1075 = vmatpush1.msra.mxu0 0.0
    %1076 = vmatprep.subr.mxu0 0.0
    %1077 = vmatpush1.msra.mxu0 0.0
    %1078 = vmatprep.subr.mxu0 0.0
    %1079 = vmatpush1.msra.mxu0 0.0
    %1080 = vmatprep.subr.mxu0 0.0
    %1081 = vmatpush1.msra.mxu0 0.0
    %1082 = vmatprep.subr.mxu0 0.0
    %1083 = vmatpush1.msra.mxu0 0.0
    %1084 = vmatprep.subr.mxu0 0.0
    %1085 = vmatpush1.msra.mxu0 0.0
    %1086 = vmatprep.subr.mxu0 0.0
    %1087 = vmatpush1.msra.mxu0 0.0
    %1088 = vmatprep.subr.mxu0 0.0
    %1089 = vmatpush1.msra.mxu0 0.0
    %1090 = vmatprep.subr.mxu0 0.0
    %1091 = vmatpush1.msra.mxu0 0.0
    %1092 = vmatprep.subr.mxu0 0.0
    %1093 = vmatpush1.msra.mxu0 0.0
    %1094 = vmatprep.subr.mxu0 0.0
    %1095 = vmatpush1.msra.mxu0 0.0
    %1096 = vmatprep.subr.mxu0 0.0
    %1097 = vmatpush1.msra.mxu0 0.0
    %1098 = vmatprep.subr.mxu0 0.0
    %1099 = vmatpush1.msra.mxu0 0.0
    %1100 = vmatprep.subr.mxu0 0.0
    %1101 = vmatpush1.msra.mxu0 %v1065
    %1102 = vmatprep.subr.mxu0 0.0
    %1103 = vmatpush2.msra.mxu0 0.0
    %1104 = vmatprep.subr.mxu0 0.0
    %1105 = vmatpush2.msra.mxu0 0.0
    %1106 = vmatprep.subr.mxu0 0.0
    %1107 = vmatpush2.msra.mxu0 0.0
    %1108 = vmatprep.subr.mxu0 0.0
    %1109 = vmatpush2.msra.mxu0 0.0
    %1110 = vmatprep.subr.mxu0 0.0
    %1111 = vmatpush2.msra.mxu0 0.0
    %1112 = vmatprep.subr.mxu0 0.0
    %1113 = vmatpush2.msra.mxu0 0.0
    %1114 = vmatprep.subr.mxu0 0.0
    %1115 = vmatpush2.msra.mxu0 0.0
    %1116 = vmatprep.subr.mxu0 0.0
    %1117 = vmatpush2.msra.mxu0 0.0
    %1118 = vmatprep.subr.mxu0 0.0
    %1119 = vmatpush2.msra.mxu0 0.0
    %1120 = vmatprep.subr.mxu0 0.0
    %1121 = vmatpush2.msra.mxu0 0.0
    %1122 = vmatprep.subr.mxu0 0.0
    %1123 = vmatpush2.msra.mxu0 0.0
    %1124 = vmatprep.subr.mxu0 0.0
    %1125 = vmatpush2.msra.mxu0 0.0
    %1126 = vmatprep.subr.mxu0 0.0
    %1127 = vmatpush2.msra.mxu0 0.0
    %1128 = vmatprep.subr.mxu0 0.0
    %1129 = vmatpush2.msra.mxu0 0.0
    %1130 = vmatprep.subr.mxu0 0.0
    %1131 = vmatpush2.msra.mxu0 0.0
    %1132 = vmatprep.subr.mxu0 0.0
    %1133 = vmatpush2.msra.mxu0 0.0
    %1134 = vmatprep.mubr.f32.mxu0 0.0
    %1135 = vmatmul.mubr.f32.gmra.mxu0 %v1068
    %v1136 = vpop.f32.mrf.mxu0
    %v1137 = vadd.f32 0.0, %v1136
    %v1138 = vpop.f32.mrf.mxu0
    %1139 = vdwg.mxu0
    %1140 = vrot.lane.b32.xlu0 %v137, 104
    %v1141 = vpop.permute.xlu0 %1140
    %1142 = vrot.lane.b32.xlu0 %v137, 72
    %v1143 = vpop.permute.xlu0 %1142
    %v1144 = vsel %vm148, %v1141, 0
    %v1146 = vsel %vm148, %v1143, 0
    %1148 = vmatprep.subr.mxu0 0.0
    %1149 = vmatpush1.xpose.msra.mxu0 0.0
    %1150 = vmatprep.subr.mxu0 0.0
    %1151 = vmatpush1.xpose.msra.mxu0 0.0
    %1152 = vmatprep.subr.mxu0 0.0
    %1153 = vmatpush1.xpose.msra.mxu0 0.0
    %1154 = vmatprep.subr.mxu0 0.0
    %1155 = vmatpush1.xpose.msra.mxu0 0.0
    %1156 = vmatprep.subr.mxu0 0.0
    %1157 = vmatpush1.xpose.msra.mxu0 0.0
    %1158 = vmatprep.subr.mxu0 0.0
    %1159 = vmatpush1.xpose.msra.mxu0 0.0
    %1160 = vmatprep.subr.mxu0 0.0
    %1161 = vmatpush1.xpose.msra.mxu0 0.0
    %1162 = vmatprep.subr.mxu0 0.0
    %1163 = vmatpush1.xpose.msra.mxu0 0.0
    %1164 = vmatprep.subr.mxu0 0.0
    %1165 = vmatpush1.xpose.msra.mxu0 0.0
    %1166 = vmatprep.subr.mxu0 0.0
    %1167 = vmatpush1.xpose.msra.mxu0 0.0
    %1168 = vmatprep.subr.mxu0 0.0
    %1169 = vmatpush1.xpose.msra.mxu0 0.0
    %1170 = vmatprep.subr.mxu0 0.0
    %1171 = vmatpush1.xpose.msra.mxu0 0.0
    %1172 = vmatprep.subr.mxu0 0.0
    %1173 = vmatpush1.xpose.msra.mxu0 0.0
    %1174 = vmatprep.subr.mxu0 0.0
    %1175 = vmatpush1.xpose.msra.mxu0 0.0
    %1176 = vmatprep.subr.mxu0 0.0
    %1177 = vmatpush1.xpose.msra.mxu0 0.0
    %1178 = vmatprep.subr.mxu0 0.0
    %1179 = vmatpush1.xpose.msra.mxu0 %v1146
    %1180 = vmatprep.subr.mxu0 0.0
    %1181 = vmatpush2.xpose.msra.mxu0 0.0
    %1182 = vmatprep.subr.mxu0 0.0
    %1183 = vmatpush2.xpose.msra.mxu0 0.0
    %1184 = vmatprep.subr.mxu0 0.0
    %1185 = vmatpush2.xpose.msra.mxu0 0.0
    %1186 = vmatprep.subr.mxu0 0.0
    %1187 = vmatpush2.xpose.msra.mxu0 0.0
    %1188 = vmatprep.subr.mxu0 0.0
    %1189 = vmatpush2.xpose.msra.mxu0 0.0
    %1190 = vmatprep.subr.mxu0 0.0
    %1191 = vmatpush2.xpose.msra.mxu0 0.0
    %1192 = vmatprep.subr.mxu0 0.0
    %1193 = vmatpush2.xpose.msra.mxu0 0.0
    %1194 = vmatprep.subr.mxu0 0.0
    %1195 = vmatpush2.xpose.msra.mxu0 0.0
    %1196 = vmatprep.subr.mxu0 0.0
    %1197 = vmatpush2.xpose.msra.mxu0 0.0
    %1198 = vmatprep.subr.mxu0 0.0
    %1199 = vmatpush2.xpose.msra.mxu0 0.0
    %1200 = vmatprep.subr.mxu0 0.0
    %1201 = vmatpush2.xpose.msra.mxu0 0.0
    %1202 = vmatprep.subr.mxu0 0.0
    %1203 = vmatpush2.xpose.msra.mxu0 0.0
    %1204 = vmatprep.subr.mxu0 0.0
    %1205 = vmatpush2.xpose.msra.mxu0 0.0
    %1206 = vmatprep.subr.mxu0 0.0
    %1207 = vmatpush2.xpose.msra.mxu0 0.0
    %1208 = vmatprep.subr.mxu0 0.0
    %1209 = vmatpush2.xpose.msra.mxu0 0.0
    %1210 = vmatprep.subr.mxu0 0.0
    %1211 = vmatpush2.xpose.msra.mxu0 0.0
    %1212 = vmatprep.mubr.f32.mxu0 0.0
    %1213 = vmatmul.mubr.f32.gmra.mxu0 %v1144
    %v1214 = vpop.f32.mrf.mxu0
    %v1215 = vadd.f32 0.0, %v1214
    %v1216 = vpop.f32.mrf.mxu0
    %1217 = vdwg.mxu0
    %1218 = vrot.lane.b32.xlu0 %v142, 104
    %v1219 = vpop.permute.xlu0 %1218
    %1220 = vrot.lane.b32.xlu0 %v142, 72
    %v1221 = vpop.permute.xlu0 %1220
    %v1222 = vsel %vm148, %v1219, 0
    %v1224 = vsel %vm148, %v1221, 0
    %1226 = vmatprep.subr.mxu0 0.0
    %1227 = vmatpush1.xpose.msra.mxu0 0.0
    %1228 = vmatprep.subr.mxu0 0.0
    %1229 = vmatpush1.xpose.msra.mxu0 0.0
    %1230 = vmatprep.subr.mxu0 0.0
    %1231 = vmatpush1.xpose.msra.mxu0 0.0
    %1232 = vmatprep.subr.mxu0 0.0
    %1233 = vmatpush1.xpose.msra.mxu0 0.0
    %1234 = vmatprep.subr.mxu0 0.0
    %1235 = vmatpush1.xpose.msra.mxu0 0.0
    %1236 = vmatprep.subr.mxu0 0.0
    %1237 = vmatpush1.xpose.msra.mxu0 0.0
    %1238 = vmatprep.subr.mxu0 0.0
    %1239 = vmatpush1.xpose.msra.mxu0 0.0
    %1240 = vmatprep.subr.mxu0 0.0
    %1241 = vmatpush1.xpose.msra.mxu0 0.0
    %1242 = vmatprep.subr.mxu0 0.0
    %1243 = vmatpush1.xpose.msra.mxu0 0.0
    %1244 = vmatprep.subr.mxu0 0.0
    %1245 = vmatpush1.xpose.msra.mxu0 0.0
    %1246 = vmatprep.subr.mxu0 0.0
    %1247 = vmatpush1.xpose.msra.mxu0 0.0
    %1248 = vmatprep.subr.mxu0 0.0
    %1249 = vmatpush1.xpose.msra.mxu0 0.0
    %1250 = vmatprep.subr.mxu0 0.0
    %1251 = vmatpush1.xpose.msra.mxu0 0.0
    %1252 = vmatprep.subr.mxu0 0.0
    %1253 = vmatpush1.xpose.msra.mxu0 0.0
    %1254 = vmatprep.subr.mxu0 0.0
    %1255 = vmatpush1.xpose.msra.mxu0 0.0
    %1256 = vmatprep.subr.mxu0 0.0
    %1257 = vmatpush1.xpose.msra.mxu0 %v1224
    %1258 = vmatprep.subr.mxu0 0.0
    %1259 = vmatpush2.xpose.msra.mxu0 0.0
    %1260 = vmatprep.subr.mxu0 0.0
    %1261 = vmatpush2.xpose.msra.mxu0 0.0
    %1262 = vmatprep.subr.mxu0 0.0
    %1263 = vmatpush2.xpose.msra.mxu0 0.0
    %1264 = vmatprep.subr.mxu0 0.0
    %1265 = vmatpush2.xpose.msra.mxu0 0.0
    %1266 = vmatprep.subr.mxu0 0.0
    %1267 = vmatpush2.xpose.msra.mxu0 0.0
    %1268 = vmatprep.subr.mxu0 0.0
    %1269 = vmatpush2.xpose.msra.mxu0 0.0
    %1270 = vmatprep.subr.mxu0 0.0
    %1271 = vmatpush2.xpose.msra.mxu0 0.0
    %1272 = vmatprep.subr.mxu0 0.0
    %1273 = vmatpush2.xpose.msra.mxu0 0.0
    %1274 = vmatprep.subr.mxu0 0.0
    %1275 = vmatpush2.xpose.msra.mxu0 0.0
    %1276 = vmatprep.subr.mxu0 0.0
    %1277 = vmatpush2.xpose.msra.mxu0 0.0
    %1278 = vmatprep.subr.mxu0 0.0
    %1279 = vmatpush2.xpose.msra.mxu0 0.0
    %1280 = vmatprep.subr.mxu0 0.0
    %1281 = vmatpush2.xpose.msra.mxu0 0.0
    %1282 = vmatprep.subr.mxu0 0.0
    %1283 = vmatpush2.xpose.msra.mxu0 0.0
    %1284 = vmatprep.subr.mxu0 0.0
    %1285 = vmatpush2.xpose.msra.mxu0 0.0
    %1286 = vmatprep.subr.mxu0 0.0
    %1287 = vmatpush2.xpose.msra.mxu0 0.0
    %1288 = vmatprep.subr.mxu0 0.0
    %1289 = vmatpush2.xpose.msra.mxu0 0.0
    %1290 = vmatprep.mubr.f32.mxu0 0.0
    %1291 = vmatmul.mubr.f32.gmra.mxu0 %v1222
    %v1292 = vpop.f32.mrf.mxu0
    %v1293 = vadd.f32 0.0, %v1292
    %v1294 = vpop.f32.mrf.mxu0
    %1295 = vdwg.mxu0
    %v1296 = vmul.f32 %v1215, 0.35355338
    %v1297 = vmul.f32 %v1293, 0.35355338
    %v1298 = vsel %vm148, %v1296, -inf
    %1299 = vmax.xlane.f32.xlu0 %v1298
    %v1300 = vpop.xlane.xlu0 %1299
    %v1301 = vsel %vm148, %v1297, -inf
    %1302 = vmax.xlane.f32.xlu0 %v1301
    %v1303 = vpop.xlane.xlu0 %1302
    %v1304 = vsub.f32 %v1296, %v1300
    %v1305 = vsub.f32 %v1297, %v1303
    %v1306 = vmul.f32 %v1304, 1.442695
    %v1307 = vpow.pop %v1306
    %v1308 = vmul.f32 %v1305, 1.442695
    %v1309 = vpow.pop %v1308
    %v1310 = vsel %vm148, %v1307, 0.0
    %1311 = vadd.xlane.f32.xlu0 %v1310
    %v1312 = vpop.xlane.xlu0 %1311
    %v1313 = vsel %vm148, %v1309, 0.0
    %1314 = vadd.xlane.f32.xlu0 %v1313
    %v1315 = vpop.xlane.xlu0 %1314
    %v1316 = vrcp.pop %v1312
    %v1317 = vmul.f32 %v1307, %v1316
    %v1318 = vrcp.pop %v1315
    %v1319 = vmul.f32 %v1309, %v1318
    %1320 = vrot.lane.b32.xlu0 %v137, 40
    %v1321 = vpop.permute.xlu0 %1320
    %v1324 = vsel %vm148, %v1317, 0
    %1326 = vmatprep.subr.mxu0 0.0
    %1327 = vmatpush1.msra.mxu0 0.0
    %1328 = vmatprep.subr.mxu0 0.0
    %1329 = vmatpush1.msra.mxu0 0.0
    %1330 = vmatprep.subr.mxu0 0.0
    %1331 = vmatpush1.msra.mxu0 0.0
    %1332 = vmatprep.subr.mxu0 0.0
    %1333 = vmatpush1.msra.mxu0 0.0
    %1334 = vmatprep.subr.mxu0 0.0
    %1335 = vmatpush1.msra.mxu0 0.0
    %1336 = vmatprep.subr.mxu0 0.0
    %1337 = vmatpush1.msra.mxu0 0.0
    %1338 = vmatprep.subr.mxu0 0.0
    %1339 = vmatpush1.msra.mxu0 0.0
    %1340 = vmatprep.subr.mxu0 0.0
    %1341 = vmatpush1.msra.mxu0 0.0
    %1342 = vmatprep.subr.mxu0 0.0
    %1343 = vmatpush1.msra.mxu0 0.0
    %1344 = vmatprep.subr.mxu0 0.0
    %1345 = vmatpush1.msra.mxu0 0.0
    %1346 = vmatprep.subr.mxu0 0.0
    %1347 = vmatpush1.msra.mxu0 0.0
    %1348 = vmatprep.subr.mxu0 0.0
    %1349 = vmatpush1.msra.mxu0 0.0
    %1350 = vmatprep.subr.mxu0 0.0
    %1351 = vmatpush1.msra.mxu0 0.0
    %1352 = vmatprep.subr.mxu0 0.0
    %1353 = vmatpush1.msra.mxu0 0.0
    %1354 = vmatprep.subr.mxu0 0.0
    %1355 = vmatpush1.msra.mxu0 0.0
    %1356 = vmatprep.subr.mxu0 0.0
    %1357 = vmatpush1.msra.mxu0 %v1321
    %1358 = vmatprep.subr.mxu0 0.0
    %1359 = vmatpush2.msra.mxu0 0.0
    %1360 = vmatprep.subr.mxu0 0.0
    %1361 = vmatpush2.msra.mxu0 0.0
    %1362 = vmatprep.subr.mxu0 0.0
    %1363 = vmatpush2.msra.mxu0 0.0
    %1364 = vmatprep.subr.mxu0 0.0
    %1365 = vmatpush2.msra.mxu0 0.0
    %1366 = vmatprep.subr.mxu0 0.0
    %1367 = vmatpush2.msra.mxu0 0.0
    %1368 = vmatprep.subr.mxu0 0.0
    %1369 = vmatpush2.msra.mxu0 0.0
    %1370 = vmatprep.subr.mxu0 0.0
    %1371 = vmatpush2.msra.mxu0 0.0
    %1372 = vmatprep.subr.mxu0 0.0
    %1373 = vmatpush2.msra.mxu0 0.0
    %1374 = vmatprep.subr.mxu0 0.0
    %1375 = vmatpush2.msra.mxu0 0.0
    %1376 = vmatprep.subr.mxu0 0.0
    %1377 = vmatpush2.msra.mxu0 0.0
    %1378 = vmatprep.subr.mxu0 0.0
    %1379 = vmatpush2.msra.mxu0 0.0
    %1380 = vmatprep.subr.mxu0 0.0
    %1381 = vmatpush2.msra.mxu0 0.0
    %1382 = vmatprep.subr.mxu0 0.0
    %1383 = vmatpush2.msra.mxu0 0.0
    %1384 = vmatprep.subr.mxu0 0.0
    %1385 = vmatpush2.msra.mxu0 0.0
    %1386 = vmatprep.subr.mxu0 0.0
    %1387 = vmatpush2.msra.mxu0 0.0
    %1388 = vmatprep.subr.mxu0 0.0
    %1389 = vmatpush2.msra.mxu0 0.0
    %1390 = vmatprep.mubr.f32.mxu0 0.0
    %1391 = vmatmul.mubr.f32.gmra.mxu0 %v1324
    %v1392 = vpop.f32.mrf.mxu0
    %v1393 = vadd.f32 0.0, %v1392
    %v1394 = vpop.f32.mrf.mxu0
    %1395 = vdwg.mxu0
    %1396 = vrot.lane.b32.xlu0 %v142, 40
    %v1397 = vpop.permute.xlu0 %1396
    %v1400 = vsel %vm148, %v1319, 0
    %1402 = vmatprep.subr.mxu0 0.0
    %1403 = vmatpush1.msra.mxu0 0.0
    %1404 = vmatprep.subr.mxu0 0.0
    %1405 = vmatpush1.msra.mxu0 0.0
    %1406 = vmatprep.subr.mxu0 0.0
    %1407 = vmatpush1.msra.mxu0 0.0
    %1408 = vmatprep.subr.mxu0 0.0
    %1409 = vmatpush1.msra.mxu0 0.0
    %1410 = vmatprep.subr.mxu0 0.0
    %1411 = vmatpush1.msra.mxu0 0.0
    %1412 = vmatprep.subr.mxu0 0.0
    %1413 = vmatpush1.msra.mxu0 0.0
    %1414 = vmatprep.subr.mxu0 0.0
    %1415 = vmatpush1.msra.mxu0 0.0
    %1416 = vmatprep.subr.mxu0 0.0
    %1417 = vmatpush1.msra.mxu0 0.0
    %1418 = vmatprep.subr.mxu0 0.0
    %1419 = vmatpush1.msra.mxu0 0.0
    %1420 = vmatprep.subr.mxu0 0.0
    %1421 = vmatpush1.msra.mxu0 0.0
    %1422 = vmatprep.subr.mxu0 0.0
    %1423 = vmatpush1.msra.mxu0 0.0
    %1424 = vmatprep.subr.mxu0 0.0
    %1425 = vmatpush1.msra.mxu0 0.0
    %1426 = vmatprep.subr.mxu0 0.0
    %1427 = vmatpush1.msra.mxu0 0.0
    %1428 = vmatprep.subr.mxu0 0.0
    %1429 = vmatpush1.msra.mxu0 0.0
    %1430 = vmatprep.subr.mxu0 0.0
    %1431 = vmatpush1.msra.mxu0 0.0
    %1432 = vmatprep.subr.mxu0 0.0
    %1433 = vmatpush1.msra.mxu0 %v1397
    %1434 = vmatprep.subr.mxu0 0.0
    %1435 = vmatpush2.msra.mxu0 0.0
    %1436 = vmatprep.subr.mxu0 0.0
    %1437 = vmatpush2.msra.mxu0 0.0
    %1438 = vmatprep.subr.mxu0 0.0
    %1439 = vmatpush2.msra.mxu0 0.0
    %1440 = vmatprep.subr.mxu0 0.0
    %1441 = vmatpush2.msra.mxu0 0.0
    %1442 = vmatprep.subr.mxu0 0.0
    %1443 = vmatpush2.msra.mxu0 0.0
    %1444 = vmatprep.subr.mxu0 0.0
    %1445 = vmatpush2.msra.mxu0 0.0
    %1446 = vmatprep.subr.mxu0 0.0
    %1447 = vmatpush2.msra.mxu0 0.0
    %1448 = vmatprep.subr.mxu0 0.0
    %1449 = vmatpush2.msra.mxu0 0.0
    %1450 = vmatprep.subr.mxu0 0.0
    %1451 = vmatpush2.msra.mxu0 0.0
    %1452 = vmatprep.subr.mxu0 0.0
    %1453 = vmatpush2.msra.mxu0 0.0
    %1454 = vmatprep.subr.mxu0 0.0
    %1455 = vmatpush2.msra.mxu0 0.0
    %1456 = vmatprep.subr.mxu0 0.0
    %1457 = vmatpush2.msra.mxu0 0.0
    %1458 = vmatprep.subr.mxu0 0.0
    %1459 = vmatpush2.msra.mxu0 0.0
    %1460 = vmatprep.subr.mxu0 0.0
    %1461 = vmatpush2.msra.mxu0 0.0
    %1462 = vmatprep.subr.mxu0 0.0
    %1463 = vmatpush2.msra.mxu0 0.0
    %1464 = vmatprep.subr.mxu0 0.0
    %1465 = vmatpush2.msra.mxu0 0.0
    %1466 = vmatprep.mubr.f32.mxu0 0.0
    %1467 = vmatmul.mubr.f32.gmra.mxu0 %v1400
    %v1468 = vpop.f32.mrf.mxu0
    %v1469 = vadd.f32 0.0, %v1468
    %v1470 = vpop.f32.mrf.mxu0
    %1471 = vdwg.mxu0
    %1474 = vrot.lane.b32.xlu0 %v729, 8
    %v1475 = vpop.permute.xlu0 %1474
    %1476 = vrot.lane.b32.xlu0 %v805, 8
    %v1477 = vpop.permute.xlu0 %1476
    %1482 = vrot.lane.b32.xlu0 %v1061, 16
    %v1483 = vpop.permute.xlu0 %1482
    %1484 = vrot.lane.b32.xlu0 %v1137, 16
    %v1485 = vpop.permute.xlu0 %1484
    %1490 = vrot.lane.b32.xlu0 %v1393, 24
    %v1491 = vpop.permute.xlu0 %1490
    %1492 = vrot.lane.b32.xlu0 %v1469, 24
    %v1493 = vpop.permute.xlu0 %1492
    %v1496 = vsel %vm148, %v397, %v1475
    %v1497 = vsel %vm148, %v473, %v1477
    %vm1498 = vcmask 130048
    %v1499 = vsel %vm1498, %v1496, %v1483
    %v1500 = vsel %vm1498, %v1497, %v1485
    %vm1501 = vcmask 195584
    %v1502 = vsel %vm1501, %v1499, %v1491
    %v1503 = vsel %vm1501, %v1500, %v1493
    %v1504 = vld [vmem:[%s2] sm:$0xff]
    %v1505 = vld [vmem:[%s2 + $0x8] sm:$0xff]
    %v1506 = vld [vmem:[%s2 + $0x10] sm:$0xff]
    %v1507 = vld [vmem:[%s2 + $0x18] sm:$0xff]
    %v1508 = vlaneseq
    %v1509 = vshrl.u32 %v1508, 7
    %v1510 = vsub.s32 1, %v1509
    %v1511 = vrot.slane %v54, %v1510
    %v1513 = vsel %vm63, %v1502, 0
    %v1516 = vsel %vm63, %v1503, 0
    %1518 = vmatprep.subr.mxu0 0.0
    %1519 = vmatpush1.msra.mxu0 0.0
    %1520 = vmatprep.subr.mxu0 0.0
    %1521 = vmatpush1.msra.mxu0 0.0
    %1522 = vmatprep.subr.mxu0 0.0
    %1523 = vmatpush1.msra.mxu0 0.0
    %1524 = vmatprep.subr.mxu0 0.0
    %1525 = vmatpush1.msra.mxu0 0.0
    %1526 = vmatprep.subr.mxu0 0.0
    %1527 = vmatpush1.msra.mxu0 0.0
    %1528 = vmatprep.subr.mxu0 0.0
    %1529 = vmatpush1.msra.mxu0 0.0
    %1530 = vmatprep.subr.mxu0 0.0
    %1531 = vmatpush1.msra.mxu0 0.0
    %1532 = vmatprep.subr.mxu0 0.0
    %1533 = vmatpush1.msra.mxu0 0.0
    %1534 = vmatprep.subr.mxu0 0.0
    %1535 = vmatpush1.msra.mxu0 0.0
    %1536 = vmatprep.subr.mxu0 0.0
    %1537 = vmatpush1.msra.mxu0 0.0
    %1538 = vmatprep.subr.mxu0 0.0
    %1539 = vmatpush1.msra.mxu0 0.0
    %1540 = vmatprep.subr.mxu0 0.0
    %1541 = vmatpush1.msra.mxu0 0.0
    %1542 = vmatprep.subr.mxu0 0.0
    %1543 = vmatpush1.msra.mxu0 %v1507
    %1544 = vmatprep.subr.mxu0 0.0
    %1545 = vmatpush1.msra.mxu0 %v1506
    %1546 = vmatprep.subr.mxu0 0.0
    %1547 = vmatpush1.msra.mxu0 %v1505
    %1548 = vmatprep.subr.mxu0 0.0
    %1549 = vmatpush1.msra.mxu0 %v1504
    %1550 = vmatprep.subr.mxu0 0.0
    %1551 = vmatpush2.msra.mxu0 0.0
    %1552 = vmatprep.subr.mxu0 0.0
    %1553 = vmatpush2.msra.mxu0 0.0
    %1554 = vmatprep.subr.mxu0 0.0
    %1555 = vmatpush2.msra.mxu0 0.0
    %1556 = vmatprep.subr.mxu0 0.0
    %1557 = vmatpush2.msra.mxu0 0.0
    %1558 = vmatprep.subr.mxu0 0.0
    %1559 = vmatpush2.msra.mxu0 0.0
    %1560 = vmatprep.subr.mxu0 0.0
    %1561 = vmatpush2.msra.mxu0 0.0
    %1562 = vmatprep.subr.mxu0 0.0
    %1563 = vmatpush2.msra.mxu0 0.0
    %1564 = vmatprep.subr.mxu0 0.0
    %1565 = vmatpush2.msra.mxu0 0.0
    %1566 = vmatprep.subr.mxu0 0.0
    %1567 = vmatpush2.msra.mxu0 0.0
    %1568 = vmatprep.subr.mxu0 0.0
    %1569 = vmatpush2.msra.mxu0 0.0
    %1570 = vmatprep.subr.mxu0 0.0
    %1571 = vmatpush2.msra.mxu0 0.0
    %1572 = vmatprep.subr.mxu0 0.0
    %1573 = vmatpush2.msra.mxu0 0.0
    %1574 = vmatprep.subr.mxu0 0.0
    %1575 = vmatpush2.msra.mxu0 0.0
    %1576 = vmatprep.subr.mxu0 0.0
    %1577 = vmatpush2.msra.mxu0 0.0
    %1578 = vmatprep.subr.mxu0 0.0
    %1579 = vmatpush2.msra.mxu0 0.0
    %1580 = vmatprep.subr.mxu0 0.0
    %1581 = vmatpush2.msra.mxu0 0.0
    %1582 = vmatprep.mubr.f32.mxu0 0.0
    %1583 = vmatmul.mubr.f32.gmra.mxu0 %v1513
    %v1584 = vpop.f32.mrf.mxu0
    %v1585 = vadd.f32 %v1511, %v1584
    %v1586 = vpop.f32.mrf.mxu0
    %1587 = vmatprep.mubr.f32.mxu0 0.0
    %1588 = vmatmul.mubr.f32.gmra.mxu0 %v1516
    %v1589 = vpop.f32.mrf.mxu0
    %v1590 = vadd.f32 %v1511, %v1589
    %v1591 = vpop.f32.mrf.mxu0
    %1592 = vdwg.mxu0
    %v1593 = vadd.f32 %v52, %v1585
    %v1594 = vadd.f32 %v53, %v1590
    %v1595 = vsel %vm63, %v1593, 0.0
    %1596 = vadd.xlane.f32.xlu0 %v1595
    %v1597 = vpop.xlane.xlu0 %1596
    %v1598 = vsel %vm63, %v1594, 0.0
    %1599 = vadd.xlane.f32.xlu0 %v1598
    %v1600 = vpop.xlane.xlu0 %1599
    %v1601 = vrcp.pop 32.0
    %v1602 = vmul.f32 %v1597, %v1601
    %v1603 = vmul.f32 %v1600, %v1601
    %v1604 = vsub.f32 %v1593, %v1602
    %v1605 = vsub.f32 %v1594, %v1603
    %v1606 = vmul.f32 %v1604, %v1604
    %v1607 = vmul.f32 %v1605, %v1605
    %v1608 = vsel %vm63, %v1606, 0.0
    %1609 = vadd.xlane.f32.xlu0 %v1608
    %v1610 = vpop.xlane.xlu0 %1609
    %v1611 = vsel %vm63, %v1607, 0.0
    %1612 = vadd.xlane.f32.xlu0 %v1611
    %v1613 = vpop.xlane.xlu0 %1612
    %v1614 = vmul.f32 %v1610, %v1601
    %v1615 = vmul.f32 %v1613, %v1601
    %v1616 = vadd.f32 %v1614, 1e-05
    %v1617 = vadd.f32 %v1615, 1e-05
    %v1618 = vrsqrt.pop %v1616
    %v1619 = vrsqrt.pop %v1617
    %v1620 = vmul.f32 %v1604, %v1618
    %v1621 = vmul.f32 %v1605, %v1619
    %v1622 = vlaneseq
    %v1623 = vshrl.u32 %v1622, 7
    %v1624 = vsub.s32 4, %v1623
    %v1625 = vrot.slane %v54, %v1624
    %v1626 = vmul.f32 %v1620, %v1625
    %v1627 = vmul.f32 %v1621, %v1625
    %v1628 = vlaneseq
    %v1629 = vshrl.u32 %v1628, 7
    %v1630 = vsub.s32 5, %v1629
    %v1631 = vrot.slane %v54, %v1630
    %v1632 = vadd.f32 %v1626, %v1631
    %v1633 = vadd.f32 %v1627, %v1631
    %v1634 = vld [vmem:[%s3] sm:$0xff]
    %v1635 = vld [vmem:[%s3 + $0x8] sm:$0xff]
    %v1636 = vld [vmem:[%s3 + $0x10] sm:$0xff]
    %v1637 = vld [vmem:[%s3 + $0x18] sm:$0xff]
    %v1638 = vlaneseq
    %v1639 = vshrl.u32 %v1638, 7
    %v1640 = vsub.s32 2, %v1639
    %v1641 = vrot.slane %v54, %v1640
    %v1643 = vsel %vm63, %v1632, 0
    %v1646 = vsel %vm63, %v1633, 0
    %1648 = vmatprep.subr.mxu0 0.0
    %1649 = vmatpush1.msra.mxu0 0.0
    %1650 = vmatprep.subr.mxu0 0.0
    %1651 = vmatpush1.msra.mxu0 0.0
    %1652 = vmatprep.subr.mxu0 0.0
    %1653 = vmatpush1.msra.mxu0 0.0
    %1654 = vmatprep.subr.mxu0 0.0
    %1655 = vmatpush1.msra.mxu0 0.0
    %1656 = vmatprep.subr.mxu0 0.0
    %1657 = vmatpush1.msra.mxu0 0.0
    %1658 = vmatprep.subr.mxu0 0.0
    %1659 = vmatpush1.msra.mxu0 0.0
    %1660 = vmatprep.subr.mxu0 0.0
    %1661 = vmatpush1.msra.mxu0 0.0
    %1662 = vmatprep.subr.mxu0 0.0
    %1663 = vmatpush1.msra.mxu0 0.0
    %1664 = vmatprep.subr.mxu0 0.0
    %1665 = vmatpush1.msra.mxu0 0.0
    %1666 = vmatprep.subr.mxu0 0.0
    %1667 = vmatpush1.msra.mxu0 0.0
    %1668 = vmatprep.subr.mxu0 0.0
    %1669 = vmatpush1.msra.mxu0 0.0
    %1670 = vmatprep.subr.mxu0 0.0
    %1671 = vmatpush1.msra.mxu0 0.0
    %1672 = vmatprep.subr.mxu0 0.0
    %1673 = vmatpush1.msra.mxu0 %v1637
    %1674 = vmatprep.subr.mxu0 0.0
    %1675 = vmatpush1.msra.mxu0 %v1636
    %1676 = vmatprep.subr.mxu0 0.0
    %1677 = vmatpush1.msra.mxu0 %v1635
    %1678 = vmatprep.subr.mxu0 0.0
    %1679 = vmatpush1.msra.mxu0 %v1634
    %1680 = vmatprep.subr.mxu0 0.0
    %1681 = vmatpush2.msra.mxu0 0.0
    %1682 = vmatprep.subr.mxu0 0.0
    %1683 = vmatpush2.msra.mxu0 0.0
    %1684 = vmatprep.subr.mxu0 0.0
    %1685 = vmatpush2.msra.mxu0 0.0
    %1686 = vmatprep.subr.mxu0 0.0
    %1687 = vmatpush2.msra.mxu0 0.0
    %1688 = vmatprep.subr.mxu0 0.0
    %1689 = vmatpush2.msra.mxu0 0.0
    %1690 = vmatprep.subr.mxu0 0.0
    %1691 = vmatpush2.msra.mxu0 0.0
    %1692 = vmatprep.subr.mxu0 0.0
    %1693 = vmatpush2.msra.mxu0 0.0
    %1694 = vmatprep.subr.mxu0 0.0
    %1695 = vmatpush2.msra.mxu0 0.0
    %1696 = vmatprep.subr.mxu0 0.0
    %1697 = vmatpush2.msra.mxu0 0.0
    %1698 = vmatprep.subr.mxu0 0.0
    %1699 = vmatpush2.msra.mxu0 0.0
    %1700 = vmatprep.subr.mxu0 0.0
    %1701 = vmatpush2.msra.mxu0 0.0
    %1702 = vmatprep.subr.mxu0 0.0
    %1703 = vmatpush2.msra.mxu0 0.0
    %1704 = vmatprep.subr.mxu0 0.0
    %1705 = vmatpush2.msra.mxu0 0.0
    %1706 = vmatprep.subr.mxu0 0.0
    %1707 = vmatpush2.msra.mxu0 0.0
    %1708 = vmatprep.subr.mxu0 0.0
    %1709 = vmatpush2.msra.mxu0 0.0
    %1710 = vmatprep.subr.mxu0 0.0
    %1711 = vmatpush2.msra.mxu0 0.0
    %1712 = vmatprep.mubr.f32.mxu0 0.0
    %1713 = vmatmul.mubr.f32.gmra.mxu0 %v1643
    %v1714 = vpop.f32.mrf.mxu0
    %v1715 = vadd.f32 %v1641, %v1714
    %v1716 = vpop.f32.mrf.mxu0
    %1717 = vmatprep.mubr.f32.mxu0 0.0
    %1718 = vmatmul.mubr.f32.gmra.mxu0 %v1646
    %v1719 = vpop.f32.mrf.mxu0
    %v1720 = vadd.f32 %v1641, %v1719
    %v1721 = vpop.f32.mrf.mxu0
    %1722 = vdwg.mxu0
    %v1723 = vmax.f32 %v1715, 0.0
    %v1724 = vmax.f32 %v1720, 0.0
    %v1725 = vld [vmem:[%s4] sm:$0xff]
    %v1726 = vld [vmem:[%s4 + $0x8] sm:$0xff]
    %v1727 = vld [vmem:[%s4 + $0x10] sm:$0xff]
    %v1728 = vld [vmem:[%s4 + $0x18] sm:$0xff]
    %v1729 = vld [vmem:[%s4 + $0x20] sm:$0xff]
    %v1730 = vld [vmem:[%s4 + $0x28] sm:$0xff]
    %v1731 = vld [vmem:[%s4 + $0x30] sm:$0xff]
    %v1732 = vld [vmem:[%s4 + $0x38] sm:$0xff]
    %v1733 = vlaneseq
    %v1734 = vshrl.u32 %v1733, 7
    %v1735 = vsub.s32 3, %v1734
    %v1736 = vrot.slane %v54, %v1735
    %vm1737 = vcmask 523264
    %v1739 = vsel %vm1737, %v1723, 0
    %v1742 = vsel %vm1737, %v1724, 0
    %1744 = vmatprep.subr.mxu0 0.0
    %1745 = vmatpush1.msra.mxu0 0.0
    %1746 = vmatprep.subr.mxu0 0.0
    %1747 = vmatpush1.msra.mxu0 0.0
    %1748 = vmatprep.subr.mxu0 0.0
    %1749 = vmatpush1.msra.mxu0 0.0
    %1750 = vmatprep.subr.mxu0 0.0
    %1751 = vmatpush1.msra.mxu0 0.0
    %1752 = vmatprep.subr.mxu0 0.0
    %1753 = vmatpush1.msra.mxu0 0.0
    %1754 = vmatprep.subr.mxu0 0.0
    %1755 = vmatpush1.msra.mxu0 0.0
    %1756 = vmatprep.subr.mxu0 0.0
    %1757 = vmatpush1.msra.mxu0 0.0
    %1758 = vmatprep.subr.mxu0 0.0
    %1759 = vmatpush1.msra.mxu0 0.0
    %1760 = vmatprep.subr.mxu0 0.0
    %1761 = vmatpush1.msra.mxu0 %v1732
    %1762 = vmatprep.subr.mxu0 0.0
    %1763 = vmatpush1.msra.mxu0 %v1731
    %1764 = vmatprep.subr.mxu0 0.0
    %1765 = vmatpush1.msra.mxu0 %v1730
    %1766 = vmatprep.subr.mxu0 0.0
    %1767 = vmatpush1.msra.mxu0 %v1729
    %1768 = vmatprep.subr.mxu0 0.0
    %1769 = vmatpush1.msra.mxu0 %v1728
    %1770 = vmatprep.subr.mxu0 0.0
    %1771 = vmatpush1.msra.mxu0 %v1727
    %1772 = vmatprep.subr.mxu0 0.0
    %1773 = vmatpush1.msra.mxu0 %v1726
    %1774 = vmatprep.subr.mxu0 0.0
    %1775 = vmatpush1.msra.mxu0 %v1725
    %1776 = vmatprep.subr.mxu0 0.0
    %1777 = vmatpush2.msra.mxu0 0.0
    %1778 = vmatprep.subr.mxu0 0.0
    %1779 = vmatpush2.msra.mxu0 0.0
    %1780 = vmatprep.subr.mxu0 0.0
    %1781 = vmatpush2.msra.mxu0 0.0
    %1782 = vmatprep.subr.mxu0 0.0
    %1783 = vmatpush2.msra.mxu0 0.0
    %1784 = vmatprep.subr.mxu0 0.0
    %1785 = vmatpush2.msra.mxu0 0.0
    %1786 = vmatprep.subr.mxu0 0.0
    %1787 = vmatpush2.msra.mxu0 0.0
    %1788 = vmatprep.subr.mxu0 0.0
    %1789 = vmatpush2.msra.mxu0 0.0
    %1790 = vmatprep.subr.mxu0 0.0
    %1791 = vmatpush2.msra.mxu0 0.0
    %1792 = vmatprep.subr.mxu0 0.0
    %1793 = vmatpush2.msra.mxu0 0.0
    %1794 = vmatprep.subr.mxu0 0.0
    %1795 = vmatpush2.msra.mxu0 0.0
    %1796 = vmatprep.subr.mxu0 0.0
    %1797 = vmatpush2.msra.mxu0 0.0
    %1798 = vmatprep.subr.mxu0 0.0
    %1799 = vmatpush2.msra.mxu0 0.0
    %1800 = vmatprep.subr.mxu0 0.0
    %1801 = vmatpush2.msra.mxu0 0.0
    %1802 = vmatprep.subr.mxu0 0.0
    %1803 = vmatpush2.msra.mxu0 0.0
    %1804 = vmatprep.subr.mxu0 0.0
    %1805 = vmatpush2.msra.mxu0 0.0
    %1806 = vmatprep.subr.mxu0 0.0
    %1807 = vmatpush2.msra.mxu0 0.0
    %1808 = vmatprep.mubr.f32.mxu0 0.0
    %1809 = vmatmul.mubr.f32.gmra.mxu0 %v1739
    %v1810 = vpop.f32.mrf.mxu0
    %v1811 = vadd.f32 %v1736, %v1810
    %v1812 = vpop.f32.mrf.mxu0
    %1813 = vmatprep.mubr.f32.mxu0 0.0
    %1814 = vmatmul.mubr.f32.gmra.mxu0 %v1742
    %v1815 = vpop.f32.mrf.mxu0
    %v1816 = vadd.f32 %v1736, %v1815
    %v1817 = vpop.f32.mrf.mxu0
    %1818 = vdwg.mxu0
    %v1819 = vadd.f32 %v1632, %v1811
    %v1820 = vadd.f32 %v1633, %v1816
    %v1821 = vsel %vm63, %v1819, 0.0
    %1822 = vadd.xlane.f32.xlu0 %v1821
    %v1823 = vpop.xlane.xlu0 %1822
    %v1824 = vsel %vm63, %v1820, 0.0
    %1825 = vadd.xlane.f32.xlu0 %v1824
    %v1826 = vpop.xlane.xlu0 %1825
    %v1827 = vmul.f32 %v1823, %v1601
    %v1828 = vmul.f32 %v1826, %v1601
    %v1829 = vsub.f32 %v1819, %v1827
    %v1830 = vsub.f32 %v1820, %v1828
    %v1831 = vmul.f32 %v1829, %v1829
    %v1832 = vmul.f32 %v1830, %v1830
    %v1833 = vsel %vm63, %v1831, 0.0
    %1834 = vadd.xlane.f32.xlu0 %v1833
    %v1835 = vpop.xlane.xlu0 %1834
    %v1836 = vsel %vm63, %v1832, 0.0
    %1837 = vadd.xlane.f32.xlu0 %v1836
    %v1838 = vpop.xlane.xlu0 %1837
    %v1839 = vmul.f32 %v1835, %v1601
    %v1840 = vmul.f32 %v1838, %v1601
    %v1841 = vadd.f32 %v1839, 1e-05
    %v1842 = vadd.f32 %v1840, 1e-05
    %v1843 = vrsqrt.pop %v1841
    %v1844 = vrsqrt.pop %v1842
    %v1845 = vmul.f32 %v1829, %v1843
    %v1846 = vmul.f32 %v1830, %v1844
    %v1847 = vlaneseq
    %v1848 = vshrl.u32 %v1847, 7
    %v1849 = vsub.s32 6, %v1848
    %v1850 = vrot.slane %v54, %v1849
    %v1851 = vmul.f32 %v1845, %v1850
    %v1852 = vmul.f32 %v1846, %v1850
    %v1853 = vlaneseq
    %v1854 = vshrl.u32 %v1853, 7
    %v1855 = vsub.s32 7, %v1854
    %v1856 = vrot.slane %v54, %v1855
    %v1857 = vadd.f32 %v1851, %v1856
    %v1858 = vadd.f32 %v1852, %v1856
    %s1859 = scalar_lea.vmem [#allocation5], 8
    %v1860 = vld [vmem:[%s1859] sm:$0xff]
    %s1861 = scalar_lea.vmem %s1, 32
    %v1862 = vld [vmem:[%s1861] sm:$0xff]
    %v1863 = vld [vmem:[%s1861 + $0x8] sm:$0xff]
    %v1864 = vld [vmem:[%s1861 + $0x10] sm:$0xff]
    %v1865 = vld [vmem:[%s1861 + $0x18] sm:$0xff]
    %v1866 = vlaneseq
    %v1867 = vshrl.u32 %v1866, 7
    %v1868 = vsub.s32 0, %v1867
    %v1869 = vrot.slane %v1860, %v1868
    %v1871 = vsel %vm63, %v1857, 0
    %v1874 = vsel %vm63, %v1858, 0
    %1876 = vmatprep.subr.mxu0 0.0
    %1877 = vmatpush1.msra.mxu0 0.0
    %1878 = vmatprep.subr.mxu0 0.0
    %1879 = vmatpush1.msra.mxu0 0.0
    %1880 = vmatprep.subr.mxu0 0.0
    %1881 = vmatpush1.msra.mxu0 0.0
    %1882 = vmatprep.subr.mxu0 0.0
    %1883 = vmatpush1.msra.mxu0 0.0
    %1884 = vmatprep.subr.mxu0 0.0
    %1885 = vmatpush1.msra.mxu0 0.0
    %1886 = vmatprep.subr.mxu0 0.0
    %1887 = vmatpush1.msra.mxu0 0.0
    %1888 = vmatprep.subr.mxu0 0.0
    %1889 = vmatpush1.msra.mxu0 0.0
    %1890 = vmatprep.subr.mxu0 0.0
    %1891 = vmatpush1.msra.mxu0 0.0
    %1892 = vmatprep.subr.mxu0 0.0
    %1893 = vmatpush1.msra.mxu0 0.0
    %1894 = vmatprep.subr.mxu0 0.0
    %1895 = vmatpush1.msra.mxu0 0.0
    %1896 = vmatprep.subr.mxu0 0.0
    %1897 = vmatpush1.msra.mxu0 0.0
    %1898 = vmatprep.subr.mxu0 0.0
    %1899 = vmatpush1.msra.mxu0 0.0
    %1900 = vmatprep.subr.mxu0 0.0
    %1901 = vmatpush1.msra.mxu0 %v1865
    %1902 = vmatprep.subr.mxu0 0.0
    %1903 = vmatpush1.msra.mxu0 %v1864
    %1904 = vmatprep.subr.mxu0 0.0
    %1905 = vmatpush1.msra.mxu0 %v1863
    %1906 = vmatprep.subr.mxu0 0.0
    %1907 = vmatpush1.msra.mxu0 %v1862
    %1908 = vmatprep.subr.mxu0 0.0
    %1909 = vmatpush2.msra.mxu0 0.0
    %1910 = vmatprep.subr.mxu0 0.0
    %1911 = vmatpush2.msra.mxu0 0.0
    %1912 = vmatprep.subr.mxu0 0.0
    %1913 = vmatpush2.msra.mxu0 0.0
    %1914 = vmatprep.subr.mxu0 0.0
    %1915 = vmatpush2.msra.mxu0 0.0
    %1916 = vmatprep.subr.mxu0 0.0
    %1917 = vmatpush2.msra.mxu0 0.0
    %1918 = vmatprep.subr.mxu0 0.0
    %1919 = vmatpush2.msra.mxu0 0.0
    %1920 = vmatprep.subr.mxu0 0.0
    %1921 = vmatpush2.msra.mxu0 0.0
    %1922 = vmatprep.subr.mxu0 0.0
    %1923 = vmatpush2.msra.mxu0 0.0
    %1924 = vmatprep.subr.mxu0 0.0
    %1925 = vmatpush2.msra.mxu0 0.0
    %1926 = vmatprep.subr.mxu0 0.0
    %1927 = vmatpush2.msra.mxu0 0.0
    %1928 = vmatprep.subr.mxu0 0.0
    %1929 = vmatpush2.msra.mxu0 0.0
    %1930 = vmatprep.subr.mxu0 0.0
    %1931 = vmatpush2.msra.mxu0 0.0
    %1932 = vmatprep.subr.mxu0 0.0
    %1933 = vmatpush2.msra.mxu0 0.0
    %1934 = vmatprep.subr.mxu0 0.0
    %1935 = vmatpush2.msra.mxu0 0.0
    %1936 = vmatprep.subr.mxu0 0.0
    %1937 = vmatpush2.msra.mxu0 0.0
    %1938 = vmatprep.subr.mxu0 0.0
    %1939 = vmatpush2.msra.mxu0 0.0
    %1940 = vmatprep.mubr.f32.mxu0 0.0
    %1941 = vmatmul.mubr.f32.gmra.mxu0 %v1871
    %v1942 = vpop.f32.mrf.mxu0
    %v1943 = vadd.f32 %v1869, %v1942
    %v1944 = vpop.f32.mrf.mxu0
    %1945 = vmatprep.mubr.f32.mxu0 0.0
    %1946 = vmatmul.mubr.f32.gmra.mxu0 %v1874
    %v1947 = vpop.f32.mrf.mxu0
    %v1948 = vadd.f32 %v1869, %v1947
    %v1949 = vpop.f32.mrf.mxu0
    %1950 = vdwg.mxu0
    %1952 = vrot.lane.b32.xlu0 %v1943, 96
    %v1953 = vpop.permute.xlu0 %1952
    %v1954 = vsel %vm148, %v1943, 0
    %v1956 = vsel %vm148, %v1953, 0
    %1958 = vmatprep.subr.mxu0 0.0
    %1959 = vmatpush1.xpose.msra.mxu0 0.0
    %1960 = vmatprep.subr.mxu0 0.0
    %1961 = vmatpush1.xpose.msra.mxu0 0.0
    %1962 = vmatprep.subr.mxu0 0.0
    %1963 = vmatpush1.xpose.msra.mxu0 0.0
    %1964 = vmatprep.subr.mxu0 0.0
    %1965 = vmatpush1.xpose.msra.mxu0 0.0
    %1966 = vmatprep.subr.mxu0 0.0
    %1967 = vmatpush1.xpose.msra.mxu0 0.0
    %1968 = vmatprep.subr.mxu0 0.0
    %1969 = vmatpush1.xpose.msra.mxu0 0.0
    %1970 = vmatprep.subr.mxu0 0.0
    %1971 = vmatpush1.xpose.msra.mxu0 0.0
    %1972 = vmatprep.subr.mxu0 0.0
    %1973 = vmatpush1.xpose.msra.mxu0 0.0
    %1974 = vmatprep.subr.mxu0 0.0
    %1975 = vmatpush1.xpose.msra.mxu0 0.0
    %1976 = vmatprep.subr.mxu0 0.0
    %1977 = vmatpush1.xpose.msra.mxu0 0.0
    %1978 = vmatprep.subr.mxu0 0.0
    %1979 = vmatpush1.xpose.msra.mxu0 0.0
    %1980 = vmatprep.subr.mxu0 0.0
    %1981 = vmatpush1.xpose.msra.mxu0 0.0
    %1982 = vmatprep.subr.mxu0 0.0
    %1983 = vmatpush1.xpose.msra.mxu0 0.0
    %1984 = vmatprep.subr.mxu0 0.0
    %1985 = vmatpush1.xpose.msra.mxu0 0.0
    %1986 = vmatprep.subr.mxu0 0.0
    %1987 = vmatpush1.xpose.msra.mxu0 0.0
    %1988 = vmatprep.subr.mxu0 0.0
    %1989 = vmatpush1.xpose.msra.mxu0 %v1956
    %1990 = vmatprep.subr.mxu0 0.0
    %1991 = vmatpush2.xpose.msra.mxu0 0.0
    %1992 = vmatprep.subr.mxu0 0.0
    %1993 = vmatpush2.xpose.msra.mxu0 0.0
    %1994 = vmatprep.subr.mxu0 0.0
    %1995 = vmatpush2.xpose.msra.mxu0 0.0
    %1996 = vmatprep.subr.mxu0 0.0
    %1997 = vmatpush2.xpose.msra.mxu0 0.0
    %1998 = vmatprep.subr.mxu0 0.0
    %1999 = vmatpush2.xpose.msra.mxu0 0.0
    %2000 = vmatprep.subr.mxu0 0.0
    %2001 = vmatpush2.xpose.msra.mxu0 0.0
    %2002 = vmatprep.subr.mxu0 0.0
    %2003 = vmatpush2.xpose.msra.mxu0 0.0
    %2004 = vmatprep.subr.mxu0 0.0
    %2005 = vmatpush2.xpose.msra.mxu0 0.0
    %2006 = vmatprep.subr.mxu0 0.0
    %2007 = vmatpush2.xpose.msra.mxu0 0.0
    %2008 = vmatprep.subr.mxu0 0.0
    %2009 = vmatpush2.xpose.msra.mxu0 0.0
    %2010 = vmatprep.subr.mxu0 0.0
    %2011 = vmatpush2.xpose.msra.mxu0 0.0
    %2012 = vmatprep.subr.mxu0 0.0
    %2013 = vmatpush2.xpose.msra.mxu0 0.0
    %2014 = vmatprep.subr.mxu0 0.0
    %2015 = vmatpush2.xpose.msra.mxu0 0.0
    %2016 = vmatprep.subr.mxu0 0.0
    %2017 = vmatpush2.xpose.msra.mxu0 0.0
    %2018 = vmatprep.subr.mxu0 0.0
    %2019 = vmatpush2.xpose.msra.mxu0 0.0
    %2020 = vmatprep.subr.mxu0 0.0
    %2021 = vmatpush2.xpose.msra.mxu0 0.0
    %2022 = vmatprep.mubr.f32.mxu0 0.0
    %2023 = vmatmul.mubr.f32.gmra.mxu0 %v1954
    %v2024 = vpop.f32.mrf.mxu0
    %v2025 = vadd.f32 0.0, %v2024
    %v2026 = vpop.f32.mrf.mxu0
    %2027 = vdwg.mxu0
    %2029 = vrot.lane.b32.xlu0 %v1948, 96
    %v2030 = vpop.permute.xlu0 %2029
    %v2031 = vsel %vm148, %v1948, 0
    %v2033 = vsel %vm148, %v2030, 0
    %2035 = vmatprep.subr.mxu0 0.0
    %2036 = vmatpush1.xpose.msra.mxu0 0.0
    %2037 = vmatprep.subr.mxu0 0.0
    %2038 = vmatpush1.xpose.msra.mxu0 0.0
    %2039 = vmatprep.subr.mxu0 0.0
    %2040 = vmatpush1.xpose.msra.mxu0 0.0
    %2041 = vmatprep.subr.mxu0 0.0
    %2042 = vmatpush1.xpose.msra.mxu0 0.0
    %2043 = vmatprep.subr.mxu0 0.0
    %2044 = vmatpush1.xpose.msra.mxu0 0.0
    %2045 = vmatprep.subr.mxu0 0.0
    %2046 = vmatpush1.xpose.msra.mxu0 0.0
    %2047 = vmatprep.subr.mxu0 0.0
    %2048 = vmatpush1.xpose.msra.mxu0 0.0
    %2049 = vmatprep.subr.mxu0 0.0
    %2050 = vmatpush1.xpose.msra.mxu0 0.0
    %2051 = vmatprep.subr.mxu0 0.0
    %2052 = vmatpush1.xpose.msra.mxu0 0.0
    %2053 = vmatprep.subr.mxu0 0.0
    %2054 = vmatpush1.xpose.msra.mxu0 0.0
    %2055 = vmatprep.subr.mxu0 0.0
    %2056 = vmatpush1.xpose.msra.mxu0 0.0
    %2057 = vmatprep.subr.mxu0 0.0
    %2058 = vmatpush1.xpose.msra.mxu0 0.0
    %2059 = vmatprep.subr.mxu0 0.0
    %2060 = vmatpush1.xpose.msra.mxu0 0.0
    %2061 = vmatprep.subr.mxu0 0.0
    %2062 = vmatpush1.xpose.msra.mxu0 0.0
    %2063 = vmatprep.subr.mxu0 0.0
    %2064 = vmatpush1.xpose.msra.mxu0 0.0
    %2065 = vmatprep.subr.mxu0 0.0
    %2066 = vmatpush1.xpose.msra.mxu0 %v2033
    %2067 = vmatprep.subr.mxu0 0.0
    %2068 = vmatpush2.xpose.msra.mxu0 0.0
    %2069 = vmatprep.subr.mxu0 0.0
    %2070 = vmatpush2.xpose.msra.mxu0 0.0
    %2071 = vmatprep.subr.mxu0 0.0
    %2072 = vmatpush2.xpose.msra.mxu0 0.0
    %2073 = vmatprep.subr.mxu0 0.0
    %2074 = vmatpush2.xpose.msra.mxu0 0.0
    %2075 = vmatprep.subr.mxu0 0.0
    %2076 = vmatpush2.xpose.msra.mxu0 0.0
    %2077 = vmatprep.subr.mxu0 0.0
    %2078 = vmatpush2.xpose.msra.mxu0 0.0
    %2079 = vmatprep.subr.mxu0 0.0
    %2080 = vmatpush2.xpose.msra.mxu0 0.0
    %2081 = vmatprep.subr.mxu0 0.0
    %2082 = vmatpush2.xpose.msra.mxu0 0.0
    %2083 = vmatprep.subr.mxu0 0.0
    %2084 = vmatpush2.xpose.msra.mxu0 0.0
    %2085 = vmatprep.subr.mxu0 0.0
    %2086 = vmatpush2.xpose.msra.mxu0 0.0
    %2087 = vmatprep.subr.mxu0 0.0
    %2088 = vmatpush2.xpose.msra.mxu0 0.0
    %2089 = vmatprep.subr.mxu0 0.0
    %2090 = vmatpush2.xpose.msra.mxu0 0.0
    %2091 = vmatprep.subr.mxu0 0.0
    %2092 = vmatpush2.xpose.msra.mxu0 0.0
    %2093 = vmatprep.subr.mxu0 0.0
    %2094 = vmatpush2.xpose.msra.mxu0 0.0
    %2095 = vmatprep.subr.mxu0 0.0
    %2096 = vmatpush2.xpose.msra.mxu0 0.0
    %2097 = vmatprep.subr.mxu0 0.0
    %2098 = vmatpush2.xpose.msra.mxu0 0.0
    %2099 = vmatprep.mubr.f32.mxu0 0.0
    %2100 = vmatmul.mubr.f32.gmra.mxu0 %v2031
    %v2101 = vpop.f32.mrf.mxu0
    %v2102 = vadd.f32 0.0, %v2101
    %v2103 = vpop.f32.mrf.mxu0
    %2104 = vdwg.mxu0
    %v2105 = vmul.f32 %v2025, 0.35355338
    %v2106 = vmul.f32 %v2102, 0.35355338
    %v2107 = vsel %vm148, %v2105, -inf
    %2108 = vmax.xlane.f32.xlu0 %v2107
    %v2109 = vpop.xlane.xlu0 %2108
    %v2110 = vsel %vm148, %v2106, -inf
    %2111 = vmax.xlane.f32.xlu0 %v2110
    %v2112 = vpop.xlane.xlu0 %2111
    %v2113 = vsub.f32 %v2105, %v2109
    %v2114 = vsub.f32 %v2106, %v2112
    %v2115 = vmul.f32 %v2113, 1.442695
    %v2116 = vpow.pop %v2115
    %v2117 = vmul.f32 %v2114, 1.442695
    %v2118 = vpow.pop %v2117
    %v2119 = vsel %vm148, %v2116, 0.0
    %2120 = vadd.xlane.f32.xlu0 %v2119
    %v2121 = vpop.xlane.xlu0 %2120
    %v2122 = vsel %vm148, %v2118, 0.0
    %2123 = vadd.xlane.f32.xlu0 %v2122
    %v2124 = vpop.xlane.xlu0 %2123
    %v2125 = vrcp.pop %v2121
    %v2126 = vmul.f32 %v2116, %v2125
    %v2127 = vrcp.pop %v2124
    %v2128 = vmul.f32 %v2118, %v2127
    %2129 = vrot.lane.b32.xlu0 %v1943, 64
    %v2130 = vpop.permute.xlu0 %2129
    %v2133 = vsel %vm148, %v2126, 0
    %2135 = vmatprep.subr.mxu0 0.0
    %2136 = vmatpush1.msra.mxu0 0.0
    %2137 = vmatprep.subr.mxu0 0.0
    %2138 = vmatpush1.msra.mxu0 0.0
    %2139 = vmatprep.subr.mxu0 0.0
    %2140 = vmatpush1.msra.mxu0 0.0
    %2141 = vmatprep.subr.mxu0 0.0
    %2142 = vmatpush1.msra.mxu0 0.0
    %2143 = vmatprep.subr.mxu0 0.0
    %2144 = vmatpush1.msra.mxu0 0.0
    %2145 = vmatprep.subr.mxu0 0.0
    %2146 = vmatpush1.msra.mxu0 0.0
    %2147 = vmatprep.subr.mxu0 0.0
    %2148 = vmatpush1.msra.mxu0 0.0
    %2149 = vmatprep.subr.mxu0 0.0
    %2150 = vmatpush1.msra.mxu0 0.0
    %2151 = vmatprep.subr.mxu0 0.0
    %2152 = vmatpush1.msra.mxu0 0.0
    %2153 = vmatprep.subr.mxu0 0.0
    %2154 = vmatpush1.msra.mxu0 0.0
    %2155 = vmatprep.subr.mxu0 0.0
    %2156 = vmatpush1.msra.mxu0 0.0
    %2157 = vmatprep.subr.mxu0 0.0
    %2158 = vmatpush1.msra.mxu0 0.0
    %2159 = vmatprep.subr.mxu0 0.0
    %2160 = vmatpush1.msra.mxu0 0.0
    %2161 = vmatprep.subr.mxu0 0.0
    %2162 = vmatpush1.msra.mxu0 0.0
    %2163 = vmatprep.subr.mxu0 0.0
    %2164 = vmatpush1.msra.mxu0 0.0
    %2165 = vmatprep.subr.mxu0 0.0
    %2166 = vmatpush1.msra.mxu0 %v2130
    %2167 = vmatprep.subr.mxu0 0.0
    %2168 = vmatpush2.msra.mxu0 0.0
    %2169 = vmatprep.subr.mxu0 0.0
    %2170 = vmatpush2.msra.mxu0 0.0
    %2171 = vmatprep.subr.mxu0 0.0
    %2172 = vmatpush2.msra.mxu0 0.0
    %2173 = vmatprep.subr.mxu0 0.0
    %2174 = vmatpush2.msra.mxu0 0.0
    %2175 = vmatprep.subr.mxu0 0.0
    %2176 = vmatpush2.msra.mxu0 0.0
    %2177 = vmatprep.subr.mxu0 0.0
    %2178 = vmatpush2.msra.mxu0 0.0
    %2179 = vmatprep.subr.mxu0 0.0
    %2180 = vmatpush2.msra.mxu0 0.0
    %2181 = vmatprep.subr.mxu0 0.0
    %2182 = vmatpush2.msra.mxu0 0.0
    %2183 = vmatprep.subr.mxu0 0.0
    %2184 = vmatpush2.msra.mxu0 0.0
    %2185 = vmatprep.subr.mxu0 0.0
    %2186 = vmatpush2.msra.mxu0 0.0
    %2187 = vmatprep.subr.mxu0 0.0
    %2188 = vmatpush2.msra.mxu0 0.0
    %2189 = vmatprep.subr.mxu0 0.0
    %2190 = vmatpush2.msra.mxu0 0.0
    %2191 = vmatprep.subr.mxu0 0.0
    %2192 = vmatpush2.msra.mxu0 0.0
    %2193 = vmatprep.subr.mxu0 0.0
    %2194 = vmatpush2.msra.mxu0 0.0
    %2195 = vmatprep.subr.mxu0 0.0
    %2196 = vmatpush2.msra.mxu0 0.0
    %2197 = vmatprep.subr.mxu0 0.0
    %2198 = vmatpush2.msra.mxu0 0.0
    %2199 = vmatprep.mubr.f32.mxu0 0.0
    %2200 = vmatmul.mubr.f32.gmra.mxu0 %v2133
    %v2201 = vpop.f32.mrf.mxu0
    %v2202 = vadd.f32 0.0, %v2201
    %v2203 = vpop.f32.mrf.mxu0
    %2204 = vdwg.mxu0
    %2205 = vrot.lane.b32.xlu0 %v1948, 64
    %v2206 = vpop.permute.xlu0 %2205
    %v2209 = vsel %vm148, %v2128, 0
    %2211 = vmatprep.subr.mxu0 0.0
    %2212 = vmatpush1.msra.mxu0 0.0
    %2213 = vmatprep.subr.mxu0 0.0
    %2214 = vmatpush1.msra.mxu0 0.0
    %2215 = vmatprep.subr.mxu0 0.0
    %2216 = vmatpush1.msra.mxu0 0.0
    %2217 = vmatprep.subr.mxu0 0.0
    %2218 = vmatpush1.msra.mxu0 0.0
    %2219 = vmatprep.subr.mxu0 0.0
    %2220 = vmatpush1.msra.mxu0 0.0
    %2221 = vmatprep.subr.mxu0 0.0
    %2222 = vmatpush1.msra.mxu0 0.0
    %2223 = vmatprep.subr.mxu0 0.0
    %2224 = vmatpush1.msra.mxu0 0.0
    %2225 = vmatprep.subr.mxu0 0.0
    %2226 = vmatpush1.msra.mxu0 0.0
    %2227 = vmatprep.subr.mxu0 0.0
    %2228 = vmatpush1.msra.mxu0 0.0
    %2229 = vmatprep.subr.mxu0 0.0
    %2230 = vmatpush1.msra.mxu0 0.0
    %2231 = vmatprep.subr.mxu0 0.0
    %2232 = vmatpush1.msra.mxu0 0.0
    %2233 = vmatprep.subr.mxu0 0.0
    %2234 = vmatpush1.msra.mxu0 0.0
    %2235 = vmatprep.subr.mxu0 0.0
    %2236 = vmatpush1.msra.mxu0 0.0
    %2237 = vmatprep.subr.mxu0 0.0
    %2238 = vmatpush1.msra.mxu0 0.0
    %2239 = vmatprep.subr.mxu0 0.0
    %2240 = vmatpush1.msra.mxu0 0.0
    %2241 = vmatprep.subr.mxu0 0.0
    %2242 = vmatpush1.msra.mxu0 %v2206
    %2243 = vmatprep.subr.mxu0 0.0
    %2244 = vmatpush2.msra.mxu0 0.0
    %2245 = vmatprep.subr.mxu0 0.0
    %2246 = vmatpush2.msra.mxu0 0.0
    %2247 = vmatprep.subr.mxu0 0.0
    %2248 = vmatpush2.msra.mxu0 0.0
    %2249 = vmatprep.subr.mxu0 0.0
    %2250 = vmatpush2.msra.mxu0 0.0
    %2251 = vmatprep.subr.mxu0 0.0
    %2252 = vmatpush2.msra.mxu0 0.0
    %2253 = vmatprep.subr.mxu0 0.0
    %2254 = vmatpush2.msra.mxu0 0.0
    %2255 = vmatprep.subr.mxu0 0.0
    %2256 = vmatpush2.msra.mxu0 0.0
    %2257 = vmatprep.subr.mxu0 0.0
    %2258 = vmatpush2.msra.mxu0 0.0
    %2259 = vmatprep.subr.mxu0 0.0
    %2260 = vmatpush2.msra.mxu0 0.0
    %2261 = vmatprep.subr.mxu0 0.0
    %2262 = vmatpush2.msra.mxu0 0.0
    %2263 = vmatprep.subr.mxu0 0.0
    %2264 = vmatpush2.msra.mxu0 0.0
    %2265 = vmatprep.subr.mxu0 0.0
    %2266 = vmatpush2.msra.mxu0 0.0
    %2267 = vmatprep.subr.mxu0 0.0
    %2268 = vmatpush2.msra.mxu0 0.0
    %2269 = vmatprep.subr.mxu0 0.0
    %2270 = vmatpush2.msra.mxu0 0.0
    %2271 = vmatprep.subr.mxu0 0.0
    %2272 = vmatpush2.msra.mxu0 0.0
    %2273 = vmatprep.subr.mxu0 0.0
    %2274 = vmatpush2.msra.mxu0 0.0
    %2275 = vmatprep.mubr.f32.mxu0 0.0
    %2276 = vmatmul.mubr.f32.gmra.mxu0 %v2209
    %v2277 = vpop.f32.mrf.mxu0
    %v2278 = vadd.f32 0.0, %v2277
    %v2279 = vpop.f32.mrf.mxu0
    %2280 = vdwg.mxu0
    %2281 = vrot.lane.b32.xlu0 %v1943, 120
    %v2282 = vpop.permute.xlu0 %2281
    %2283 = vrot.lane.b32.xlu0 %v1943, 88
    %v2284 = vpop.permute.xlu0 %2283
    %v2285 = vsel %vm148, %v2282, 0
    %v2287 = vsel %vm148, %v2284, 0
    %2289 = vmatprep.subr.mxu0 0.0
    %2290 = vmatpush1.xpose.msra.mxu0 0.0
    %2291 = vmatprep.subr.mxu0 0.0
    %2292 = vmatpush1.xpose.msra.mxu0 0.0
    %2293 = vmatprep.subr.mxu0 0.0
    %2294 = vmatpush1.xpose.msra.mxu0 0.0
    %2295 = vmatprep.subr.mxu0 0.0
    %2296 = vmatpush1.xpose.msra.mxu0 0.0
    %2297 = vmatprep.subr.mxu0 0.0
    %2298 = vmatpush1.xpose.msra.mxu0 0.0
    %2299 = vmatprep.subr.mxu0 0.0
    %2300 = vmatpush1.xpose.msra.mxu0 0.0
    %2301 = vmatprep.subr.mxu0 0.0
    %2302 = vmatpush1.xpose.msra.mxu0 0.0
    %2303 = vmatprep.subr.mxu0 0.0
    %2304 = vmatpush1.xpose.msra.mxu0 0.0
    %2305 = vmatprep.subr.mxu0 0.0
    %2306 = vmatpush1.xpose.msra.mxu0 0.0
    %2307 = vmatprep.subr.mxu0 0.0
    %2308 = vmatpush1.xpose.msra.mxu0 0.0
    %2309 = vmatprep.subr.mxu0 0.0
    %2310 = vmatpush1.xpose.msra.mxu0 0.0
    %2311 = vmatprep.subr.mxu0 0.0
    %2312 = vmatpush1.xpose.msra.mxu0 0.0
    %2313 = vmatprep.subr.mxu0 0.0
    %2314 = vmatpush1.xpose.msra.mxu0 0.0
    %2315 = vmatprep.subr.mxu0 0.0
    %2316 = vmatpush1.xpose.msra.mxu0 0.0
    %2317 = vmatprep.subr.mxu0 0.0
    %2318 = vmatpush1.xpose.msra.mxu0 0.0
    %2319 = vmatprep.subr.mxu0 0.0
    %2320 = vmatpush1.xpose.msra.mxu0 %v2287
    %2321 = vmatprep.subr.mxu0 0.0
    %2322 = vmatpush2.xpose.msra.mxu0 0.0
    %2323 = vmatprep.subr.mxu0 0.0
    %2324 = vmatpush2.xpose.msra.mxu0 0.0
    %2325 = vmatprep.subr.mxu0 0.0
    %2326 = vmatpush2.xpose.msra.mxu0 0.0
    %2327 = vmatprep.subr.mxu0 0.0
    %2328 = vmatpush2.xpose.msra.mxu0 0.0
    %2329 = vmatprep.subr.mxu0 0.0
    %2330 = vmatpush2.xpose.msra.mxu0 0.0
    %2331 = vmatprep.subr.mxu0 0.0
    %2332 = vmatpush2.xpose.msra.mxu0 0.0
    %2333 = vmatprep.subr.mxu0 0.0
    %2334 = vmatpush2.xpose.msra.mxu0 0.0
    %2335 = vmatprep.subr.mxu0 0.0
    %2336 = vmatpush2.xpose.msra.mxu0 0.0
    %2337 = vmatprep.subr.mxu0 0.0
    %2338 = vmatpush2.xpose.msra.mxu0 0.0
    %2339 = vmatprep.subr.mxu0 0.0
    %2340 = vmatpush2.xpose.msra.mxu0 0.0
    %2341 = vmatprep.subr.mxu0 0.0
    %2342 = vmatpush2.xpose.msra.mxu0 0.0
    %2343 = vmatprep.subr.mxu0 0.0
    %2344 = vmatpush2.xpose.msra.mxu0 0.0
    %2345 = vmatprep.subr.mxu0 0.0
    %2346 = vmatpush2.xpose.msra.mxu0 0.0
    %2347 = vmatprep.subr.mxu0 0.0
    %2348 = vmatpush2.xpose.msra.mxu0 0.0
    %2349 = vmatprep.subr.mxu0 0.0
    %2350 = vmatpush2.xpose.msra.mxu0 0.0
    %2351 = vmatprep.subr.mxu0 0.0
    %2352 = vmatpush2.xpose.msra.mxu0 0.0
    %2353 = vmatprep.mubr.f32.mxu0 0.0
    %2354 = vmatmul.mubr.f32.gmra.mxu0 %v2285
    %v2355 = vpop.f32.mrf.mxu0
    %v2356 = vadd.f32 0.0, %v2355
    %v2357 = vpop.f32.mrf.mxu0
    %2358 = vdwg.mxu0
    %2359 = vrot.lane.b32.xlu0 %v1948, 120
    %v2360 = vpop.permute.xlu0 %2359
    %2361 = vrot.lane.b32.xlu0 %v1948, 88
    %v2362 = vpop.permute.xlu0 %2361
    %v2363 = vsel %vm148, %v2360, 0
    %v2365 = vsel %vm148, %v2362, 0
    %2367 = vmatprep.subr.mxu0 0.0
    %2368 = vmatpush1.xpose.msra.mxu0 0.0
    %2369 = vmatprep.subr.mxu0 0.0
    %2370 = vmatpush1.xpose.msra.mxu0 0.0
    %2371 = vmatprep.subr.mxu0 0.0
    %2372 = vmatpush1.xpose.msra.mxu0 0.0
    %2373 = vmatprep.subr.mxu0 0.0
    %2374 = vmatpush1.xpose.msra.mxu0 0.0
    %2375 = vmatprep.subr.mxu0 0.0
    %2376 = vmatpush1.xpose.msra.mxu0 0.0
    %2377 = vmatprep.subr.mxu0 0.0
    %2378 = vmatpush1.xpose.msra.mxu0 0.0
    %2379 = vmatprep.subr.mxu0 0.0
    %2380 = vmatpush1.xpose.msra.mxu0 0.0
    %2381 = vmatprep.subr.mxu0 0.0
    %2382 = vmatpush1.xpose.msra.mxu0 0.0
    %2383 = vmatprep.subr.mxu0 0.0
    %2384 = vmatpush1.xpose.msra.mxu0 0.0
    %2385 = vmatprep.subr.mxu0 0.0
    %2386 = vmatpush1.xpose.msra.mxu0 0.0
    %2387 = vmatprep.subr.mxu0 0.0
    %2388 = vmatpush1.xpose.msra.mxu0 0.0
    %2389 = vmatprep.subr.mxu0 0.0
    %2390 = vmatpush1.xpose.msra.mxu0 0.0
    %2391 = vmatprep.subr.mxu0 0.0
    %2392 = vmatpush1.xpose.msra.mxu0 0.0
    %2393 = vmatprep.subr.mxu0 0.0
    %2394 = vmatpush1.xpose.msra.mxu0 0.0
    %2395 = vmatprep.subr.mxu0 0.0
    %2396 = vmatpush1.xpose.msra.mxu0 0.0
    %2397 = vmatprep.subr.mxu0 0.0
    %2398 = vmatpush1.xpose.msra.mxu0 %v2365
    %2399 = vmatprep.subr.mxu0 0.0
    %2400 = vmatpush2.xpose.msra.mxu0 0.0
    %2401 = vmatprep.subr.mxu0 0.0
    %2402 = vmatpush2.xpose.msra.mxu0 0.0
    %2403 = vmatprep.subr.mxu0 0.0
    %2404 = vmatpush2.xpose.msra.mxu0 0.0
    %2405 = vmatprep.subr.mxu0 0.0
    %2406 = vmatpush2.xpose.msra.mxu0 0.0
    %2407 = vmatprep.subr.mxu0 0.0
    %2408 = vmatpush2.xpose.msra.mxu0 0.0
    %2409 = vmatprep.subr.mxu0 0.0
    %2410 = vmatpush2.xpose.msra.mxu0 0.0
    %2411 = vmatprep.subr.mxu0 0.0
    %2412 = vmatpush2.xpose.msra.mxu0 0.0
    %2413 = vmatprep.subr.mxu0 0.0
    %2414 = vmatpush2.xpose.msra.mxu0 0.0
    %2415 = vmatprep.subr.mxu0 0.0
    %2416 = vmatpush2.xpose.msra.mxu0 0.0
    %2417 = vmatprep.subr.mxu0 0.0
    %2418 = vmatpush2.xpose.msra.mxu0 0.0
    %2419 = vmatprep.subr.mxu0 0.0
    %2420 = vmatpush2.xpose.msra.mxu0 0.0
    %2421 = vmatprep.subr.mxu0 0.0
    %2422 = vmatpush2.xpose.msra.mxu0 0.0
    %2423 = vmatprep.subr.mxu0 0.0
    %2424 = vmatpush2.xpose.msra.mxu0 0.0
    %2425 = vmatprep.subr.mxu0 0.0
    %2426 = vmatpush2.xpose.msra.mxu0 0.0
    %2427 = vmatprep.subr.mxu0 0.0
    %2428 = vmatpush2.xpose.msra.mxu0 0.0
    %2429 = vmatprep.subr.mxu0 0.0
    %2430 = vmatpush2.xpose.msra.mxu0 0.0
    %2431 = vmatprep.mubr.f32.mxu0 0.0
    %2432 = vmatmul.mubr.f32.gmra.mxu0 %v2363
    %v2433 = vpop.f32.mrf.mxu0
    %v2434 = vadd.f32 0.0, %v2433
    %v2435 = vpop.f32.mrf.mxu0
    %2436 = vdwg.mxu0
    %v2437 = vmul.f32 %v2356, 0.35355338
    %v2438 = vmul.f32 %v2434, 0.35355338
    %v2439 = vsel %vm148, %v2437, -inf
    %2440 = vmax.xlane.f32.xlu0 %v2439
    %v2441 = vpop.xlane.xlu0 %2440
    %v2442 = vsel %vm148, %v2438, -inf
    %2443 = vmax.xlane.f32.xlu0 %v2442
    %v2444 = vpop.xlane.xlu0 %2443
    %v2445 = vsub.f32 %v2437, %v2441
    %v2446 = vsub.f32 %v2438, %v2444
    %v2447 = vmul.f32 %v2445, 1.442695
    %v2448 = vpow.pop %v2447
    %v2449 = vmul.f32 %v2446, 1.442695
    %v2450 = vpow.pop %v2449
    %v2451 = vsel %vm148, %v2448, 0.0
    %2452 = vadd.xlane.f32.xlu0 %v2451
    %v2453 = vpop.xlane.xlu0 %2452
    %v2454 = vsel %vm148, %v2450, 0.0
    %2455 = vadd.xlane.f32.xlu0 %v2454
    %v2456 = vpop.xlane.xlu0 %2455
    %v2457 = vrcp.pop %v2453
    %v2458 = vmul.f32 %v2448, %v2457
    %v2459 = vrcp.pop %v2456
    %v2460 = vmul.f32 %v2450, %v2459
    %2461 = vrot.lane.b32.xlu0 %v1943, 56
    %v2462 = vpop.permute.xlu0 %2461
    %v2465 = vsel %vm148, %v2458, 0
    %2467 = vmatprep.subr.mxu0 0.0
    %2468 = vmatpush1.msra.mxu0 0.0
    %2469 = vmatprep.subr.mxu0 0.0
    %2470 = vmatpush1.msra.mxu0 0.0
    %2471 = vmatprep.subr.mxu0 0.0
    %2472 = vmatpush1.msra.mxu0 0.0
    %2473 = vmatprep.subr.mxu0 0.0
    %2474 = vmatpush1.msra.mxu0 0.0
    %2475 = vmatprep.subr.mxu0 0.0
    %2476 = vmatpush1.msra.mxu0 0.0
    %2477 = vmatprep.subr.mxu0 0.0
    %2478 = vmatpush1.msra.mxu0 0.0
    %2479 = vmatprep.subr.mxu0 0.0
    %2480 = vmatpush1.msra.mxu0 0.0
    %2481 = vmatprep.subr.mxu0 0.0
    %2482 = vmatpush1.msra.mxu0 0.0
    %2483 = vmatprep.subr.mxu0 0.0
    %2484 = vmatpush1.msra.mxu0 0.0
    %2485 = vmatprep.subr.mxu0 0.0
    %2486 = vmatpush1.msra.mxu0 0.0
    %2487 = vmatprep.subr.mxu0 0.0
    %2488 = vmatpush1.msra.mxu0 0.0
    %2489 = vmatprep.subr.mxu0 0.0
    %2490 = vmatpush1.msra.mxu0 0.0
    %2491 = vmatprep.subr.mxu0 0.0
    %2492 = vmatpush1.msra.mxu0 0.0
    %2493 = vmatprep.subr.mxu0 0.0
    %2494 = vmatpush1.msra.mxu0 0.0
    %2495 = vmatprep.subr.mxu0 0.0
    %2496 = vmatpush1.msra.mxu0 0.0
    %2497 = vmatprep.subr.mxu0 0.0
    %2498 = vmatpush1.msra.mxu0 %v2462
    %2499 = vmatprep.subr.mxu0 0.0
    %2500 = vmatpush2.msra.mxu0 0.0
    %2501 = vmatprep.subr.mxu0 0.0
    %2502 = vmatpush2.msra.mxu0 0.0
    %2503 = vmatprep.subr.mxu0 0.0
    %2504 = vmatpush2.msra.mxu0 0.0
    %2505 = vmatprep.subr.mxu0 0.0
    %2506 = vmatpush2.msra.mxu0 0.0
    %2507 = vmatprep.subr.mxu0 0.0
    %2508 = vmatpush2.msra.mxu0 0.0
    %2509 = vmatprep.subr.mxu0 0.0
    %2510 = vmatpush2.msra.mxu0 0.0
    %2511 = vmatprep.subr.mxu0 0.0
    %2512 = vmatpush2.msra.mxu0 0.0
    %2513 = vmatprep.subr.mxu0 0.0
    %2514 = vmatpush2.msra.mxu0 0.0
    %2515 = vmatprep.subr.mxu0 0.0
    %2516 = vmatpush2.msra.mxu0 0.0
    %2517 = vmatprep.subr.mxu0 0.0
    %2518 = vmatpush2.msra.mxu0 0.0
    %2519 = vmatprep.subr.mxu0 0.0
    %2520 = vmatpush2.msra.mxu0 0.0
    %2521 = vmatprep.subr.mxu0 0.0
    %2522 = vmatpush2.msra.mxu0 0.0
    %2523 = vmatprep.subr.mxu0 0.0
    %2524 = vmatpush2.msra.mxu0 0.0
    %2525 = vmatprep.subr.mxu0 0.0
    %2526 = vmatpush2.msra.mxu0 0.0
    %2527 = vmatprep.subr.mxu0 0.0
    %2528 = vmatpush2.msra.mxu0 0.0
    %2529 = vmatprep.subr.mxu0 0.0
    %2530 = vmatpush2.msra.mxu0 0.0
    %2531 = vmatprep.mubr.f32.mxu0 0.0
    %2532 = vmatmul.mubr.f32.gmra.mxu0 %v2465
    %v2533 = vpop.f32.mrf.mxu0
    %v2534 = vadd.f32 0.0, %v2533
    %v2535 = vpop.f32.mrf.mxu0
    %2536 = vdwg.mxu0
    %2537 = vrot.lane.b32.xlu0 %v1948, 56
    %v2538 = vpop.permute.xlu0 %2537
    %v2541 = vsel %vm148, %v2460, 0
    %2543 = vmatprep.subr.mxu0 0.0
    %2544 = vmatpush1.msra.mxu0 0.0
    %2545 = vmatprep.subr.mxu0 0.0
    %2546 = vmatpush1.msra.mxu0 0.0
    %2547 = vmatprep.subr.mxu0 0.0
    %2548 = vmatpush1.msra.mxu0 0.0
    %2549 = vmatprep.subr.mxu0 0.0
    %2550 = vmatpush1.msra.mxu0 0.0
    %2551 = vmatprep.subr.mxu0 0.0
    %2552 = vmatpush1.msra.mxu0 0.0
    %2553 = vmatprep.subr.mxu0 0.0
    %2554 = vmatpush1.msra.mxu0 0.0
    %2555 = vmatprep.subr.mxu0 0.0
    %2556 = vmatpush1.msra.mxu0 0.0
    %2557 = vmatprep.subr.mxu0 0.0
    %2558 = vmatpush1.msra.mxu0 0.0
    %2559 = vmatprep.subr.mxu0 0.0
    %2560 = vmatpush1.msra.mxu0 0.0
    %2561 = vmatprep.subr.mxu0 0.0
    %2562 = vmatpush1.msra.mxu0 0.0
    %2563 = vmatprep.subr.mxu0 0.0
    %2564 = vmatpush1.msra.mxu0 0.0
    %2565 = vmatprep.subr.mxu0 0.0
    %2566 = vmatpush1.msra.mxu0 0.0
    %2567 = vmatprep.subr.mxu0 0.0
    %2568 = vmatpush1.msra.mxu0 0.0
    %2569 = vmatprep.subr.mxu0 0.0
    %2570 = vmatpush1.msra.mxu0 0.0
    %2571 = vmatprep.subr.mxu0 0.0
    %2572 = vmatpush1.msra.mxu0 0.0
    %2573 = vmatprep.subr.mxu0 0.0
    %2574 = vmatpush1.msra.mxu0 %v2538
    %2575 = vmatprep.subr.mxu0 0.0
    %2576 = vmatpush2.msra.mxu0 0.0
    %2577 = vmatprep.subr.mxu0 0.0
    %2578 = vmatpush2.msra.mxu0 0.0
    %2579 = vmatprep.subr.mxu0 0.0
    %2580 = vmatpush2.msra.mxu0 0.0
    %2581 = vmatprep.subr.mxu0 0.0
    %2582 = vmatpush2.msra.mxu0 0.0
    %2583 = vmatprep.subr.mxu0 0.0
    %2584 = vmatpush2.msra.mxu0 0.0
    %2585 = vmatprep.subr.mxu0 0.0
    %2586 = vmatpush2.msra.mxu0 0.0
    %2587 = vmatprep.subr.mxu0 0.0
    %2588 = vmatpush2.msra.mxu0 0.0
    %2589 = vmatprep.subr.mxu0 0.0
    %2590 = vmatpush2.msra.mxu0 0.0
    %2591 = vmatprep.subr.mxu0 0.0
    %2592 = vmatpush2.msra.mxu0 0.0
    %2593 = vmatprep.subr.mxu0 0.0
    %2594 = vmatpush2.msra.mxu0 0.0
    %2595 = vmatprep.subr.mxu0 0.0
    %2596 = vmatpush2.msra.mxu0 0.0
    %2597 = vmatprep.subr.mxu0 0.0
    %2598 = vmatpush2.msra.mxu0 0.0
    %2599 = vmatprep.subr.mxu0 0.0
    %2600 = vmatpush2.msra.mxu0 0.0
    %2601 = vmatprep.subr.mxu0 0.0
    %2602 = vmatpush2.msra.mxu0 0.0
    %2603 = vmatprep.subr.mxu0 0.0
    %2604 = vmatpush2.msra.mxu0 0.0
    %2605 = vmatprep.subr.mxu0 0.0
    %2606 = vmatpush2.msra.mxu0 0.0
    %2607 = vmatprep.mubr.f32.mxu0 0.0
    %2608 = vmatmul.mubr.f32.gmra.mxu0 %v2541
    %v2609 = vpop.f32.mrf.mxu0
    %v2610 = vadd.f32 0.0, %v2609
    %v2611 = vpop.f32.mrf.mxu0
    %2612 = vdwg.mxu0
    %2613 = vrot.lane.b32.xlu0 %v1943, 112
    %v2614 = vpop.permute.xlu0 %2613
    %2615 = vrot.lane.b32.xlu0 %v1943, 80
    %v2616 = vpop.permute.xlu0 %2615
    %v2617 = vsel %vm148, %v2614, 0
    %v2619 = vsel %vm148, %v2616, 0
    %2621 = vmatprep.subr.mxu0 0.0
    %2622 = vmatpush1.xpose.msra.mxu0 0.0
    %2623 = vmatprep.subr.mxu0 0.0
    %2624 = vmatpush1.xpose.msra.mxu0 0.0
    %2625 = vmatprep.subr.mxu0 0.0
    %2626 = vmatpush1.xpose.msra.mxu0 0.0
    %2627 = vmatprep.subr.mxu0 0.0
    %2628 = vmatpush1.xpose.msra.mxu0 0.0
    %2629 = vmatprep.subr.mxu0 0.0
    %2630 = vmatpush1.xpose.msra.mxu0 0.0
    %2631 = vmatprep.subr.mxu0 0.0
    %2632 = vmatpush1.xpose.msra.mxu0 0.0
    %2633 = vmatprep.subr.mxu0 0.0
    %2634 = vmatpush1.xpose.msra.mxu0 0.0
    %2635 = vmatprep.subr.mxu0 0.0
    %2636 = vmatpush1.xpose.msra.mxu0 0.0
    %2637 = vmatprep.subr.mxu0 0.0
    %2638 = vmatpush1.xpose.msra.mxu0 0.0
    %2639 = vmatprep.subr.mxu0 0.0
    %2640 = vmatpush1.xpose.msra.mxu0 0.0
    %2641 = vmatprep.subr.mxu0 0.0
    %2642 = vmatpush1.xpose.msra.mxu0 0.0
    %2643 = vmatprep.subr.mxu0 0.0
    %2644 = vmatpush1.xpose.msra.mxu0 0.0
    %2645 = vmatprep.subr.mxu0 0.0
    %2646 = vmatpush1.xpose.msra.mxu0 0.0
    %2647 = vmatprep.subr.mxu0 0.0
    %2648 = vmatpush1.xpose.msra.mxu0 0.0
    %2649 = vmatprep.subr.mxu0 0.0
    %2650 = vmatpush1.xpose.msra.mxu0 0.0
    %2651 = vmatprep.subr.mxu0 0.0
    %2652 = vmatpush1.xpose.msra.mxu0 %v2619
    %2653 = vmatprep.subr.mxu0 0.0
    %2654 = vmatpush2.xpose.msra.mxu0 0.0
    %2655 = vmatprep.subr.mxu0 0.0
    %2656 = vmatpush2.xpose.msra.mxu0 0.0
    %2657 = vmatprep.subr.mxu0 0.0
    %2658 = vmatpush2.xpose.msra.mxu0 0.0
    %2659 = vmatprep.subr.mxu0 0.0
    %2660 = vmatpush2.xpose.msra.mxu0 0.0
    %2661 = vmatprep.subr.mxu0 0.0
    %2662 = vmatpush2.xpose.msra.mxu0 0.0
    %2663 = vmatprep.subr.mxu0 0.0
    %2664 = vmatpush2.xpose.msra.mxu0 0.0
    %2665 = vmatprep.subr.mxu0 0.0
    %2666 = vmatpush2.xpose.msra.mxu0 0.0
    %2667 = vmatprep.subr.mxu0 0.0
    %2668 = vmatpush2.xpose.msra.mxu0 0.0
    %2669 = vmatprep.subr.mxu0 0.0
    %2670 = vmatpush2.xpose.msra.mxu0 0.0
    %2671 = vmatprep.subr.mxu0 0.0
    %2672 = vmatpush2.xpose.msra.mxu0 0.0
    %2673 = vmatprep.subr.mxu0 0.0
    %2674 = vmatpush2.xpose.msra.mxu0 0.0
    %2675 = vmatprep.subr.mxu0 0.0
    %2676 = vmatpush2.xpose.msra.mxu0 0.0
    %2677 = vmatprep.subr.mxu0 0.0
    %2678 = vmatpush2.xpose.msra.mxu0 0.0
    %2679 = vmatprep.subr.mxu0 0.0
    %2680 = vmatpush2.xpose.msra.mxu0 0.0
    %2681 = vmatprep.subr.mxu0 0.0
    %2682 = vmatpush2.xpose.msra.mxu0 0.0
    %2683 = vmatprep.subr.mxu0 0.0
    %2684 = vmatpush2.xpose.msra.mxu0 0.0
    %2685 = vmatprep.mubr.f32.mxu0 0.0
    %2686 = vmatmul.mubr.f32.gmra.mxu0 %v2617
    %v2687 = vpop.f32.mrf.mxu0
    %v2688 = vadd.f32 0.0, %v2687
    %v2689 = vpop.f32.mrf.mxu0
    %2690 = vdwg.mxu0
    %2691 = vrot.lane.b32.xlu0 %v1948, 112
    %v2692 = vpop.permute.xlu0 %2691
    %2693 = vrot.lane.b32.xlu0 %v1948, 80
    %v2694 = vpop.permute.xlu0 %2693
    %v2695 = vsel %vm148, %v2692, 0
    %v2697 = vsel %vm148, %v2694, 0
    %2699 = vmatprep.subr.mxu0 0.0
    %2700 = vmatpush1.xpose.msra.mxu0 0.0
    %2701 = vmatprep.subr.mxu0 0.0
    %2702 = vmatpush1.xpose.msra.mxu0 0.0
    %2703 = vmatprep.subr.mxu0 0.0
    %2704 = vmatpush1.xpose.msra.mxu0 0.0
    %2705 = vmatprep.subr.mxu0 0.0
    %2706 = vmatpush1.xpose.msra.mxu0 0.0
    %2707 = vmatprep.subr.mxu0 0.0
    %2708 = vmatpush1.xpose.msra.mxu0 0.0
    %2709 = vmatprep.subr.mxu0 0.0
    %2710 = vmatpush1.xpose.msra.mxu0 0.0
    %2711 = vmatprep.subr.mxu0 0.0
    %2712 = vmatpush1.xpose.msra.mxu0 0.0
    %2713 = vmatprep.subr.mxu0 0.0
    %2714 = vmatpush1.xpose.msra.mxu0 0.0
    %2715 = vmatprep.subr.mxu0 0.0
    %2716 = vmatpush1.xpose.msra.mxu0 0.0
    %2717 = vmatprep.subr.mxu0 0.0
    %2718 = vmatpush1.xpose.msra.mxu0 0.0
    %2719 = vmatprep.subr.mxu0 0.0
    %2720 = vmatpush1.xpose.msra.mxu0 0.0
    %2721 = vmatprep.subr.mxu0 0.0
    %2722 = vmatpush1.xpose.msra.mxu0 0.0
    %2723 = vmatprep.subr.mxu0 0.0
    %2724 = vmatpush1.xpose.msra.mxu0 0.0
    %2725 = vmatprep.subr.mxu0 0.0
    %2726 = vmatpush1.xpose.msra.mxu0 0.0
    %2727 = vmatprep.subr.mxu0 0.0
    %2728 = vmatpush1.xpose.msra.mxu0 0.0
    %2729 = vmatprep.subr.mxu0 0.0
    %2730 = vmatpush1.xpose.msra.mxu0 %v2697
    %2731 = vmatprep.subr.mxu0 0.0
    %2732 = vmatpush2.xpose.msra.mxu0 0.0
    %2733 = vmatprep.subr.mxu0 0.0
    %2734 = vmatpush2.xpose.msra.mxu0 0.0
    %2735 = vmatprep.subr.mxu0 0.0
    %2736 = vmatpush2.xpose.msra.mxu0 0.0
    %2737 = vmatprep.subr.mxu0 0.0
    %2738 = vmatpush2.xpose.msra.mxu0 0.0
    %2739 = vmatprep.subr.mxu0 0.0
    %2740 = vmatpush2.xpose.msra.mxu0 0.0
    %2741 = vmatprep.subr.mxu0 0.0
    %2742 = vmatpush2.xpose.msra.mxu0 0.0
    %2743 = vmatprep.subr.mxu0 0.0
    %2744 = vmatpush2.xpose.msra.mxu0 0.0
    %2745 = vmatprep.subr.mxu0 0.0
    %2746 = vmatpush2.xpose.msra.mxu0 0.0
    %2747 = vmatprep.subr.mxu0 0.0
    %2748 = vmatpush2.xpose.msra.mxu0 0.0
    %2749 = vmatprep.subr.mxu0 0.0
    %2750 = vmatpush2.xpose.msra.mxu0 0.0
    %2751 = vmatprep.subr.mxu0 0.0
    %2752 = vmatpush2.xpose.msra.mxu0 0.0
    %2753 = vmatprep.subr.mxu0 0.0
    %2754 = vmatpush2.xpose.msra.mxu0 0.0
    %2755 = vmatprep.subr.mxu0 0.0
    %2756 = vmatpush2.xpose.msra.mxu0 0.0
    %2757 = vmatprep.subr.mxu0 0.0
    %2758 = vmatpush2.xpose.msra.mxu0 0.0
    %2759 = vmatprep.subr.mxu0 0.0
    %2760 = vmatpush2.xpose.msra.mxu0 0.0
    %2761 = vmatprep.subr.mxu0 0.0
    %2762 = vmatpush2.xpose.msra.mxu0 0.0
    %2763 = vmatprep.mubr.f32.mxu0 0.0
    %2764 = vmatmul.mubr.f32.gmra.mxu0 %v2695
    %v2765 = vpop.f32.mrf.mxu0
    %v2766 = vadd.f32 0.0, %v2765
    %v2767 = vpop.f32.mrf.mxu0
    %2768 = vdwg.mxu0
    %v2769 = vmul.f32 %v2688, 0.35355338
    %v2770 = vmul.f32 %v2766, 0.35355338
    %v2771 = vsel %vm148, %v2769, -inf
    %2772 = vmax.xlane.f32.xlu0 %v2771
    %v2773 = vpop.xlane.xlu0 %2772
    %v2774 = vsel %vm148, %v2770, -inf
    %2775 = vmax.xlane.f32.xlu0 %v2774
    %v2776 = vpop.xlane.xlu0 %2775
    %v2777 = vsub.f32 %v2769, %v2773
    %v2778 = vsub.f32 %v2770, %v2776
    %v2779 = vmul.f32 %v2777, 1.442695
    %v2780 = vpow.pop %v2779
    %v2781 = vmul.f32 %v2778, 1.442695
    %v2782 = vpow.pop %v2781
    %v2783 = vsel %vm148, %v2780, 0.0
    %2784 = vadd.xlane.f32.xlu0 %v2783
    %v2785 = vpop.xlane.xlu0 %2784
    %v2786 = vsel %vm148, %v2782, 0.0
    %2787 = vadd.xlane.f32.xlu0 %v2786
    %v2788 = vpop.xlane.xlu0 %2787
    %v2789 = vrcp.pop %v2785
    %v2790 = vmul.f32 %v2780, %v2789
    %v2791 = vrcp.pop %v2788
    %v2792 = vmul.f32 %v2782, %v2791
    %2793 = vrot.lane.b32.xlu0 %v1943, 48
    %v2794 = vpop.permute.xlu0 %2793
    %v2797 = vsel %vm148, %v2790, 0
    %2799 = vmatprep.subr.mxu0 0.0
    %2800 = vmatpush1.msra.mxu0 0.0
    %2801 = vmatprep.subr.mxu0 0.0
    %2802 = vmatpush1.msra.mxu0 0.0
    %2803 = vmatprep.subr.mxu0 0.0
    %2804 = vmatpush1.msra.mxu0 0.0
    %2805 = vmatprep.subr.mxu0 0.0
    %2806 = vmatpush1.msra.mxu0 0.0
    %2807 = vmatprep.subr.mxu0 0.0
    %2808 = vmatpush1.msra.mxu0 0.0
    %2809 = vmatprep.subr.mxu0 0.0
    %2810 = vmatpush1.msra.mxu0 0.0
    %2811 = vmatprep.subr.mxu0 0.0
    %2812 = vmatpush1.msra.mxu0 0.0
    %2813 = vmatprep.subr.mxu0 0.0
    %2814 = vmatpush1.msra.mxu0 0.0
    %2815 = vmatprep.subr.mxu0 0.0
    %2816 = vmatpush1.msra.mxu0 0.0
    %2817 = vmatprep.subr.mxu0 0.0
    %2818 = vmatpush1.msra.mxu0 0.0
    %2819 = vmatprep.subr.mxu0 0.0
    %2820 = vmatpush1.msra.mxu0 0.0
    %2821 = vmatprep.subr.mxu0 0.0
    %2822 = vmatpush1.msra.mxu0 0.0
    %2823 = vmatprep.subr.mxu0 0.0
    %2824 = vmatpush1.msra.mxu0 0.0
    %2825 = vmatprep.subr.mxu0 0.0
    %2826 = vmatpush1.msra.mxu0 0.0
    %2827 = vmatprep.subr.mxu0 0.0
    %2828 = vmatpush1.msra.mxu0 0.0
    %2829 = vmatprep.subr.mxu0 0.0
    %2830 = vmatpush1.msra.mxu0 %v2794
    %2831 = vmatprep.subr.mxu0 0.0
    %2832 = vmatpush2.msra.mxu0 0.0
    %2833 = vmatprep.subr.mxu0 0.0
    %2834 = vmatpush2.msra.mxu0 0.0
    %2835 = vmatprep.subr.mxu0 0.0
    %2836 = vmatpush2.msra.mxu0 0.0
    %2837 = vmatprep.subr.mxu0 0.0
    %2838 = vmatpush2.msra.mxu0 0.0
    %2839 = vmatprep.subr.mxu0 0.0
    %2840 = vmatpush2.msra.mxu0 0.0
    %2841 = vmatprep.subr.mxu0 0.0
    %2842 = vmatpush2.msra.mxu0 0.0
    %2843 = vmatprep.subr.mxu0 0.0
    %2844 = vmatpush2.msra.mxu0 0.0
    %2845 = vmatprep.subr.mxu0 0.0
    %2846 = vmatpush2.msra.mxu0 0.0
    %2847 = vmatprep.subr.mxu0 0.0
    %2848 = vmatpush2.msra.mxu0 0.0
    %2849 = vmatprep.subr.mxu0 0.0
    %2850 = vmatpush2.msra.mxu0 0.0
    %2851 = vmatprep.subr.mxu0 0.0
    %2852 = vmatpush2.msra.mxu0 0.0
    %2853 = vmatprep.subr.mxu0 0.0
    %2854 = vmatpush2.msra.mxu0 0.0
    %2855 = vmatprep.subr.mxu0 0.0
    %2856 = vmatpush2.msra.mxu0 0.0
    %2857 = vmatprep.subr.mxu0 0.0
    %2858 = vmatpush2.msra.mxu0 0.0
    %2859 = vmatprep.subr.mxu0 0.0
    %2860 = vmatpush2.msra.mxu0 0.0
    %2861 = vmatprep.subr.mxu0 0.0
    %2862 = vmatpush2.msra.mxu0 0.0
    %2863 = vmatprep.mubr.f32.mxu0 0.0
    %2864 = vmatmul.mubr.f32.gmra.mxu0 %v2797
    %v2865 = vpop.f32.mrf.mxu0
    %v2866 = vadd.f32 0.0, %v2865
    %v2867 = vpop.f32.mrf.mxu0
    %2868 = vdwg.mxu0
    %2869 = vrot.lane.b32.xlu0 %v1948, 48
    %v2870 = vpop.permute.xlu0 %2869
    %v2873 = vsel %vm148, %v2792, 0
    %2875 = vmatprep.subr.mxu0 0.0
    %2876 = vmatpush1.msra.mxu0 0.0
    %2877 = vmatprep.subr.mxu0 0.0
    %2878 = vmatpush1.msra.mxu0 0.0
    %2879 = vmatprep.subr.mxu0 0.0
    %2880 = vmatpush1.msra.mxu0 0.0
    %2881 = vmatprep.subr.mxu0 0.0
    %2882 = vmatpush1.msra.mxu0 0.0
    %2883 = vmatprep.subr.mxu0 0.0
    %2884 = vmatpush1.msra.mxu0 0.0
    %2885 = vmatprep.subr.mxu0 0.0
    %2886 = vmatpush1.msra.mxu0 0.0
    %2887 = vmatprep.subr.mxu0 0.0
    %2888 = vmatpush1.msra.mxu0 0.0
    %2889 = vmatprep.subr.mxu0 0.0
    %2890 = vmatpush1.msra.mxu0 0.0
    %2891 = vmatprep.subr.mxu0 0.0
    %2892 = vmatpush1.msra.mxu0 0.0
    %2893 = vmatprep.subr.mxu0 0.0
    %2894 = vmatpush1.msra.mxu0 0.0
    %2895 = vmatprep.subr.mxu0 0.0
    %2896 = vmatpush1.msra.mxu0 0.0
    %2897 = vmatprep.subr.mxu0 0.0
    %2898 = vmatpush1.msra.mxu0 0.0
    %2899 = vmatprep.subr.mxu0 0.0
    %2900 = vmatpush1.msra.mxu0 0.0
    %2901 = vmatprep.subr.mxu0 0.0
    %2902 = vmatpush1.msra.mxu0 0.0
    %2903 = vmatprep.subr.mxu0 0.0
    %2904 = vmatpush1.msra.mxu0 0.0
    %2905 = vmatprep.subr.mxu0 0.0
    %2906 = vmatpush1.msra.mxu0 %v2870
    %2907 = vmatprep.subr.mxu0 0.0
    %2908 = vmatpush2.msra.mxu0 0.0
    %2909 = vmatprep.subr.mxu0 0.0
    %2910 = vmatpush2.msra.mxu0 0.0
    %2911 = vmatprep.subr.mxu0 0.0
    %2912 = vmatpush2.msra.mxu0 0.0
    %2913 = vmatprep.subr.mxu0 0.0
    %2914 = vmatpush2.msra.mxu0 0.0
    %2915 = vmatprep.subr.mxu0 0.0
    %2916 = vmatpush2.msra.mxu0 0.0
    %2917 = vmatprep.subr.mxu0 0.0
    %2918 = vmatpush2.msra.mxu0 0.0
    %2919 = vmatprep.subr.mxu0 0.0
    %2920 = vmatpush2.msra.mxu0 0.0
    %2921 = vmatprep.subr.mxu0 0.0
    %2922 = vmatpush2.msra.mxu0 0.0
    %2923 = vmatprep.subr.mxu0 0.0
    %2924 = vmatpush2.msra.mxu0 0.0
    %2925 = vmatprep.subr.mxu0 0.0
    %2926 = vmatpush2.msra.mxu0 0.0
    %2927 = vmatprep.subr.mxu0 0.0
    %2928 = vmatpush2.msra.mxu0 0.0
    %2929 = vmatprep.subr.mxu0 0.0
    %2930 = vmatpush2.msra.mxu0 0.0
    %2931 = vmatprep.subr.mxu0 0.0
    %2932 = vmatpush2.msra.mxu0 0.0
    %2933 = vmatprep.subr.mxu0 0.0
    %2934 = vmatpush2.msra.mxu0 0.0
    %2935 = vmatprep.subr.mxu0 0.0
    %2936 = vmatpush2.msra.mxu0 0.0
    %2937 = vmatprep.subr.mxu0 0.0
    %2938 = vmatpush2.msra.mxu0 0.0
    %2939 = vmatprep.mubr.f32.mxu0 0.0
    %2940 = vmatmul.mubr.f32.gmra.mxu0 %v2873
    %v2941 = vpop.f32.mrf.mxu0
    %v2942 = vadd.f32 0.0, %v2941
    %v2943 = vpop.f32.mrf.mxu0
    %2944 = vdwg.mxu0
    %2945 = vrot.lane.b32.xlu0 %v1943, 104
    %v2946 = vpop.permute.xlu0 %2945
    %2947 = vrot.lane.b32.xlu0 %v1943, 72
    %v2948 = vpop.permute.xlu0 %2947
    %v2949 = vsel %vm148, %v2946, 0
    %v2951 = vsel %vm148, %v2948, 0
    %2953 = vmatprep.subr.mxu0 0.0
    %2954 = vmatpush1.xpose.msra.mxu0 0.0
    %2955 = vmatprep.subr.mxu0 0.0
    %2956 = vmatpush1.xpose.msra.mxu0 0.0
    %2957 = vmatprep.subr.mxu0 0.0
    %2958 = vmatpush1.xpose.msra.mxu0 0.0
    %2959 = vmatprep.subr.mxu0 0.0
    %2960 = vmatpush1.xpose.msra.mxu0 0.0
    %2961 = vmatprep.subr.mxu0 0.0
    %2962 = vmatpush1.xpose.msra.mxu0 0.0
    %2963 = vmatprep.subr.mxu0 0.0
    %2964 = vmatpush1.xpose.msra.mxu0 0.0
    %2965 = vmatprep.subr.mxu0 0.0
    %2966 = vmatpush1.xpose.msra.mxu0 0.0
    %2967 = vmatprep.subr.mxu0 0.0
    %2968 = vmatpush1.xpose.msra.mxu0 0.0
    %2969 = vmatprep.subr.mxu0 0.0
    %2970 = vmatpush1.xpose.msra.mxu0 0.0
    %2971 = vmatprep.subr.mxu0 0.0
    %2972 = vmatpush1.xpose.msra.mxu0 0.0
    %2973 = vmatprep.subr.mxu0 0.0
    %2974 = vmatpush1.xpose.msra.mxu0 0.0
    %2975 = vmatprep.subr.mxu0 0.0
    %2976 = vmatpush1.xpose.msra.mxu0 0.0
    %2977 = vmatprep.subr.mxu0 0.0
    %2978 = vmatpush1.xpose.msra.mxu0 0.0
    %2979 = vmatprep.subr.mxu0 0.0
    %2980 = vmatpush1.xpose.msra.mxu0 0.0
    %2981 = vmatprep.subr.mxu0 0.0
    %2982 = vmatpush1.xpose.msra.mxu0 0.0
    %2983 = vmatprep.subr.mxu0 0.0
    %2984 = vmatpush1.xpose.msra.mxu0 %v2951
    %2985 = vmatprep.subr.mxu0 0.0
    %2986 = vmatpush2.xpose.msra.mxu0 0.0
    %2987 = vmatprep.subr.mxu0 0.0
    %2988 = vmatpush2.xpose.msra.mxu0 0.0
    %2989 = vmatprep.subr.mxu0 0.0
    %2990 = vmatpush2.xpose.msra.mxu0 0.0
    %2991 = vmatprep.subr.mxu0 0.0
    %2992 = vmatpush2.xpose.msra.mxu0 0.0
    %2993 = vmatprep.subr.mxu0 0.0
    %2994 = vmatpush2.xpose.msra.mxu0 0.0
    %2995 = vmatprep.subr.mxu0 0.0
    %2996 = vmatpush2.xpose.msra.mxu0 0.0
    %2997 = vmatprep.subr.mxu0 0.0
    %2998 = vmatpush2.xpose.msra.mxu0 0.0
    %2999 = vmatprep.subr.mxu0 0.0
    %3000 = vmatpush2.xpose.msra.mxu0 0.0
    %3001 = vmatprep.subr.mxu0 0.0
    %3002 = vmatpush2.xpose.msra.mxu0 0.0
    %3003 = vmatprep.subr.mxu0 0.0
    %3004 = vmatpush2.xpose.msra.mxu0 0.0
    %3005 = vmatprep.subr.mxu0 0.0
    %3006 = vmatpush2.xpose.msra.mxu0 0.0
    %3007 = vmatprep.subr.mxu0 0.0
    %3008 = vmatpush2.xpose.msra.mxu0 0.0
    %3009 = vmatprep.subr.mxu0 0.0
    %3010 = vmatpush2.xpose.msra.mxu0 0.0
    %3011 = vmatprep.subr.mxu0 0.0
    %3012 = vmatpush2.xpose.msra.mxu0 0.0
    %3013 = vmatprep.subr.mxu0 0.0
    %3014 = vmatpush2.xpose.msra.mxu0 0.0
    %3015 = vmatprep.subr.mxu0 0.0
    %3016 = vmatpush2.xpose.msra.mxu0 0.0
    %3017 = vmatprep.mubr.f32.mxu0 0.0
    %3018 = vmatmul.mubr.f32.gmra.mxu0 %v2949
    %v3019 = vpop.f32.mrf.mxu0
    %v3020 = vadd.f32 0.0, %v3019
    %v3021 = vpop.f32.mrf.mxu0
    %3022 = vdwg.mxu0
    %3023 = vrot.lane.b32.xlu0 %v1948, 104
    %v3024 = vpop.permute.xlu0 %3023
    %3025 = vrot.lane.b32.xlu0 %v1948, 72
    %v3026 = vpop.permute.xlu0 %3025
    %v3027 = vsel %vm148, %v3024, 0
    %v3029 = vsel %vm148, %v3026, 0
    %3031 = vmatprep.subr.mxu0 0.0
    %3032 = vmatpush1.xpose.msra.mxu0 0.0
    %3033 = vmatprep.subr.mxu0 0.0
    %3034 = vmatpush1.xpose.msra.mxu0 0.0
    %3035 = vmatprep.subr.mxu0 0.0
    %3036 = vmatpush1.xpose.msra.mxu0 0.0
    %3037 = vmatprep.subr.mxu0 0.0
    %3038 = vmatpush1.xpose.msra.mxu0 0.0
    %3039 = vmatprep.subr.mxu0 0.0
    %3040 = vmatpush1.xpose.msra.mxu0 0.0
    %3041 = vmatprep.subr.mxu0 0.0
    %3042 = vmatpush1.xpose.msra.mxu0 0.0
    %3043 = vmatprep.subr.mxu0 0.0
    %3044 = vmatpush1.xpose.msra.mxu0 0.0
    %3045 = vmatprep.subr.mxu0 0.0
    %3046 = vmatpush1.xpose.msra.mxu0 0.0
    %3047 = vmatprep.subr.mxu0 0.0
    %3048 = vmatpush1.xpose.msra.mxu0 0.0
    %3049 = vmatprep.subr.mxu0 0.0
    %3050 = vmatpush1.xpose.msra.mxu0 0.0
    %3051 = vmatprep.subr.mxu0 0.0
    %3052 = vmatpush1.xpose.msra.mxu0 0.0
    %3053 = vmatprep.subr.mxu0 0.0
    %3054 = vmatpush1.xpose.msra.mxu0 0.0
    %3055 = vmatprep.subr.mxu0 0.0
    %3056 = vmatpush1.xpose.msra.mxu0 0.0
    %3057 = vmatprep.subr.mxu0 0.0
    %3058 = vmatpush1.xpose.msra.mxu0 0.0
    %3059 = vmatprep.subr.mxu0 0.0
    %3060 = vmatpush1.xpose.msra.mxu0 0.0
    %3061 = vmatprep.subr.mxu0 0.0
    %3062 = vmatpush1.xpose.msra.mxu0 %v3029
    %3063 = vmatprep.subr.mxu0 0.0
    %3064 = vmatpush2.xpose.msra.mxu0 0.0
    %3065 = vmatprep.subr.mxu0 0.0
    %3066 = vmatpush2.xpose.msra.mxu0 0.0
    %3067 = vmatprep.subr.mxu0 0.0
    %3068 = vmatpush2.xpose.msra.mxu0 0.0
    %3069 = vmatprep.subr.mxu0 0.0
    %3070 = vmatpush2.xpose.msra.mxu0 0.0
    %3071 = vmatprep.subr.mxu0 0.0
    %3072 = vmatpush2.xpose.msra.mxu0 0.0
    %3073 = vmatprep.subr.mxu0 0.0
    %3074 = vmatpush2.xpose.msra.mxu0 0.0
    %3075 = vmatprep.subr.mxu0 0.0
    %3076 = vmatpush2.xpose.msra.mxu0 0.0
    %3077 = vmatprep.subr.mxu0 0.0
    %3078 = vmatpush2.xpose.msra.mxu0 0.0
    %3079 = vmatprep.subr.mxu0 0.0
    %3080 = vmatpush2.xpose.msra.mxu0 0.0
    %3081 = vmatprep.subr.mxu0 0.0
    %3082 = vmatpush2.xpose.msra.mxu0 0.0
    %3083 = vmatprep.subr.mxu0 0.0
    %3084 = vmatpush2.xpose.msra.mxu0 0.0
    %3085 = vmatprep.subr.mxu0 0.0
    %3086 = vmatpush2.xpose.msra.mxu0 0.0
    %3087 = vmatprep.subr.mxu0 0.0
    %3088 = vmatpush2.xpose.msra.mxu0 0.0
    %3089 = vmatprep.subr.mxu0 0.0
    %3090 = vmatpush2.xpose.msra.mxu0 0.0
    %3091 = vmatprep.subr.mxu0 0.0
    %3092 = vmatpush2.xpose.msra.mxu0 0.0
    %3093 = vmatprep.subr.mxu0 0.0
    %3094 = vmatpush2.xpose.msra.mxu0 0.0
    %3095 = vmatprep.mubr.f32.mxu0 0.0
    %3096 = vmatmul.mubr.f32.gmra.mxu0 %v3027
    %v3097 = vpop.f32.mrf.mxu0
    %v3098 = vadd.f32 0.0, %v3097
    %v3099 = vpop.f32.mrf.mxu0
    %3100 = vdwg.mxu0
    %v3101 = vmul.f32 %v3020, 0.35355338
    %v3102 = vmul.f32 %v3098, 0.35355338
    %v3103 = vsel %vm148, %v3101, -inf
    %3104 = vmax.xlane.f32.xlu0 %v3103
    %v3105 = vpop.xlane.xlu0 %3104
    %v3106 = vsel %vm148, %v3102, -inf
    %3107 = vmax.xlane.f32.xlu0 %v3106
    %v3108 = vpop.xlane.xlu0 %3107
    %v3109 = vsub.f32 %v3101, %v3105
    %v3110 = vsub.f32 %v3102, %v3108
    %v3111 = vmul.f32 %v3109, 1.442695
    %v3112 = vpow.pop %v3111
    %v3113 = vmul.f32 %v3110, 1.442695
    %v3114 = vpow.pop %v3113
    %v3115 = vsel %vm148, %v3112, 0.0
    %3116 = vadd.xlane.f32.xlu0 %v3115
    %v3117 = vpop.xlane.xlu0 %3116
    %v3118 = vsel %vm148, %v3114, 0.0
    %3119 = vadd.xlane.f32.xlu0 %v3118
    %v3120 = vpop.xlane.xlu0 %3119
    %v3121 = vrcp.pop %v3117
    %v3122 = vmul.f32 %v3112, %v3121
    %v3123 = vrcp.pop %v3120
    %v3124 = vmul.f32 %v3114, %v3123
    %3125 = vrot.lane.b32.xlu0 %v1943, 40
    %v3126 = vpop.permute.xlu0 %3125
    %v3129 = vsel %vm148, %v3122, 0
    %3131 = vmatprep.subr.mxu0 0.0
    %3132 = vmatpush1.msra.mxu0 0.0
    %3133 = vmatprep.subr.mxu0 0.0
    %3134 = vmatpush1.msra.mxu0 0.0
    %3135 = vmatprep.subr.mxu0 0.0
    %3136 = vmatpush1.msra.mxu0 0.0
    %3137 = vmatprep.subr.mxu0 0.0
    %3138 = vmatpush1.msra.mxu0 0.0
    %3139 = vmatprep.subr.mxu0 0.0
    %3140 = vmatpush1.msra.mxu0 0.0
    %3141 = vmatprep.subr.mxu0 0.0
    %3142 = vmatpush1.msra.mxu0 0.0
    %3143 = vmatprep.subr.mxu0 0.0
    %3144 = vmatpush1.msra.mxu0 0.0
    %3145 = vmatprep.subr.mxu0 0.0
    %3146 = vmatpush1.msra.mxu0 0.0
    %3147 = vmatprep.subr.mxu0 0.0
    %3148 = vmatpush1.msra.mxu0 0.0
    %3149 = vmatprep.subr.mxu0 0.0
    %3150 = vmatpush1.msra.mxu0 0.0
    %3151 = vmatprep.subr.mxu0 0.0
    %3152 = vmatpush1.msra.mxu0 0.0
    %3153 = vmatprep.subr.mxu0 0.0
    %3154 = vmatpush1.msra.mxu0 0.0
    %3155 = vmatprep.subr.mxu0 0.0
    %3156 = vmatpush1.msra.mxu0 0.0
    %3157 = vmatprep.subr.mxu0 0.0
    %3158 = vmatpush1.msra.mxu0 0.0
    %3159 = vmatprep.subr.mxu0 0.0
    %3160 = vmatpush1.msra.mxu0 0.0
    %3161 = vmatprep.subr.mxu0 0.0
    %3162 = vmatpush1.msra.mxu0 %v3126
    %3163 = vmatprep.subr.mxu0 0.0
    %3164 = vmatpush2.msra.mxu0 0.0
    %3165 = vmatprep.subr.mxu0 0.0
    %3166 = vmatpush2.msra.mxu0 0.0
    %3167 = vmatprep.subr.mxu0 0.0
    %3168 = vmatpush2.msra.mxu0 0.0
    %3169 = vmatprep.subr.mxu0 0.0
    %3170 = vmatpush2.msra.mxu0 0.0
    %3171 = vmatprep.subr.mxu0 0.0
    %3172 = vmatpush2.msra.mxu0 0.0
    %3173 = vmatprep.subr.mxu0 0.0
    %3174 = vmatpush2.msra.mxu0 0.0
    %3175 = vmatprep.subr.mxu0 0.0
    %3176 = vmatpush2.msra.mxu0 0.0
    %3177 = vmatprep.subr.mxu0 0.0
    %3178 = vmatpush2.msra.mxu0 0.0
    %3179 = vmatprep.subr.mxu0 0.0
    %3180 = vmatpush2.msra.mxu0 0.0
    %3181 = vmatprep.subr.mxu0 0.0
    %3182 = vmatpush2.msra.mxu0 0.0
    %3183 = vmatprep.subr.mxu0 0.0
    %3184 = vmatpush2.msra.mxu0 0.0
    %3185 = vmatprep.subr.mxu0 0.0
    %3186 = vmatpush2.msra.mxu0 0.0
    %3187 = vmatprep.subr.mxu0 0.0
    %3188 = vmatpush2.msra.mxu0 0.0
    %3189 = vmatprep.subr.mxu0 0.0
    %3190 = vmatpush2.msra.mxu0 0.0
    %3191 = vmatprep.subr.mxu0 0.0
    %3192 = vmatpush2.msra.mxu0 0.0
    %3193 = vmatprep.subr.mxu0 0.0
    %3194 = vmatpush2.msra.mxu0 0.0
    %3195 = vmatprep.mubr.f32.mxu0 0.0
    %3196 = vmatmul.mubr.f32.gmra.mxu0 %v3129
    %v3197 = vpop.f32.mrf.mxu0
    %v3198 = vadd.f32 0.0, %v3197
    %v3199 = vpop.f32.mrf.mxu0
    %3200 = vdwg.mxu0
    %3201 = vrot.lane.b32.xlu0 %v1948, 40
    %v3202 = vpop.permute.xlu0 %3201
    %v3205 = vsel %vm148, %v3124, 0
    %3207 = vmatprep.subr.mxu0 0.0
    %3208 = vmatpush1.msra.mxu0 0.0
    %3209 = vmatprep.subr.mxu0 0.0
    %3210 = vmatpush1.msra.mxu0 0.0
    %3211 = vmatprep.subr.mxu0 0.0
    %3212 = vmatpush1.msra.mxu0 0.0
    %3213 = vmatprep.subr.mxu0 0.0
    %3214 = vmatpush1.msra.mxu0 0.0
    %3215 = vmatprep.subr.mxu0 0.0
    %3216 = vmatpush1.msra.mxu0 0.0
    %3217 = vmatprep.subr.mxu0 0.0
    %3218 = vmatpush1.msra.mxu0 0.0
    %3219 = vmatprep.subr.mxu0 0.0
    %3220 = vmatpush1.msra.mxu0 0.0
    %3221 = vmatprep.subr.mxu0 0.0
    %3222 = vmatpush1.msra.mxu0 0.0
    %3223 = vmatprep.subr.mxu0 0.0
    %3224 = vmatpush1.msra.mxu0 0.0
    %3225 = vmatprep.subr.mxu0 0.0
    %3226 = vmatpush1.msra.mxu0 0.0
    %3227 = vmatprep.subr.mxu0 0.0
    %3228 = vmatpush1.msra.mxu0 0.0
    %3229 = vmatprep.subr.mxu0 0.0
    %3230 = vmatpush1.msra.mxu0 0.0
    %3231 = vmatprep.subr.mxu0 0.0
    %3232 = vmatpush1.msra.mxu0 0.0
    %3233 = vmatprep.subr.mxu0 0.0
    %3234 = vmatpush1.msra.mxu0 0.0
    %3235 = vmatprep.subr.mxu0 0.0
    %3236 = vmatpush1.msra.mxu0 0.0
    %3237 = vmatprep.subr.mxu0 0.0
    %3238 = vmatpush1.msra.mxu0 %v3202
    %3239 = vmatprep.subr.mxu0 0.0
    %3240 = vmatpush2.msra.mxu0 0.0
    %3241 = vmatprep.subr.mxu0 0.0
    %3242 = vmatpush2.msra.mxu0 0.0
    %3243 = vmatprep.subr.mxu0 0.0
    %3244 = vmatpush2.msra.mxu0 0.0
    %3245 = vmatprep.subr.mxu0 0.0
    %3246 = vmatpush2.msra.mxu0 0.0
    %3247 = vmatprep.subr.mxu0 0.0
    %3248 = vmatpush2.msra.mxu0 0.0
    %3249 = vmatprep.subr.mxu0 0.0
    %3250 = vmatpush2.msra.mxu0 0.0
    %3251 = vmatprep.subr.mxu0 0.0
    %3252 = vmatpush2.msra.mxu0 0.0
    %3253 = vmatprep.subr.mxu0 0.0
    %3254 = vmatpush2.msra.mxu0 0.0
    %3255 = vmatprep.subr.mxu0 0.0
    %3256 = vmatpush2.msra.mxu0 0.0
    %3257 = vmatprep.subr.mxu0 0.0
    %3258 = vmatpush2.msra.mxu0 0.0
    %3259 = vmatprep.subr.mxu0 0.0
    %3260 = vmatpush2.msra.mxu0 0.0
    %3261 = vmatprep.subr.mxu0 0.0
    %3262 = vmatpush2.msra.mxu0 0.0
    %3263 = vmatprep.subr.mxu0 0.0
    %3264 = vmatpush2.msra.mxu0 0.0
    %3265 = vmatprep.subr.mxu0 0.0
    %3266 = vmatpush2.msra.mxu0 0.0
    %3267 = vmatprep.subr.mxu0 0.0
    %3268 = vmatpush2.msra.mxu0 0.0
    %3269 = vmatprep.subr.mxu0 0.0
    %3270 = vmatpush2.msra.mxu0 0.0
    %3271 = vmatprep.mubr.f32.mxu0 0.0
    %3272 = vmatmul.mubr.f32.gmra.mxu0 %v3205
    %v3273 = vpop.f32.mrf.mxu0
    %v3274 = vadd.f32 0.0, %v3273
    %v3275 = vpop.f32.mrf.mxu0
    %3276 = vdwg.mxu0
    %3279 = vrot.lane.b32.xlu0 %v2534, 8
    %v3280 = vpop.permute.xlu0 %3279
    %3281 = vrot.lane.b32.xlu0 %v2610, 8
    %v3282 = vpop.permute.xlu0 %3281
    %3287 = vrot.lane.b32.xlu0 %v2866, 16
    %v3288 = vpop.permute.xlu0 %3287
    %3289 = vrot.lane.b32.xlu0 %v2942, 16
    %v3290 = vpop.permute.xlu0 %3289
    %3295 = vrot.lane.b32.xlu0 %v3198, 24
    %v3296 = vpop.permute.xlu0 %3295
    %3297 = vrot.lane.b32.xlu0 %v3274, 24
    %v3298 = vpop.permute.xlu0 %3297
    %v3301 = vsel %vm148, %v2202, %v3280
    %v3302 = vsel %vm148, %v2278, %v3282
    %v3303 = vsel %vm1498, %v3301, %v3288
    %v3304 = vsel %vm1498, %v3302, %v3290
    %v3305 = vsel %vm1501, %v3303, %v3296
    %v3306 = vsel %vm1501, %v3304, %v3298
    %s3307 = scalar_lea.vmem %s2, 32
    %v3308 = vld [vmem:[%s3307] sm:$0xff]
    %v3309 = vld [vmem:[%s3307 + $0x8] sm:$0xff]
    %v3310 = vld [vmem:[%s3307 + $0x10] sm:$0xff]
    %v3311 = vld [vmem:[%s3307 + $0x18] sm:$0xff]
    %v3312 = vlaneseq
    %v3313 = vshrl.u32 %v3312, 7
    %v3314 = vsub.s32 1, %v3313
    %v3315 = vrot.slane %v1860, %v3314
    %v3317 = vsel %vm63, %v3305, 0
    %v3320 = vsel %vm63, %v3306, 0
    %3322 = vmatprep.subr.mxu0 0.0
    %3323 = vmatpush1.msra.mxu0 0.0
    %3324 = vmatprep.subr.mxu0 0.0
    %3325 = vmatpush1.msra.mxu0 0.0
    %3326 = vmatprep.subr.mxu0 0.0
    %3327 = vmatpush1.msra.mxu0 0.0
    %3328 = vmatprep.subr.mxu0 0.0
    %3329 = vmatpush1.msra.mxu0 0.0
    %3330 = vmatprep.subr.mxu0 0.0
    %3331 = vmatpush1.msra.mxu0 0.0
    %3332 = vmatprep.subr.mxu0 0.0
    %3333 = vmatpush1.msra.mxu0 0.0
    %3334 = vmatprep.subr.mxu0 0.0
    %3335 = vmatpush1.msra.mxu0 0.0
    %3336 = vmatprep.subr.mxu0 0.0
    %3337 = vmatpush1.msra.mxu0 0.0
    %3338 = vmatprep.subr.mxu0 0.0
    %3339 = vmatpush1.msra.mxu0 0.0
    %3340 = vmatprep.subr.mxu0 0.0
    %3341 = vmatpush1.msra.mxu0 0.0
    %3342 = vmatprep.subr.mxu0 0.0
    %3343 = vmatpush1.msra.mxu0 0.0
    %3344 = vmatprep.subr.mxu0 0.0
    %3345 = vmatpush1.msra.mxu0 0.0
    %3346 = vmatprep.subr.mxu0 0.0
    %3347 = vmatpush1.msra.mxu0 %v3311
    %3348 = vmatprep.subr.mxu0 0.0
    %3349 = vmatpush1.msra.mxu0 %v3310
    %3350 = vmatprep.subr.mxu0 0.0
    %3351 = vmatpush1.msra.mxu0 %v3309
    %3352 = vmatprep.subr.mxu0 0.0
    %3353 = vmatpush1.msra.mxu0 %v3308
    %3354 = vmatprep.subr.mxu0 0.0
    %3355 = vmatpush2.msra.mxu0 0.0
    %3356 = vmatprep.subr.mxu0 0.0
    %3357 = vmatpush2.msra.mxu0 0.0
    %3358 = vmatprep.subr.mxu0 0.0
    %3359 = vmatpush2.msra.mxu0 0.0
    %3360 = vmatprep.subr.mxu0 0.0
    %3361 = vmatpush2.msra.mxu0 0.0
    %3362 = vmatprep.subr.mxu0 0.0
    %3363 = vmatpush2.msra.mxu0 0.0
    %3364 = vmatprep.subr.mxu0 0.0
    %3365 = vmatpush2.msra.mxu0 0.0
    %3366 = vmatprep.subr.mxu0 0.0
    %3367 = vmatpush2.msra.mxu0 0.0
    %3368 = vmatprep.subr.mxu0 0.0
    %3369 = vmatpush2.msra.mxu0 0.0
    %3370 = vmatprep.subr.mxu0 0.0
    %3371 = vmatpush2.msra.mxu0 0.0
    %3372 = vmatprep.subr.mxu0 0.0
    %3373 = vmatpush2.msra.mxu0 0.0
    %3374 = vmatprep.subr.mxu0 0.0
    %3375 = vmatpush2.msra.mxu0 0.0
    %3376 = vmatprep.subr.mxu0 0.0
    %3377 = vmatpush2.msra.mxu0 0.0
    %3378 = vmatprep.subr.mxu0 0.0
    %3379 = vmatpush2.msra.mxu0 0.0
    %3380 = vmatprep.subr.mxu0 0.0
    %3381 = vmatpush2.msra.mxu0 0.0
    %3382 = vmatprep.subr.mxu0 0.0
    %3383 = vmatpush2.msra.mxu0 0.0
    %3384 = vmatprep.subr.mxu0 0.0
    %3385 = vmatpush2.msra.mxu0 0.0
    %3386 = vmatprep.mubr.f32.mxu0 0.0
    %3387 = vmatmul.mubr.f32.gmra.mxu0 %v3317
    %v3388 = vpop.f32.mrf.mxu0
    %v3389 = vadd.f32 %v3315, %v3388
    %v3390 = vpop.f32.mrf.mxu0
    %3391 = vmatprep.mubr.f32.mxu0 0.0
    %3392 = vmatmul.mubr.f32.gmra.mxu0 %v3320
    %v3393 = vpop.f32.mrf.mxu0
    %v3394 = vadd.f32 %v3315, %v3393
    %v3395 = vpop.f32.mrf.mxu0
    %3396 = vdwg.mxu0
    %v3397 = vadd.f32 %v1857, %v3389
    %v3398 = vadd.f32 %v1858, %v3394
    %v3399 = vsel %vm63, %v3397, 0.0
    %3400 = vadd.xlane.f32.xlu0 %v3399
    %v3401 = vpop.xlane.xlu0 %3400
    %v3402 = vsel %vm63, %v3398, 0.0
    %3403 = vadd.xlane.f32.xlu0 %v3402
    %v3404 = vpop.xlane.xlu0 %3403
    %v3405 = vmul.f32 %v3401, %v1601
    %v3406 = vmul.f32 %v3404, %v1601
    %v3407 = vsub.f32 %v3397, %v3405
    %v3408 = vsub.f32 %v3398, %v3406
    %v3409 = vmul.f32 %v3407, %v3407
    %v3410 = vmul.f32 %v3408, %v3408
    %v3411 = vsel %vm63, %v3409, 0.0
    %3412 = vadd.xlane.f32.xlu0 %v3411
    %v3413 = vpop.xlane.xlu0 %3412
    %v3414 = vsel %vm63, %v3410, 0.0
    %3415 = vadd.xlane.f32.xlu0 %v3414
    %v3416 = vpop.xlane.xlu0 %3415
    %v3417 = vmul.f32 %v3413, %v1601
    %v3418 = vmul.f32 %v3416, %v1601
    %v3419 = vadd.f32 %v3417, 1e-05
    %v3420 = vadd.f32 %v3418, 1e-05
    %v3421 = vrsqrt.pop %v3419
    %v3422 = vrsqrt.pop %v3420
    %v3423 = vmul.f32 %v3407, %v3421
    %v3424 = vmul.f32 %v3408, %v3422
    %v3425 = vlaneseq
    %v3426 = vshrl.u32 %v3425, 7
    %v3427 = vsub.s32 4, %v3426
    %v3428 = vrot.slane %v1860, %v3427
    %v3429 = vmul.f32 %v3423, %v3428
    %v3430 = vmul.f32 %v3424, %v3428
    %v3431 = vlaneseq
    %v3432 = vshrl.u32 %v3431, 7
    %v3433 = vsub.s32 5, %v3432
    %v3434 = vrot.slane %v1860, %v3433
    %v3435 = vadd.f32 %v3429, %v3434
    %v3436 = vadd.f32 %v3430, %v3434
    %s3437 = scalar_lea.vmem %s3, 32
    %v3438 = vld [vmem:[%s3437] sm:$0xff]
    %v3439 = vld [vmem:[%s3437 + $0x8] sm:$0xff]
    %v3440 = vld [vmem:[%s3437 + $0x10] sm:$0xff]
    %v3441 = vld [vmem:[%s3437 + $0x18] sm:$0xff]
    %v3442 = vlaneseq
    %v3443 = vshrl.u32 %v3442, 7
    %v3444 = vsub.s32 2, %v3443
    %v3445 = vrot.slane %v1860, %v3444
    %v3447 = vsel %vm63, %v3435, 0
    %v3450 = vsel %vm63, %v3436, 0
    %3452 = vmatprep.subr.mxu0 0.0
    %3453 = vmatpush1.msra.mxu0 0.0
    %3454 = vmatprep.subr.mxu0 0.0
    %3455 = vmatpush1.msra.mxu0 0.0
    %3456 = vmatprep.subr.mxu0 0.0
    %3457 = vmatpush1.msra.mxu0 0.0
    %3458 = vmatprep.subr.mxu0 0.0
    %3459 = vmatpush1.msra.mxu0 0.0
    %3460 = vmatprep.subr.mxu0 0.0
    %3461 = vmatpush1.msra.mxu0 0.0
    %3462 = vmatprep.subr.mxu0 0.0
    %3463 = vmatpush1.msra.mxu0 0.0
    %3464 = vmatprep.subr.mxu0 0.0
    %3465 = vmatpush1.msra.mxu0 0.0
    %3466 = vmatprep.subr.mxu0 0.0
    %3467 = vmatpush1.msra.mxu0 0.0
    %3468 = vmatprep.subr.mxu0 0.0
    %3469 = vmatpush1.msra.mxu0 0.0
    %3470 = vmatprep.subr.mxu0 0.0
    %3471 = vmatpush1.msra.mxu0 0.0
    %3472 = vmatprep.subr.mxu0 0.0
    %3473 = vmatpush1.msra.mxu0 0.0
    %3474 = vmatprep.subr.mxu0 0.0
    %3475 = vmatpush1.msra.mxu0 0.0
    %3476 = vmatprep.subr.mxu0 0.0
    %3477 = vmatpush1.msra.mxu0 %v3441
    %3478 = vmatprep.subr.mxu0 0.0
    %3479 = vmatpush1.msra.mxu0 %v3440
    %3480 = vmatprep.subr.mxu0 0.0
    %3481 = vmatpush1.msra.mxu0 %v3439
    %3482 = vmatprep.subr.mxu0 0.0
    %3483 = vmatpush1.msra.mxu0 %v3438
    %3484 = vmatprep.subr.mxu0 0.0
    %3485 = vmatpush2.msra.mxu0 0.0
    %3486 = vmatprep.subr.mxu0 0.0
    %3487 = vmatpush2.msra.mxu0 0.0
    %3488 = vmatprep.subr.mxu0 0.0
    %3489 = vmatpush2.msra.mxu0 0.0
    %3490 = vmatprep.subr.mxu0 0.0
    %3491 = vmatpush2.msra.mxu0 0.0
    %3492 = vmatprep.subr.mxu0 0.0
    %3493 = vmatpush2.msra.mxu0 0.0
    %3494 = vmatprep.subr.mxu0 0.0
    %3495 = vmatpush2.msra.mxu0 0.0
    %3496 = vmatprep.subr.mxu0 0.0
    %3497 = vmatpush2.msra.mxu0 0.0
    %3498 = vmatprep.subr.mxu0 0.0
    %3499 = vmatpush2.msra.mxu0 0.0
    %3500 = vmatprep.subr.mxu0 0.0
    %3501 = vmatpush2.msra.mxu0 0.0
    %3502 = vmatprep.subr.mxu0 0.0
    %3503 = vmatpush2.msra.mxu0 0.0
    %3504 = vmatprep.subr.mxu0 0.0
    %3505 = vmatpush2.msra.mxu0 0.0
    %3506 = vmatprep.subr.mxu0 0.0
    %3507 = vmatpush2.msra.mxu0 0.0
    %3508 = vmatprep.subr.mxu0 0.0
    %3509 = vmatpush2.msra.mxu0 0.0
    %3510 = vmatprep.subr.mxu0 0.0
    %3511 = vmatpush2.msra.mxu0 0.0
    %3512 = vmatprep.subr.mxu0 0.0
    %3513 = vmatpush2.msra.mxu0 0.0
    %3514 = vmatprep.subr.mxu0 0.0
    %3515 = vmatpush2.msra.mxu0 0.0
    %3516 = vmatprep.mubr.f32.mxu0 0.0
    %3517 = vmatmul.mubr.f32.gmra.mxu0 %v3447
    %v3518 = vpop.f32.mrf.mxu0
    %v3519 = vadd.f32 %v3445, %v3518
    %v3520 = vpop.f32.mrf.mxu0
    %3521 = vmatprep.mubr.f32.mxu0 0.0
    %3522 = vmatmul.mubr.f32.gmra.mxu0 %v3450
    %v3523 = vpop.f32.mrf.mxu0
    %v3524 = vadd.f32 %v3445, %v3523
    %v3525 = vpop.f32.mrf.mxu0
    %3526 = vdwg.mxu0
    %v3527 = vmax.f32 %v3519, 0.0
    %v3528 = vmax.f32 %v3524, 0.0
    %s3529 = scalar_lea.vmem %s4, 64
    %v3530 = vld [vmem:[%s3529] sm:$0xff]
    %v3531 = vld [vmem:[%s3529 + $0x8] sm:$0xff]
    %v3532 = vld [vmem:[%s3529 + $0x10] sm:$0xff]
    %v3533 = vld [vmem:[%s3529 + $0x18] sm:$0xff]
    %v3534 = vld [vmem:[%s3529 + $0x20] sm:$0xff]
    %v3535 = vld [vmem:[%s3529 + $0x28] sm:$0xff]
    %v3536 = vld [vmem:[%s3529 + $0x30] sm:$0xff]
    %v3537 = vld [vmem:[%s3529 + $0x38] sm:$0xff]
    %v3538 = vlaneseq
    %v3539 = vshrl.u32 %v3538, 7
    %v3540 = vsub.s32 3, %v3539
    %v3541 = vrot.slane %v1860, %v3540
    %v3543 = vsel %vm1737, %v3527, 0
    %v3546 = vsel %vm1737, %v3528, 0
    %3548 = vmatprep.subr.mxu0 0.0
    %3549 = vmatpush1.msra.mxu0 0.0
    %3550 = vmatprep.subr.mxu0 0.0
    %3551 = vmatpush1.msra.mxu0 0.0
    %3552 = vmatprep.subr.mxu0 0.0
    %3553 = vmatpush1.msra.mxu0 0.0
    %3554 = vmatprep.subr.mxu0 0.0
    %3555 = vmatpush1.msra.mxu0 0.0
    %3556 = vmatprep.subr.mxu0 0.0
    %3557 = vmatpush1.msra.mxu0 0.0
    %3558 = vmatprep.subr.mxu0 0.0
    %3559 = vmatpush1.msra.mxu0 0.0
    %3560 = vmatprep.subr.mxu0 0.0
    %3561 = vmatpush1.msra.mxu0 0.0
    %3562 = vmatprep.subr.mxu0 0.0
    %3563 = vmatpush1.msra.mxu0 0.0
    %3564 = vmatprep.subr.mxu0 0.0
    %3565 = vmatpush1.msra.mxu0 %v3537
    %3566 = vmatprep.subr.mxu0 0.0
    %3567 = vmatpush1.msra.mxu0 %v3536
    %3568 = vmatprep.subr.mxu0 0.0
    %3569 = vmatpush1.msra.mxu0 %v3535
    %3570 = vmatprep.subr.mxu0 0.0
    %3571 = vmatpush1.msra.mxu0 %v3534
    %3572 = vmatprep.subr.mxu0 0.0
    %3573 = vmatpush1.msra.mxu0 %v3533
    %3574 = vmatprep.subr.mxu0 0.0
    %3575 = vmatpush1.msra.mxu0 %v3532
    %3576 = vmatprep.subr.mxu0 0.0
    %3577 = vmatpush1.msra.mxu0 %v3531
    %3578 = vmatprep.subr.mxu0 0.0
    %3579 = vmatpush1.msra.mxu0 %v3530
    %3580 = vmatprep.subr.mxu0 0.0
    %3581 = vmatpush2.msra.mxu0 0.0
    %3582 = vmatprep.subr.mxu0 0.0
    %3583 = vmatpush2.msra.mxu0 0.0
    %3584 = vmatprep.subr.mxu0 0.0
    %3585 = vmatpush2.msra.mxu0 0.0
    %3586 = vmatprep.subr.mxu0 0.0
    %3587 = vmatpush2.msra.mxu0 0.0
    %3588 = vmatprep.subr.mxu0 0.0
    %3589 = vmatpush2.msra.mxu0 0.0
    %3590 = vmatprep.subr.mxu0 0.0
    %3591 = vmatpush2.msra.mxu0 0.0
    %3592 = vmatprep.subr.mxu0 0.0
    %3593 = vmatpush2.msra.mxu0 0.0
    %3594 = vmatprep.subr.mxu0 0.0
    %3595 = vmatpush2.msra.mxu0 0.0
    %3596 = vmatprep.subr.mxu0 0.0
    %3597 = vmatpush2.msra.mxu0 0.0
    %3598 = vmatprep.subr.mxu0 0.0
    %3599 = vmatpush2.msra.mxu0 0.0
    %3600 = vmatprep.subr.mxu0 0.0
    %3601 = vmatpush2.msra.mxu0 0.0
    %3602 = vmatprep.subr.mxu0 0.0
    %3603 = vmatpush2.msra.mxu0 0.0
    %3604 = vmatprep.subr.mxu0 0.0
    %3605 = vmatpush2.msra.mxu0 0.0
    %3606 = vmatprep.subr.mxu0 0.0
    %3607 = vmatpush2.msra.mxu0 0.0
    %3608 = vmatprep.subr.mxu0 0.0
    %3609 = vmatpush2.msra.mxu0 0.0
    %3610 = vmatprep.subr.mxu0 0.0
    %3611 = vmatpush2.msra.mxu0 0.0
    %3612 = vmatprep.mubr.f32.mxu0 0.0
    %3613 = vmatmul.mubr.f32.gmra.mxu0 %v3543
    %v3614 = vpop.f32.mrf.mxu0
    %v3615 = vadd.f32 %v3541, %v3614
    %v3616 = vpop.f32.mrf.mxu0
    %3617 = vmatprep.mubr.f32.mxu0 0.0
    %3618 = vmatmul.mubr.f32.gmra.mxu0 %v3546
    %v3619 = vpop.f32.mrf.mxu0
    %v3620 = vadd.f32 %v3541, %v3619
    %v3621 = vpop.f32.mrf.mxu0
    %3622 = vdwg.mxu0
    %v3623 = vadd.f32 %v3435, %v3615
    %v3624 = vadd.f32 %v3436, %v3620
    %v3625 = vsel %vm63, %v3623, 0.0
    %3626 = vadd.xlane.f32.xlu0 %v3625
    %v3627 = vpop.xlane.xlu0 %3626
    %v3628 = vsel %vm63, %v3624, 0.0
    %3629 = vadd.xlane.f32.xlu0 %v3628
    %v3630 = vpop.xlane.xlu0 %3629
    %v3631 = vmul.f32 %v3627, %v1601
    %v3632 = vmul.f32 %v3630, %v1601
    %v3633 = vsub.f32 %v3623, %v3631
    %v3634 = vsub.f32 %v3624, %v3632
    %v3635 = vmul.f32 %v3633, %v3633
    %v3636 = vmul.f32 %v3634, %v3634
    %v3637 = vsel %vm63, %v3635, 0.0
    %3638 = vadd.xlane.f32.xlu0 %v3637
    %v3639 = vpop.xlane.xlu0 %3638
    %v3640 = vsel %vm63, %v3636, 0.0
    %3641 = vadd.xlane.f32.xlu0 %v3640
    %v3642 = vpop.xlane.xlu0 %3641
    %v3643 = vmul.f32 %v3639, %v1601
    %v3644 = vmul.f32 %v3642, %v1601
    %v3645 = vadd.f32 %v3643, 1e-05
    %v3646 = vadd.f32 %v3644, 1e-05
    %v3647 = vrsqrt.pop %v3645
    %v3648 = vrsqrt.pop %v3646
    %v3649 = vmul.f32 %v3633, %v3647
    %v3650 = vmul.f32 %v3634, %v3648
    %v3651 = vlaneseq
    %v3652 = vshrl.u32 %v3651, 7
    %v3653 = vsub.s32 6, %v3652
    %v3654 = vrot.slane %v1860, %v3653
    %v3655 = vmul.f32 %v3649, %v3654
    %v3656 = vmul.f32 %v3650, %v3654
    %v3657 = vlaneseq
    %v3658 = vshrl.u32 %v3657, 7
    %v3659 = vsub.s32 7, %v3658
    %v3660 = vrot.slane %v1860, %v3659
    %v3661 = vadd.f32 %v3655, %v3660
    %v3662 = vadd.f32 %v3656, %v3660
    %s3663 = scalar_lea.vmem [#allocation5], 16
    %v3664 = vld [vmem:[%s3663] sm:$0xff]
    %v3665 = vsel %vm63, %v3661, 0.0
    %3666 = vadd.xlane.f32.xlu0 %v3665
    %v3667 = vpop.xlane.xlu0 %3666
    %v3668 = vsel %vm63, %v3662, 0.0
    %3669 = vadd.xlane.f32.xlu0 %v3668
    %v3670 = vpop.xlane.xlu0 %3669
    %v3671 = vmul.f32 %v3667, %v1601
    %v3672 = vmul.f32 %v3670, %v1601
    %v3673 = vsub.f32 %v3661, %v3671
    %v3674 = vsub.f32 %v3662, %v3672
    %v3675 = vmul.f32 %v3673, %v3673
    %v3676 = vmul.f32 %v3674, %v3674
    %v3677 = vsel %vm63, %v3675, 0.0
    %3678 = vadd.xlane.f32.xlu0 %v3677
    %v3679 = vpop.xlane.xlu0 %3678
    %v3680 = vsel %vm63, %v3676, 0.0
    %3681 = vadd.xlane.f32.xlu0 %v3680
    %v3682 = vpop.xlane.xlu0 %3681
    %v3683 = vmul.f32 %v3679, %v1601
    %v3684 = vmul.f32 %v3682, %v1601
    %v3685 = vadd.f32 %v3683, 1e-05
    %v3686 = vadd.f32 %v3684, 1e-05
    %v3687 = vrsqrt.pop %v3685
    %v3688 = vrsqrt.pop %v3686
    %v3689 = vmul.f32 %v3673, %v3687
    %v3690 = vmul.f32 %v3674, %v3688
    %v3691 = vlaneseq
    %v3692 = vshrl.u32 %v3691, 7
    %v3693 = vsub.s32 0, %v3692
    %v3694 = vrot.slane %v3664, %v3693
    %v3695 = vmul.f32 %v3689, %v3694
    %v3696 = vmul.f32 %v3690, %v3694
    %v3697 = vlaneseq
    %v3698 = vshrl.u32 %v3697, 7
    %v3699 = vsub.s32 1, %v3698
    %v3700 = vrot.slane %v3664, %v3699
    %v3701 = vadd.f32 %v3695, %v3700
    %v3702 = vadd.f32 %v3696, %v3700
    %3703 = vst.msk [vmem:[#allocation7] sm:$0xff] %vm63, %v3701
    %3704 = vst.msk [vmem:[#allocation7 + $0x8] sm:$0xff] %vm63, %v3702
    // Predicated region
    $region34: #{tpu_custom_call.1} parent=1 // pred_check
      _
    $region35: #{tpu_custom_call.1} parent=1 // pred_check_branch
      %3706 = sbr.rel (0) target = $region37
    $region36: #{tpu_custom_call.1} parent=1 // pred_region
      %s3708 = ssub.s32 256, 256
      %3709 = vsyncadd [#allocation4], %s3708
      %s3710 = sshll.u32 [#allocation7], 4
      %s3711 = int_to_ptr.vmem [resolvable:$true] %s3710
      %3716 = dma.vmem_to_hbm [thread:$0]  %s3711, 256, %s6, [#allocation4], 128, 128, 8
    $region37: #{tpu_custom_call.1} parent=1 // pred_fallthru
      _
    // Predicated region
    $region38: #{tpu_custom_call.1} parent=1 // pred_check
      _
    $region39: #{tpu_custom_call.1} parent=1 // pred_check_branch
      %3718 = sbr.rel (0) target = $region41
    $region40: #{tpu_custom_call.1} parent=1 // pred_region
      %3719 = dma.done [#allocation4], 256
    $region41: #{tpu_custom_call.1} parent=1 // pred_fallthru
      _
    %3720 = vsyncpa [#allocation3], 1
    %3721 = vsyncpa [#allocation6], 1
    %3722 = vsyncpa [#allocation4], 1

</llo_original>
